<compile_context>
chip_gen: v5e
topology: v5e:2x2
jax: 0.10.0
libtpu: 0.0.40
codegen_flags: <defaults>
</compile_context>

<pallas_src>
import jax
import jax.numpy as jnp
from jax.experimental import pallas as pl
from jax.experimental.pallas import tpu as pltpu


def pointnet_kernel(x_ref,
                    w1_ref, b1_ref, w2_ref, b2_ref, w3_ref, b3_ref,
                    w4_ref, b4_ref, w5_ref, b5_ref,
                    o_ref):
    """One grid step = one (batch, N-tile). Output accumulates a running max
    over the N-tile grid axis (axis 1, marked 'arbitrary')."""
    n = pl.program_id(1)

    x = x_ref[0]                                   # (tile_n, 3) f32

    # Layer 1 (3 -> 64): K=3 would waste a full MXU pass, so use 3 VPU FMAs.
    w1 = w1_ref[...]                               # (3, 64) f32
    h = (x[:, 0:1] * w1[0:1, :]
         + x[:, 1:2] * w1[1:2, :]
         + x[:, 2:3] * w1[2:3, :]
         + b1_ref[...])
    h = jnp.maximum(h, 0.0)                        # (tile_n, 64) f32

    # Layers 2-5: bf16 MXU matmuls, f32 accumulation / bias / ReLU.
    def layer(a, w_ref, b_ref):
        y = jnp.dot(a.astype(jnp.bfloat16), w_ref[...],
                    preferred_element_type=jnp.float32)
        return jnp.maximum(y + b_ref[...], 0.0)

    h = layer(h, w2_ref, b2_ref)                   # (tile_n, 64)
    h = layer(h, w3_ref, b3_ref)                   # (tile_n, 64)
    h = layer(h, w4_ref, b4_ref)                   # (tile_n, 128)
    h = layer(h, w5_ref, b5_ref)                   # (tile_n, emb) f32

    tile_max = jnp.max(h, axis=0, keepdims=True)   # (1, emb)

    # Running max across N-tiles. Branch-free init: at n==0 use 0.0, which is
    # exact because every activation is post-ReLU (>= 0).
    prev = jnp.where(n == 0, 0.0, o_ref[0])
    o_ref[0] = jnp.maximum(prev, tile_max)


def pointnet_features(points, params, *, tile_n=512, n_splits=None):
    """points: [B, N, 3] float32 -> features: [B, emb] float32."""
    B, N, C = points.shape
    assert C == 3
    emb = params["w5"].shape[1]

    # v7x megacore helper: keep the 'parallel' batch axis even when B is odd/1
    # by splitting N into pseudo-batches; the final combine is an XLA max.
    if n_splits is None:
        n_splits = 2 if (B % 2 == 1 and N % 2 == 0) else 1
    if n_splits > 1:
        assert N % n_splits == 0
        points = points.reshape(B * n_splits, N // n_splits, C)
    Bp, Np, _ = points.shape

    tile_n = min(tile_n, Np)
    assert Np % tile_n == 0
    assert tile_n % 16 == 0 or tile_n == Np   # keep sublane tiling clean

    names = ["w1", "b1", "w2", "b2", "w3", "b3", "w4", "b4", "w5", "b5"]

    in_specs = [pl.BlockSpec((1, tile_n, 3), lambda b, n: (b, n, 0))]
    for nm in names:
        shp = params[nm].shape
        # weights/biases are small and resident across all grid steps
        in_specs.append(pl.BlockSpec(shp, lambda b, n: (0, 0)))

    out_spec = pl.BlockSpec((1, 1, emb), lambda b, n: (b, 0, 0))

    out = pl.pallas_call(
        pointnet_kernel,
        out_shape=jax.ShapeDtypeStruct((Bp, 1, emb), jnp.float32),
        grid_spec=pltpu.PrefetchScalarGridSpec(
            num_scalar_prefetch=0,
            grid=(Bp, Np // tile_n),
            in_specs=in_specs,
            out_specs=out_spec,
        ),
        compiler_params=pltpu.CompilerParams(
            dimension_semantics=("parallel", "arbitrary"),
            # explicit cap: safe on v7x (64 MiB VMEM) and raises v5e's default
            vmem_limit_bytes=32 * 1024 * 1024,
        ),
    )(points, *(params[nm] for nm in names))

    feats = out.reshape(Bp, emb)                   # == flatten(max_pool1d(x, N))
    if n_splits > 1:
        feats = jnp.max(feats.reshape(B, n_splits, emb), axis=1)
    return feats


# ---------------------------------------------------------------------------
# Parameter setup (deterministic, synthetic).  Conv1d(k=1) weight [Cout, Cin],
# bias [Cout]; BatchNorm1d gamma/beta/running_mean/running_var [Cout].
# Folded:  y = BN(W x + b) = (x @ W_eff) + b_eff  with
#   scale = gamma / sqrt(var + eps)
#   W_eff = (W * scale[:, None]).T        (shape [Cin, Cout])
#   b_eff = scale * (b - mean) + beta     (shape [1, Cout])
# Layer 1 weights stay f32 (VPU path); layers 2-5 weights stored bf16 (MXU).
# ---------------------------------------------------------------------------
def make_layer(key, c_in, c_out, w_dtype):
    k = jax.random.split(key, 6)
    w = 0.1 * jax.random.normal(k[0], (c_out, c_in), jnp.float32)
    b = 0.1 * jax.random.normal(k[1], (c_out,), jnp.float32)
    gamma = 1.0 + 0.1 * jax.random.normal(k[2], (c_out,), jnp.float32)
    beta = 0.1 * jax.random.normal(k[3], (c_out,), jnp.float32)
    mean = 0.1 * jax.random.normal(k[4], (c_out,), jnp.float32)
    var = 0.5 + jax.random.uniform(k[5], (c_out,), jnp.float32)
    eps = 1e-5
    scale = gamma / jnp.sqrt(var + eps)
    w_eff = (w * scale[:, None]).T.astype(w_dtype)   # (c_in, c_out)
    b_eff = (scale * (b - mean) + beta)[None, :]     # (1, c_out) f32
    return w_eff, b_eff


def make_params(key, emb_dims):
    dims = [(3, 64), (64, 64), (64, 64), (64, 128), (128, emb_dims)]
    keys = jax.random.split(key, len(dims))
    params = {}
    for i, ((ci, co), k) in enumerate(zip(dims, keys), start=1):
        w_dtype = jnp.float32 if i == 1 else jnp.bfloat16
        w, b = make_layer(k, ci, co, w_dtype)
        params[f"w{i}"] = w
        params[f"b{i}"] = b
    return params


def pointnet_features_ref(points, params):
    """Pure-JAX reference mirroring the kernel's numerics (f32 layer 1,
    bf16 MXU matmuls with f32 accumulation for layers 2-5)."""
    w1, b1 = params["w1"], params["b1"]
    h = (points[..., 0:1] * w1[0:1, :]
         + points[..., 1:2] * w1[1:2, :]
         + points[..., 2:3] * w1[2:3, :]
         + b1)
    h = jnp.maximum(h, 0.0)
    for i in range(2, 6):
        y = jnp.dot(h.astype(jnp.bfloat16), params[f"w{i}"],
                    preferred_element_type=jnp.float32) + params[f"b{i}"]
        h = jnp.maximum(y, 0.0)
    return jnp.max(h, axis=1)   # max over N


if __name__ == "__main__":
    # small shapes: batch=2, points N=1024, emb_dims=256 (module default is 1024)
    B, N, EMB = 2, 1024, 256
    key = jax.random.PRNGKey(0)
    k_pts, k_par = jax.random.split(key)

    points = jax.random.normal(k_pts, (B, N, 3), jnp.float32)
    params = make_params(k_par, EMB)

    feats = pointnet_features(points, params, tile_n=512)   # grid = (2, 2)
    feats = jax.block_until_ready(feats)

    ref = pointnet_features_ref(points, params)
    assert feats.shape == (B, EMB)
    assert jnp.allclose(feats, ref, rtol=2e-3, atol=2e-3), "mismatch vs reference"

    print("KERNEL_OK")
</pallas_src>

<mosaic_0001>
module attributes {stable_mosaic.version = 11 : i64} {
  func.func @pointnet_kernel(%arg0: i32, %arg1: i32, %arg2: memref<1x512x3xf32, #tpu.memory_space<vmem>>, %arg3: memref<3x64xf32, #tpu.memory_space<vmem>>, %arg4: memref<1x64xf32, #tpu.memory_space<vmem>>, %arg5: memref<64x64xbf16, #tpu.memory_space<vmem>>, %arg6: memref<1x64xf32, #tpu.memory_space<vmem>>, %arg7: memref<64x64xbf16, #tpu.memory_space<vmem>>, %arg8: memref<1x64xf32, #tpu.memory_space<vmem>>, %arg9: memref<64x128xbf16, #tpu.memory_space<vmem>>, %arg10: memref<1x128xf32, #tpu.memory_space<vmem>>, %arg11: memref<128x256xbf16, #tpu.memory_space<vmem>>, %arg12: memref<1x256xf32, #tpu.memory_space<vmem>>, %arg13: memref<1x1x256xf32, #tpu.memory_space<vmem>>) attributes {dimension_semantics = [#tpu.dimension_semantics<parallel>, #tpu.dimension_semantics<arbitrary>], iteration_bounds = array<i64: 2, 2>, scalar_prefetch = 0 : i64, scratch_operands = 0 : i64, tpu.core_type = #tpu.core_type<tc>, window_params = [{transform_indices = @transform_0, window_bounds = array<i64: 1, 512, 3>}, {pipeline_mode = #tpu.pipeline_mode<synchronous>, transform_indices = @transform_1, window_bounds = array<i64: 3, 64>}, {pipeline_mode = #tpu.pipeline_mode<synchronous>, transform_indices = @transform_2, window_bounds = array<i64: 1, 64>}, {pipeline_mode = #tpu.pipeline_mode<synchronous>, transform_indices = @transform_3, window_bounds = array<i64: 64, 64>}, {pipeline_mode = #tpu.pipeline_mode<synchronous>, transform_indices = @transform_4, window_bounds = array<i64: 1, 64>}, {pipeline_mode = #tpu.pipeline_mode<synchronous>, transform_indices = @transform_5, window_bounds = array<i64: 64, 64>}, {pipeline_mode = #tpu.pipeline_mode<synchronous>, transform_indices = @transform_6, window_bounds = array<i64: 1, 64>}, {pipeline_mode = #tpu.pipeline_mode<synchronous>, transform_indices = @transform_7, window_bounds = array<i64: 64, 128>}, {pipeline_mode = #tpu.pipeline_mode<synchronous>, transform_indices = @transform_8, window_bounds = array<i64: 1, 128>}, {pipeline_mode = #tpu.pipeline_mode<synchronous>, transform_indices = @transform_9, window_bounds = array<i64: 128, 256>}, {pipeline_mode = #tpu.pipeline_mode<synchronous>, transform_indices = @transform_10, window_bounds = array<i64: 1, 256>}, {transform_indices = @transform_11, window_bounds = array<i64: 1, 1, 256>}]} {
    %c0 = arith.constant 0 : index
    %c0_0 = arith.constant 0 : index
    %c0_1 = arith.constant 0 : index
    %0 = vector.load %arg2[%c0, %c0_0, %c0_1] : memref<1x512x3xf32, #tpu.memory_space<vmem>>, vector<1x512x3xf32>
    %1 = vector.shape_cast %0 : vector<1x512x3xf32> to vector<512x3xf32>
    %c0_2 = arith.constant 0 : index
    %c0_3 = arith.constant 0 : index
    %2 = vector.load %arg3[%c0_2, %c0_3] : memref<3x64xf32, #tpu.memory_space<vmem>>, vector<3x64xf32>
    %3 = vector.extract_strided_slice %1 {offsets = [0, 0], sizes = [512, 1], strides = [1, 1]} : vector<512x3xf32> to vector<512x1xf32>
    %4 = vector.extract_strided_slice %2 {offsets = [0, 0], sizes = [1, 64], strides = [1, 1]} : vector<3x64xf32> to vector<1x64xf32>
    %5 = vector.broadcast %3 : vector<512x1xf32> to vector<512x64xf32>
    %6 = vector.broadcast %4 : vector<1x64xf32> to vector<512x64xf32>
    %7 = arith.mulf %5, %6 : vector<512x64xf32>
    %8 = vector.extract_strided_slice %1 {offsets = [0, 1], sizes = [512, 1], strides = [1, 1]} : vector<512x3xf32> to vector<512x1xf32>
    %9 = vector.extract_strided_slice %2 {offsets = [1, 0], sizes = [1, 64], strides = [1, 1]} : vector<3x64xf32> to vector<1x64xf32>
    %10 = vector.broadcast %8 : vector<512x1xf32> to vector<512x64xf32>
    %11 = vector.broadcast %9 : vector<1x64xf32> to vector<512x64xf32>
    %12 = arith.mulf %10, %11 : vector<512x64xf32>
    %13 = arith.addf %7, %12 : vector<512x64xf32>
    %14 = vector.extract_strided_slice %1 {offsets = [0, 2], sizes = [512, 1], strides = [1, 1]} : vector<512x3xf32> to vector<512x1xf32>
    %15 = vector.extract_strided_slice %2 {offsets = [2, 0], sizes = [1, 64], strides = [1, 1]} : vector<3x64xf32> to vector<1x64xf32>
    %16 = vector.broadcast %14 : vector<512x1xf32> to vector<512x64xf32>
    %17 = vector.broadcast %15 : vector<1x64xf32> to vector<512x64xf32>
    %18 = arith.mulf %16, %17 : vector<512x64xf32>
    %19 = arith.addf %13, %18 : vector<512x64xf32>
    %c0_4 = arith.constant 0 : index
    %c0_5 = arith.constant 0 : index
    %20 = vector.load %arg4[%c0_4, %c0_5] : memref<1x64xf32, #tpu.memory_space<vmem>>, vector<1x64xf32>
    %21 = vector.broadcast %20 : vector<1x64xf32> to vector<512x64xf32>
    %22 = arith.addf %19, %21 : vector<512x64xf32>
    %cst = arith.constant 0.000000e+00 : f32
    %23 = vector.broadcast %cst : f32 to vector<512x64xf32>
    %24 = arith.maximumf %22, %23 : vector<512x64xf32>
    %25 = arith.truncf %24 : vector<512x64xf32> to vector<512x64xbf16>
    %c0_6 = arith.constant 0 : index
    %c0_7 = arith.constant 0 : index
    %26 = vector.load %arg5[%c0_6, %c0_7] : memref<64x64xbf16, #tpu.memory_space<vmem>>, vector<64x64xbf16>
    %cst_8 = arith.constant dense<0.000000e+00> : vector<512x64xf32>
    %27 = tpu.matmul %25, %26, %cst_8 {dimension_numbers = #tpu.dot_dimension_numbers<[1], [0], [0], [1], [0, 0, 1, 1], [], []>} : vector<512x64xbf16>, vector<64x64xbf16>, vector<512x64xf32> -> vector<512x64xf32>
    %c0_9 = arith.constant 0 : index
    %c0_10 = arith.constant 0 : index
    %28 = vector.load %arg6[%c0_9, %c0_10] : memref<1x64xf32, #tpu.memory_space<vmem>>, vector<1x64xf32>
    %29 = vector.broadcast %28 : vector<1x64xf32> to vector<512x64xf32>
    %30 = arith.addf %27, %29 : vector<512x64xf32>
    %cst_11 = arith.constant 0.000000e+00 : f32
    %31 = vector.broadcast %cst_11 : f32 to vector<512x64xf32>
    %32 = arith.maximumf %30, %31 : vector<512x64xf32>
    %33 = arith.truncf %32 : vector<512x64xf32> to vector<512x64xbf16>
    %c0_12 = arith.constant 0 : index
    %c0_13 = arith.constant 0 : index
    %34 = vector.load %arg7[%c0_12, %c0_13] : memref<64x64xbf16, #tpu.memory_space<vmem>>, vector<64x64xbf16>
    %cst_14 = arith.constant dense<0.000000e+00> : vector<512x64xf32>
    %35 = tpu.matmul %33, %34, %cst_14 {dimension_numbers = #tpu.dot_dimension_numbers<[1], [0], [0], [1], [0, 0, 1, 1], [], []>} : vector<512x64xbf16>, vector<64x64xbf16>, vector<512x64xf32> -> vector<512x64xf32>
    %c0_15 = arith.constant 0 : index
    %c0_16 = arith.constant 0 : index
    %36 = vector.load %arg8[%c0_15, %c0_16] : memref<1x64xf32, #tpu.memory_space<vmem>>, vector<1x64xf32>
    %37 = vector.broadcast %36 : vector<1x64xf32> to vector<512x64xf32>
    %38 = arith.addf %35, %37 : vector<512x64xf32>
    %cst_17 = arith.constant 0.000000e+00 : f32
    %39 = vector.broadcast %cst_17 : f32 to vector<512x64xf32>
    %40 = arith.maximumf %38, %39 : vector<512x64xf32>
    %41 = arith.truncf %40 : vector<512x64xf32> to vector<512x64xbf16>
    %c0_18 = arith.constant 0 : index
    %c0_19 = arith.constant 0 : index
    %42 = vector.load %arg9[%c0_18, %c0_19] : memref<64x128xbf16, #tpu.memory_space<vmem>>, vector<64x128xbf16>
    %cst_20 = arith.constant dense<0.000000e+00> : vector<512x128xf32>
    %43 = tpu.matmul %41, %42, %cst_20 {dimension_numbers = #tpu.dot_dimension_numbers<[1], [0], [0], [1], [0, 0, 1, 1], [], []>} : vector<512x64xbf16>, vector<64x128xbf16>, vector<512x128xf32> -> vector<512x128xf32>
    %c0_21 = arith.constant 0 : index
    %c0_22 = arith.constant 0 : index
    %44 = vector.load %arg10[%c0_21, %c0_22] : memref<1x128xf32, #tpu.memory_space<vmem>>, vector<1x128xf32>
    %45 = vector.broadcast %44 : vector<1x128xf32> to vector<512x128xf32>
    %46 = arith.addf %43, %45 : vector<512x128xf32>
    %cst_23 = arith.constant 0.000000e+00 : f32
    %47 = vector.broadcast %cst_23 : f32 to vector<512x128xf32>
    %48 = arith.maximumf %46, %47 : vector<512x128xf32>
    %49 = arith.truncf %48 : vector<512x128xf32> to vector<512x128xbf16>
    %c0_24 = arith.constant 0 : index
    %c0_25 = arith.constant 0 : index
    %50 = vector.load %arg11[%c0_24, %c0_25] : memref<128x256xbf16, #tpu.memory_space<vmem>>, vector<128x256xbf16>
    %cst_26 = arith.constant dense<0.000000e+00> : vector<512x256xf32>
    %51 = tpu.matmul %49, %50, %cst_26 {dimension_numbers = #tpu.dot_dimension_numbers<[1], [0], [0], [1], [0, 0, 1, 1], [], []>} : vector<512x128xbf16>, vector<128x256xbf16>, vector<512x256xf32> -> vector<512x256xf32>
    %c0_27 = arith.constant 0 : index
    %c0_28 = arith.constant 0 : index
    %52 = vector.load %arg12[%c0_27, %c0_28] : memref<1x256xf32, #tpu.memory_space<vmem>>, vector<1x256xf32>
    %53 = vector.broadcast %52 : vector<1x256xf32> to vector<512x256xf32>
    %54 = arith.addf %51, %53 : vector<512x256xf32>
    %cst_29 = arith.constant 0.000000e+00 : f32
    %55 = vector.broadcast %cst_29 : f32 to vector<512x256xf32>
    %56 = arith.maximumf %54, %55 : vector<512x256xf32>
    %cst_30 = arith.constant dense<0xFF800000> : vector<256xf32>
    %57 = vector.multi_reduction <maximumf>, %56, %cst_30 [0] : vector<512x256xf32> to vector<256xf32>
    %58 = vector.shape_cast %57 : vector<256xf32> to vector<1x256xf32>
    %c0_i32 = arith.constant 0 : i32
    %59 = arith.cmpi eq, %arg1, %c0_i32 : i32
    %c0_31 = arith.constant 0 : index
    %c0_32 = arith.constant 0 : index
    %c0_33 = arith.constant 0 : index
    %60 = vector.load %arg13[%c0_31, %c0_32, %c0_33] : memref<1x1x256xf32, #tpu.memory_space<vmem>>, vector<1x1x256xf32>
    %61 = vector.shape_cast %60 : vector<1x1x256xf32> to vector<1x256xf32>
    %cst_34 = arith.constant 0.000000e+00 : f32
    %62 = vector.broadcast %cst_34 : f32 to vector<1x256xf32>
    %63 = arith.select %59, %62, %61 : vector<1x256xf32>
    %64 = arith.maximumf %63, %58 : vector<1x256xf32>
    %c0_35 = arith.constant 0 : index
    %c0_36 = arith.constant 0 : index
    %c0_37 = arith.constant 0 : index
    %65 = vector.load %arg13[%c0_35, %c0_36, %c0_37] : memref<1x1x256xf32, #tpu.memory_space<vmem>>, vector<1x1x256xf32>
    %66 = vector.shape_cast %65 : vector<1x1x256xf32> to vector<1x256xf32>
    %67 = vector.shape_cast %64 : vector<1x256xf32> to vector<1x1x256xf32>
    tpu.vector_store %arg13[%c0_35, %c0_36, %c0_37], %67 {strides = array<i32>} : memref<1x1x256xf32, #tpu.memory_space<vmem>>, vector<1x1x256xf32>,
    return
  }
  func.func @transform_0(%arg0: i32, %arg1: i32) -> (i32, i32, i32) {
    %c0_i32 = arith.constant 0 : i32
    %c0_i32_0 = arith.constant 0 : i32
    return %arg0, %arg1, %c0_i32 : i32, i32, i32
  }
  func.func @transform_1(%arg0: i32, %arg1: i32) -> (i32, i32) {
    %c0_i32 = arith.constant 0 : i32
    %c0_i32_0 = arith.constant 0 : i32
    %c0_i32_1 = arith.constant 0 : i32
    return %c0_i32, %c0_i32_0 : i32, i32
  }
  func.func @transform_2(%arg0: i32, %arg1: i32) -> (i32, i32) {
    %c0_i32 = arith.constant 0 : i32
    %c0_i32_0 = arith.constant 0 : i32
    %c0_i32_1 = arith.constant 0 : i32
    return %c0_i32, %c0_i32_0 : i32, i32
  }
  func.func @transform_3(%arg0: i32, %arg1: i32) -> (i32, i32) {
    %c0_i32 = arith.constant 0 : i32
    %c0_i32_0 = arith.constant 0 : i32
    %c0_i32_1 = arith.constant 0 : i32
    return %c0_i32, %c0_i32_0 : i32, i32
  }
  func.func @transform_4(%arg0: i32, %arg1: i32) -> (i32, i32) {
    %c0_i32 = arith.constant 0 : i32
    %c0_i32_0 = arith.constant 0 : i32
    %c0_i32_1 = arith.constant 0 : i32
    return %c0_i32, %c0_i32_0 : i32, i32
  }
  func.func @transform_5(%arg0: i32, %arg1: i32) -> (i32, i32) {
    %c0_i32 = arith.constant 0 : i32
    %c0_i32_0 = arith.constant 0 : i32
    %c0_i32_1 = arith.constant 0 : i32
    return %c0_i32, %c0_i32_0 : i32, i32
  }
  func.func @transform_6(%arg0: i32, %arg1: i32) -> (i32, i32) {
    %c0_i32 = arith.constant 0 : i32
    %c0_i32_0 = arith.constant 0 : i32
    %c0_i32_1 = arith.constant 0 : i32
    return %c0_i32, %c0_i32_0 : i32, i32
  }
  func.func @transform_7(%arg0: i32, %arg1: i32) -> (i32, i32) {
    %c0_i32 = arith.constant 0 : i32
    %c0_i32_0 = arith.constant 0 : i32
    %c0_i32_1 = arith.constant 0 : i32
    return %c0_i32, %c0_i32_0 : i32, i32
  }
  func.func @transform_8(%arg0: i32, %arg1: i32) -> (i32, i32) {
    %c0_i32 = arith.constant 0 : i32
    %c0_i32_0 = arith.constant 0 : i32
    %c0_i32_1 = arith.constant 0 : i32
    return %c0_i32, %c0_i32_0 : i32, i32
  }
  func.func @transform_9(%arg0: i32, %arg1: i32) -> (i32, i32) {
    %c0_i32 = arith.constant 0 : i32
    %c0_i32_0 = arith.constant 0 : i32
    %c0_i32_1 = arith.constant 0 : i32
    return %c0_i32, %c0_i32_0 : i32, i32
  }
  func.func @transform_10(%arg0: i32, %arg1: i32) -> (i32, i32) {
    %c0_i32 = arith.constant 0 : i32
    %c0_i32_0 = arith.constant 0 : i32
    %c0_i32_1 = arith.constant 0 : i32
    return %c0_i32, %c0_i32_0 : i32, i32
  }
  func.func @transform_11(%arg0: i32, %arg1: i32) -> (i32, i32, i32) {
    %c0_i32 = arith.constant 0 : i32
    %c0_i32_0 = arith.constant 0 : i32
    %c0_i32_1 = arith.constant 0 : i32
    return %arg0, %c0_i32, %c0_i32_0 : i32, i32, i32
  }
}

</mosaic_0001>

<llo_original>
// kernel: tpu_custom_call.1
$region0: #{tpu_custom_call.1}
  #allocation0 [shape = 'u32[]', space=smem, size = 0x4, offset = 0x4, fixed_abs, tag = 'smem constant byte address 0x4 - core index']
  #allocation1 [shape = 'u32[72,128]{1,0:T(1,128)}', space=vmem, size = 0x9000, scoped, tag = 'internal scratch']
  %s0 = inlined_call_operand.vmem [shape: f32[2,1024,3], index: 0, kind: input, shape index: {}]
  %s1 = inlined_call_operand.vmem [shape: f32[3,64], index: 1, kind: input, shape index: {}]
  %s2 = inlined_call_operand.vmem [shape: f32[1,64], index: 2, kind: input, shape index: {}]
  %s3 = inlined_call_operand.vmem [shape: bf16[64,64], index: 3, kind: input, shape index: {}]
  %s4 = inlined_call_operand.vmem [shape: f32[1,64], index: 4, kind: input, shape index: {}]
  %s5 = inlined_call_operand.vmem [shape: bf16[64,64], index: 5, kind: input, shape index: {}]
  %s6 = inlined_call_operand.vmem [shape: f32[1,64], index: 6, kind: input, shape index: {}]
  %s7 = inlined_call_operand.vmem [shape: bf16[64,128], index: 7, kind: input, shape index: {}]
  %s8 = inlined_call_operand.vmem [shape: f32[1,128], index: 8, kind: input, shape index: {}]
  %s9 = inlined_call_operand.vmem [shape: bf16[128,256], index: 9, kind: input, shape index: {}]
  %s10 = inlined_call_operand.vmem [shape: f32[1,256], index: 10, kind: input, shape index: {}]
  %s11 = inlined_call_operand.hbm [shape: f32[2,1,256], index: 11, kind: output, shape index: {}]
  %s12 = sld [smem:[#allocation0]]
  $region77: #{tpu_custom_call.1} parent=0
    _
  %s14 = ssub.s32 1, %s12
  %s15 = scalar_select 0, %s14, %s12
  $region1: #{tpu_custom_call.1} parent=0
    #allocation2 [shape = 'u8[2048]{0}', space=vmem, size = 0x800, scoped, tag = 'output window, operand 0']
    #allocation3 [shape = 's32[2]{0}', space=sflag, size = 0x8, scoped, tag = 'scoped memory for tpu_custom_call.1']
    %16 = vsyncpa [#allocation3], 0
    %s17 = scalar_lea.sflag [#allocation3], 1
    %18 = vsyncpa %s17, 0
    loop: start=0, step=1, limit=6
    $region2: #{tpu_custom_call.1} parent=1 // loop_pre_header
      _
    $region3: #{tpu_custom_call.1} parent=1 // loop_header
      %s20 = sphi 0, %s24
      %p21 = scmp.ge.s32.totalorder %s20, 6
      %s27 = sphi 0, %s39
      %s28 = sphi 0, %s35
      %s29 = sphi 0, %s27
      %s30 = sphi 0, %s28
      %s31 = sphi 0, %s29
      %s32 = sphi 0, %s30
      %s44 = sphi 0, %s46
      %s47 = sphi 0, %s44
      %s48 = sphi 0, %s47
      %s64 = sphi 0, %s48
      %s68 = sphi 0, %s68
      %s70 = sphi 0, %s68
      %s71 = sphi 0, %s70
      %s85 = sphi 0, %s71
      %s89 = sphi 0, %s89
      %s91 = sphi 0, %s89
      %s92 = sphi 0, %s91
      %s106 = sphi 0, %s92
      %s110 = sphi 0, %s110
      %s112 = sphi 0, %s110
      %s113 = sphi 0, %s112
      %s127 = sphi 0, %s113
      %s131 = sphi 0, %s131
      %s133 = sphi 0, %s131
      %s134 = sphi 0, %s133
      %s148 = sphi 0, %s134
      %s152 = sphi 0, %s152
      %s154 = sphi 0, %s152
      %s155 = sphi 0, %s154
      %s169 = sphi 0, %s155
      %s173 = sphi 0, %s173
      %s175 = sphi 0, %s173
      %s176 = sphi 0, %s175
      %s190 = sphi 0, %s176
      %s194 = sphi 0, %s194
      %s196 = sphi 0, %s194
      %s197 = sphi 0, %s196
      %s211 = sphi 0, %s197
      %s215 = sphi 0, %s215
      %s217 = sphi 0, %s215
      %s218 = sphi 0, %s217
      %s232 = sphi 0, %s218
      %s236 = sphi 0, %s236
      %s238 = sphi 0, %s236
      %s239 = sphi 0, %s238
      %s253 = sphi 0, %s239
      %s257 = sphi 0, %s257
      %s259 = sphi 0, %s257
      %s260 = sphi 0, %s259
      %s274 = sphi 0, %s260
      %s280 = sphi 0, %s282
      %s283 = sphi 0, %s280
      %s284 = sphi 0, %s283
      %s300 = sphi 0, %s284
    $region4: #{tpu_custom_call.1} parent=1 // loop_header_branch
      %23 = sbr.rel (%p21) target = $region8
    $region5: #{tpu_custom_call.1} parent=1 // loop_body
      %s25 = ssub.s32 %s20, 1
      %s26 = ssub.s32 %s20, 2
      %s33 = sadd.s32 1, %s28
      %p34 = scmp.ge.s32.totalorder %s33, 2
      %s35 = scalar_select %p34, 0, %s33
      %s36 = sadd.s32 1, %s27
      %s37 = scalar_select %p34, %s36, %s27
      %p38 = scmp.ge.s32.totalorder %s37, 2
      %s39 = scalar_select %p38, 0, %s37
      %s40 = ssub.s32 %s27, %s39
      %s41 = ssub.s32 %s28, %s35
      %s42 = sor.u32 %s40, %s41
      %p43 = scmp.eq.s32.totalorder %s42, 0
      %s45 = sadd.s32 %s44, 1
      %s46 = scalar_select %p43, %s44, %s45
      %p49 = pneg %p43
      %p50 = scmp.eq.s32.totalorder %s20, 3
      %p51 = por %p49, %p50
      %p52 = scmp.ne.s32.totalorder %s44, %s47
      %p53 = scmp.eq.s32.totalorder %s20, 0
      %p54 = por %p52, %p53
      %p55 = scmp.ne.s32.totalorder %s44, %s47
      %p56 = scmp.eq.s32.totalorder %s25, 3
      %p57 = por %p55, %p56
      %p58 = scmp.ne.s32.totalorder %s47, %s48
      %p59 = scmp.eq.s32.totalorder %s25, 0
      %p60 = por %p58, %p59
      %p61 = scmp.ne.s32.totalorder %s47, %s48
      %p62 = scmp.eq.s32.totalorder %s26, 3
      %p63 = por %p61, %p62
      %p65 = scmp.ne.s32.totalorder %s48, %s64
      %p66 = scmp.eq.s32.totalorder %s26, 0
      %p67 = por %p65, %p66
      %s69 = sadd.s32 %s68, 1
      %p72 = scmp.eq.s32.totalorder %s20, 3
      %p73 = scmp.ne.s32.totalorder %s68, %s70
      %p74 = scmp.eq.s32.totalorder %s20, 0
      %p75 = por %p73, %p74
      %p76 = scmp.ne.s32.totalorder %s68, %s70
      %p77 = scmp.eq.s32.totalorder %s25, 3
      %p78 = por %p76, %p77
      %p79 = scmp.ne.s32.totalorder %s70, %s71
      %p80 = scmp.eq.s32.totalorder %s25, 0
      %p81 = por %p79, %p80
      %p82 = scmp.ne.s32.totalorder %s70, %s71
      %p83 = scmp.eq.s32.totalorder %s26, 3
      %p84 = por %p82, %p83
      %p86 = scmp.ne.s32.totalorder %s71, %s85
      %p87 = scmp.eq.s32.totalorder %s26, 0
      %p88 = por %p86, %p87
      %s90 = sadd.s32 %s89, 1
      %p93 = scmp.eq.s32.totalorder %s20, 3
      %p94 = scmp.ne.s32.totalorder %s89, %s91
      %p95 = scmp.eq.s32.totalorder %s20, 0
      %p96 = por %p94, %p95
      %p97 = scmp.ne.s32.totalorder %s89, %s91
      %p98 = scmp.eq.s32.totalorder %s25, 3
      %p99 = por %p97, %p98
      %p100 = scmp.ne.s32.totalorder %s91, %s92
      %p101 = scmp.eq.s32.totalorder %s25, 0
      %p102 = por %p100, %p101
      %p103 = scmp.ne.s32.totalorder %s91, %s92
      %p104 = scmp.eq.s32.totalorder %s26, 3
      %p105 = por %p103, %p104
      %p107 = scmp.ne.s32.totalorder %s92, %s106
      %p108 = scmp.eq.s32.totalorder %s26, 0
      %p109 = por %p107, %p108
      %s111 = sadd.s32 %s110, 1
      %p114 = scmp.eq.s32.totalorder %s20, 3
      %p115 = scmp.ne.s32.totalorder %s110, %s112
      %p116 = scmp.eq.s32.totalorder %s20, 0
      %p117 = por %p115, %p116
      %p118 = scmp.ne.s32.totalorder %s110, %s112
      %p119 = scmp.eq.s32.totalorder %s25, 3
      %p120 = por %p118, %p119
      %p121 = scmp.ne.s32.totalorder %s112, %s113
      %p122 = scmp.eq.s32.totalorder %s25, 0
      %p123 = por %p121, %p122
      %p124 = scmp.ne.s32.totalorder %s112, %s113
      %p125 = scmp.eq.s32.totalorder %s26, 3
      %p126 = por %p124, %p125
      %p128 = scmp.ne.s32.totalorder %s113, %s127
      %p129 = scmp.eq.s32.totalorder %s26, 0
      %p130 = por %p128, %p129
      %s132 = sadd.s32 %s131, 1
      %p135 = scmp.eq.s32.totalorder %s20, 3
      %p136 = scmp.ne.s32.totalorder %s131, %s133
      %p137 = scmp.eq.s32.totalorder %s20, 0
      %p138 = por %p136, %p137
      %p139 = scmp.ne.s32.totalorder %s131, %s133
      %p140 = scmp.eq.s32.totalorder %s25, 3
      %p141 = por %p139, %p140
      %p142 = scmp.ne.s32.totalorder %s133, %s134
      %p143 = scmp.eq.s32.totalorder %s25, 0
      %p144 = por %p142, %p143
      %p145 = scmp.ne.s32.totalorder %s133, %s134
      %p146 = scmp.eq.s32.totalorder %s26, 3
      %p147 = por %p145, %p146
      %p149 = scmp.ne.s32.totalorder %s134, %s148
      %p150 = scmp.eq.s32.totalorder %s26, 0
      %p151 = por %p149, %p150
      %s153 = sadd.s32 %s152, 1
      %p156 = scmp.eq.s32.totalorder %s20, 3
      %p157 = scmp.ne.s32.totalorder %s152, %s154
      %p158 = scmp.eq.s32.totalorder %s20, 0
      %p159 = por %p157, %p158
      %p160 = scmp.ne.s32.totalorder %s152, %s154
      %p161 = scmp.eq.s32.totalorder %s25, 3
      %p162 = por %p160, %p161
      %p163 = scmp.ne.s32.totalorder %s154, %s155
      %p164 = scmp.eq.s32.totalorder %s25, 0
      %p165 = por %p163, %p164
      %p166 = scmp.ne.s32.totalorder %s154, %s155
      %p167 = scmp.eq.s32.totalorder %s26, 3
      %p168 = por %p166, %p167
      %p170 = scmp.ne.s32.totalorder %s155, %s169
      %p171 = scmp.eq.s32.totalorder %s26, 0
      %p172 = por %p170, %p171
      %s174 = sadd.s32 %s173, 1
      %p177 = scmp.eq.s32.totalorder %s20, 3
      %p178 = scmp.ne.s32.totalorder %s173, %s175
      %p179 = scmp.eq.s32.totalorder %s20, 0
      %p180 = por %p178, %p179
      %p181 = scmp.ne.s32.totalorder %s173, %s175
      %p182 = scmp.eq.s32.totalorder %s25, 3
      %p183 = por %p181, %p182
      %p184 = scmp.ne.s32.totalorder %s175, %s176
      %p185 = scmp.eq.s32.totalorder %s25, 0
      %p186 = por %p184, %p185
      %p187 = scmp.ne.s32.totalorder %s175, %s176
      %p188 = scmp.eq.s32.totalorder %s26, 3
      %p189 = por %p187, %p188
      %p191 = scmp.ne.s32.totalorder %s176, %s190
      %p192 = scmp.eq.s32.totalorder %s26, 0
      %p193 = por %p191, %p192
      %s195 = sadd.s32 %s194, 1
      %p198 = scmp.eq.s32.totalorder %s20, 3
      %p199 = scmp.ne.s32.totalorder %s194, %s196
      %p200 = scmp.eq.s32.totalorder %s20, 0
      %p201 = por %p199, %p200
      %p202 = scmp.ne.s32.totalorder %s194, %s196
      %p203 = scmp.eq.s32.totalorder %s25, 3
      %p204 = por %p202, %p203
      %p205 = scmp.ne.s32.totalorder %s196, %s197
      %p206 = scmp.eq.s32.totalorder %s25, 0
      %p207 = por %p205, %p206
      %p208 = scmp.ne.s32.totalorder %s196, %s197
      %p209 = scmp.eq.s32.totalorder %s26, 3
      %p210 = por %p208, %p209
      %p212 = scmp.ne.s32.totalorder %s197, %s211
      %p213 = scmp.eq.s32.totalorder %s26, 0
      %p214 = por %p212, %p213
      %s216 = sadd.s32 %s215, 1
      %p219 = scmp.eq.s32.totalorder %s20, 3
      %p220 = scmp.ne.s32.totalorder %s215, %s217
      %p221 = scmp.eq.s32.totalorder %s20, 0
      %p222 = por %p220, %p221
      %p223 = scmp.ne.s32.totalorder %s215, %s217
      %p224 = scmp.eq.s32.totalorder %s25, 3
      %p225 = por %p223, %p224
      %p226 = scmp.ne.s32.totalorder %s217, %s218
      %p227 = scmp.eq.s32.totalorder %s25, 0
      %p228 = por %p226, %p227
      %p229 = scmp.ne.s32.totalorder %s217, %s218
      %p230 = scmp.eq.s32.totalorder %s26, 3
      %p231 = por %p229, %p230
      %p233 = scmp.ne.s32.totalorder %s218, %s232
      %p234 = scmp.eq.s32.totalorder %s26, 0
      %p235 = por %p233, %p234
      %s237 = sadd.s32 %s236, 1
      %p240 = scmp.eq.s32.totalorder %s20, 3
      %p241 = scmp.ne.s32.totalorder %s236, %s238
      %p242 = scmp.eq.s32.totalorder %s20, 0
      %p243 = por %p241, %p242
      %p244 = scmp.ne.s32.totalorder %s236, %s238
      %p245 = scmp.eq.s32.totalorder %s25, 3
      %p246 = por %p244, %p245
      %p247 = scmp.ne.s32.totalorder %s238, %s239
      %p248 = scmp.eq.s32.totalorder %s25, 0
      %p249 = por %p247, %p248
      %p250 = scmp.ne.s32.totalorder %s238, %s239
      %p251 = scmp.eq.s32.totalorder %s26, 3
      %p252 = por %p250, %p251
      %p254 = scmp.ne.s32.totalorder %s239, %s253
      %p255 = scmp.eq.s32.totalorder %s26, 0
      %p256 = por %p254, %p255
      %s258 = sadd.s32 %s257, 1
      %p261 = scmp.eq.s32.totalorder %s20, 3
      %p262 = scmp.ne.s32.totalorder %s257, %s259
      %p263 = scmp.eq.s32.totalorder %s20, 0
      %p264 = por %p262, %p263
      %p265 = scmp.ne.s32.totalorder %s257, %s259
      %p266 = scmp.eq.s32.totalorder %s25, 3
      %p267 = por %p265, %p266
      %p268 = scmp.ne.s32.totalorder %s259, %s260
      %p269 = scmp.eq.s32.totalorder %s25, 0
      %p270 = por %p268, %p269
      %p271 = scmp.ne.s32.totalorder %s259, %s260
      %p272 = scmp.eq.s32.totalorder %s26, 3
      %p273 = por %p271, %p272
      %p275 = scmp.ne.s32.totalorder %s260, %s274
      %p276 = scmp.eq.s32.totalorder %s26, 0
      %p277 = por %p275, %p276
      %s278 = ssub.s32 %s27, %s39
      %p279 = scmp.eq.s32.totalorder %s278, 0
      %s281 = sadd.s32 %s280, 1
      %s282 = scalar_select %p279, %s280, %s281
      %p285 = pneg %p279
      %p286 = scmp.eq.s32.totalorder %s20, 3
      %p287 = por %p285, %p286
      %p288 = scmp.ne.s32.totalorder %s280, %s283
      %p289 = scmp.eq.s32.totalorder %s20, 0
      %p290 = por %p288, %p289
      %p291 = scmp.ne.s32.totalorder %s280, %s283
      %p292 = scmp.eq.s32.totalorder %s25, 3
      %p293 = por %p291, %p292
      %p294 = scmp.ne.s32.totalorder %s283, %s284
      %p295 = scmp.eq.s32.totalorder %s25, 0
      %p296 = por %p294, %p295
      %p297 = scmp.ne.s32.totalorder %s283, %s284
      %p298 = scmp.eq.s32.totalorder %s26, 3
      %p299 = por %p297, %p298
      %p301 = scmp.ne.s32.totalorder %s284, %s300
      %p302 = scmp.eq.s32.totalorder %s26, 0
      %p303 = por %p301, %p302
      %p304 = scmp.le.s32.totalorder 1, %s20
      %p305 = scmp.lt.s32.totalorder %s20, 5
      %p306 = pnand %p304, %p305
      %p307 = pneg %p306
      // Predicated region
      $region9: #{tpu_custom_call.1} parent=5 // pred_check
        _
      $region10: #{tpu_custom_call.1} parent=5 // pred_check_branch
        %309 = sbr.rel (%p306) target = $region12
      $region11: #{tpu_custom_call.1} parent=5 // pred_region
        %s310 = ssub.s32 %s20, 1
        // Predicated region
        $region13: #{tpu_custom_call.1} parent=11 // pred_check
          %p311 = pneg %p81
        $region14: #{tpu_custom_call.1} parent=11 // pred_check_branch
          %313 = sbr.rel (%p311) target = $region16
        $region15: #{tpu_custom_call.1} parent=11 // pred_region
          _
        $region16: #{tpu_custom_call.1} parent=11 // pred_fallthru
          _
        // Predicated region
        $region17: #{tpu_custom_call.1} parent=11 // pred_check
          %p314 = pneg %p102
        $region18: #{tpu_custom_call.1} parent=11 // pred_check_branch
          %316 = sbr.rel (%p314) target = $region20
        $region19: #{tpu_custom_call.1} parent=11 // pred_region
          _
        $region20: #{tpu_custom_call.1} parent=11 // pred_fallthru
          _
        // Predicated region
        $region21: #{tpu_custom_call.1} parent=11 // pred_check
          %p317 = pneg %p123
        $region22: #{tpu_custom_call.1} parent=11 // pred_check_branch
          %319 = sbr.rel (%p317) target = $region24
        $region23: #{tpu_custom_call.1} parent=11 // pred_region
          _
        $region24: #{tpu_custom_call.1} parent=11 // pred_fallthru
          _
        // Predicated region
        $region25: #{tpu_custom_call.1} parent=11 // pred_check
          %p320 = pneg %p144
        $region26: #{tpu_custom_call.1} parent=11 // pred_check_branch
          %322 = sbr.rel (%p320) target = $region28
        $region27: #{tpu_custom_call.1} parent=11 // pred_region
          _
        $region28: #{tpu_custom_call.1} parent=11 // pred_fallthru
          _
        // Predicated region
        $region29: #{tpu_custom_call.1} parent=11 // pred_check
          %p323 = pneg %p165
        $region30: #{tpu_custom_call.1} parent=11 // pred_check_branch
          %325 = sbr.rel (%p323) target = $region32
        $region31: #{tpu_custom_call.1} parent=11 // pred_region
          _
        $region32: #{tpu_custom_call.1} parent=11 // pred_fallthru
          _
        // Predicated region
        $region33: #{tpu_custom_call.1} parent=11 // pred_check
          %p326 = pneg %p186
        $region34: #{tpu_custom_call.1} parent=11 // pred_check_branch
          %328 = sbr.rel (%p326) target = $region36
        $region35: #{tpu_custom_call.1} parent=11 // pred_region
          _
        $region36: #{tpu_custom_call.1} parent=11 // pred_fallthru
          _
        // Predicated region
        $region37: #{tpu_custom_call.1} parent=11 // pred_check
          %p329 = pneg %p207
        $region38: #{tpu_custom_call.1} parent=11 // pred_check_branch
          %331 = sbr.rel (%p329) target = $region40
        $region39: #{tpu_custom_call.1} parent=11 // pred_region
          _
        $region40: #{tpu_custom_call.1} parent=11 // pred_fallthru
          _
        // Predicated region
        $region41: #{tpu_custom_call.1} parent=11 // pred_check
          %p332 = pneg %p228
        $region42: #{tpu_custom_call.1} parent=11 // pred_check_branch
          %334 = sbr.rel (%p332) target = $region44
        $region43: #{tpu_custom_call.1} parent=11 // pred_region
          _
        $region44: #{tpu_custom_call.1} parent=11 // pred_fallthru
          _
        // Predicated region
        $region45: #{tpu_custom_call.1} parent=11 // pred_check
          %p335 = pneg %p249
        $region46: #{tpu_custom_call.1} parent=11 // pred_check_branch
          %337 = sbr.rel (%p335) target = $region48
        $region47: #{tpu_custom_call.1} parent=11 // pred_region
          _
        $region48: #{tpu_custom_call.1} parent=11 // pred_fallthru
          _
        // Predicated region
        $region49: #{tpu_custom_call.1} parent=11 // pred_check
          %p338 = pneg %p270
        $region50: #{tpu_custom_call.1} parent=11 // pred_check_branch
          %340 = sbr.rel (%p338) target = $region52
        $region51: #{tpu_custom_call.1} parent=11 // pred_region
          _
        $region52: #{tpu_custom_call.1} parent=11 // pred_fallthru
          _
      $region12: #{tpu_custom_call.1} parent=5 // pred_fallthru
        _
      %p341 = scmp.lt.s32.totalorder %s20, 4
      // Predicated region
      $region53: #{tpu_custom_call.1} parent=5 // pred_check
        %p342 = pneg %p341
      $region54: #{tpu_custom_call.1} parent=5 // pred_check_branch
        %344 = sbr.rel (%p342) target = $region56
      $region55: #{tpu_custom_call.1} parent=5 // pred_region
        // Predicated region
        $region57: #{tpu_custom_call.1} parent=55 // pred_check
          %p345 = pneg %p54
        $region58: #{tpu_custom_call.1} parent=55 // pred_check_branch
          %347 = sbr.rel (%p345) target = $region60
        $region59: #{tpu_custom_call.1} parent=55 // pred_region
          %s348 = smul.u32 64, %s28
          %p349 = scmp.lt.s32.totalorder %s27, 1
          %s350 = scalar_select %p349, %s27, 1
          %p351 = scmp.lt.s32.totalorder %s348, 127
          %s352 = scalar_select %p351, %s348, 127
          %s353 = smul.addr %s350, 128
          %s354 = sadd.s32 %s352, %s353
          %s355 = smul.addr %s354, 8
          %s356 = scalar_lea.vmem %s0, %s355
          %s357 = smul.u32 64, %s28
        $region60: #{tpu_custom_call.1} parent=55 // pred_fallthru
          _
      $region56: #{tpu_custom_call.1} parent=5 // pred_fallthru
        _
      %p358 = scmp.le.s32.totalorder 1, %s20
      %p359 = scmp.lt.s32.totalorder %s20, 5
      %p360 = pnand %p358, %p359
      %p361 = pneg %p360
      // Predicated region
      $region61: #{tpu_custom_call.1} parent=5 // pred_check
        _
      $region62: #{tpu_custom_call.1} parent=5 // pred_check_branch
        %363 = sbr.rel (%p360) target = $region64
      $region63: #{tpu_custom_call.1} parent=5 // pred_region
        %s364 = ssub.s32 %s20, 1
        %s365 = smul.u32 64, %s30
        %p366 = scmp.lt.s32.totalorder %s29, 1
        %s367 = scalar_select %p366, %s29, 1
        %p368 = scmp.lt.s32.totalorder %s365, 127
        %s369 = scalar_select %p368, %s365, 127
        %s370 = smul.addr %s367, 128
        %s371 = sadd.s32 %s369, %s370
        %s372 = smul.addr %s371, 8
        %s373 = scalar_lea.vmem %s0, %s372
        %p374 = pneg %p60
        %p375 = pneg %p57
        %p376 = pneg %p81
        %p377 = pneg %p78
        %p378 = pneg %p102
        %p379 = pneg %p99
        %p380 = pneg %p123
        %p381 = pneg %p120
        %p382 = pneg %p144
        %p383 = pneg %p141
        %p384 = pneg %p165
        %p385 = pneg %p162
        %p386 = pneg %p186
        %p387 = pneg %p183
        %p388 = pneg %p207
        %p389 = pneg %p204
        %p390 = pneg %p228
        %p391 = pneg %p225
        %p392 = pneg %p249
        %p393 = pneg %p246
        %p394 = pneg %p270
        %p395 = pneg %p267
        %p396 = pneg %p296
        %p397 = pneg %p293
        %s398 = sand.u32 %s283, 1
        %s399 = scalar_lea.sflag [#allocation3], %s398
        %s400 = sand.u32 %s283, 1
        %s401 = smul.addr %s400, 2
        %s402 = scalar_lea.vmem [#allocation2], %s401
        %s403 = smul.u32 64, %s30
        %p404 = scmp.lt.s32.totalorder %s29, 1
        %s405 = scalar_select %p404, %s29, 1
        %p406 = scmp.lt.s32.totalorder %s403, 127
        %s407 = scalar_select %p406, %s403, 127
        %s408 = smul.addr %s405, 128
        %s409 = sadd.s32 %s407, %s408
        %s410 = smul.addr %s409, 8
        %s411 = scalar_lea.vmem %s0, %s410
        %s412 = smul.u32 64, %s30
        %v414 = vld [vmem:[%s411] sm:$0xff]
        %v415 = vld [vmem:[%s411 + $0x8] sm:$0xff]
        %v416 = vld [vmem:[%s411 + $0x10] sm:$0xff]
        %v417 = vld [vmem:[%s411 + $0x18] sm:$0xff]
        %v418 = vld [vmem:[%s411 + $0x20] sm:$0xff]
        %v419 = vld [vmem:[%s411 + $0x28] sm:$0xff]
        %v420 = vld [vmem:[%s411 + $0x30] sm:$0xff]
        %v421 = vld [vmem:[%s411 + $0x38] sm:$0xff]
        %v422 = vld [vmem:[%s411 + $0x40] sm:$0xff]
        %v423 = vld [vmem:[%s411 + $0x48] sm:$0xff]
        %v424 = vld [vmem:[%s411 + $0x50] sm:$0xff]
        %v425 = vld [vmem:[%s411 + $0x58] sm:$0xff]
        %v426 = vld [vmem:[%s411 + $0x60] sm:$0xff]
        %v427 = vld [vmem:[%s411 + $0x68] sm:$0xff]
        %v428 = vld [vmem:[%s411 + $0x70] sm:$0xff]
        %v429 = vld [vmem:[%s411 + $0x78] sm:$0xff]
        %v430 = vld [vmem:[%s411 + $0x80] sm:$0xff]
        %v431 = vld [vmem:[%s411 + $0x88] sm:$0xff]
        %v432 = vld [vmem:[%s411 + $0x90] sm:$0xff]
        %v433 = vld [vmem:[%s411 + $0x98] sm:$0xff]
        %v434 = vld [vmem:[%s411 + $0xa0] sm:$0xff]
        %v435 = vld [vmem:[%s411 + $0xa8] sm:$0xff]
        %v436 = vld [vmem:[%s411 + $0xb0] sm:$0xff]
        %v437 = vld [vmem:[%s411 + $0xb8] sm:$0xff]
        %v438 = vld [vmem:[%s411 + $0xc0] sm:$0xff]
        %v439 = vld [vmem:[%s411 + $0xc8] sm:$0xff]
        %v440 = vld [vmem:[%s411 + $0xd0] sm:$0xff]
        %v441 = vld [vmem:[%s411 + $0xd8] sm:$0xff]
        %v442 = vld [vmem:[%s411 + $0xe0] sm:$0xff]
        %v443 = vld [vmem:[%s411 + $0xe8] sm:$0xff]
        %v444 = vld [vmem:[%s411 + $0xf0] sm:$0xff]
        %v445 = vld [vmem:[%s411 + $0xf8] sm:$0xff]
        %v446 = vld [vmem:[%s411 + $0x100] sm:$0xff]
        %v447 = vld [vmem:[%s411 + $0x108] sm:$0xff]
        %v448 = vld [vmem:[%s411 + $0x110] sm:$0xff]
        %v449 = vld [vmem:[%s411 + $0x118] sm:$0xff]
        %v450 = vld [vmem:[%s411 + $0x120] sm:$0xff]
        %v451 = vld [vmem:[%s411 + $0x128] sm:$0xff]
        %v452 = vld [vmem:[%s411 + $0x130] sm:$0xff]
        %v453 = vld [vmem:[%s411 + $0x138] sm:$0xff]
        %v454 = vld [vmem:[%s411 + $0x140] sm:$0xff]
        %v455 = vld [vmem:[%s411 + $0x148] sm:$0xff]
        %v456 = vld [vmem:[%s411 + $0x150] sm:$0xff]
        %v457 = vld [vmem:[%s411 + $0x158] sm:$0xff]
        %v458 = vld [vmem:[%s411 + $0x160] sm:$0xff]
        %v459 = vld [vmem:[%s411 + $0x168] sm:$0xff]
        %v460 = vld [vmem:[%s411 + $0x170] sm:$0xff]
        %v461 = vld [vmem:[%s411 + $0x178] sm:$0xff]
        %v462 = vld [vmem:[%s411 + $0x180] sm:$0xff]
        %v463 = vld [vmem:[%s411 + $0x188] sm:$0xff]
        %v464 = vld [vmem:[%s411 + $0x190] sm:$0xff]
        %v465 = vld [vmem:[%s411 + $0x198] sm:$0xff]
        %v466 = vld [vmem:[%s411 + $0x1a0] sm:$0xff]
        %v467 = vld [vmem:[%s411 + $0x1a8] sm:$0xff]
        %v468 = vld [vmem:[%s411 + $0x1b0] sm:$0xff]
        %v469 = vld [vmem:[%s411 + $0x1b8] sm:$0xff]
        %v470 = vld [vmem:[%s411 + $0x1c0] sm:$0xff]
        %v471 = vld [vmem:[%s411 + $0x1c8] sm:$0xff]
        %v472 = vld [vmem:[%s411 + $0x1d0] sm:$0xff]
        %v473 = vld [vmem:[%s411 + $0x1d8] sm:$0xff]
        %v474 = vld [vmem:[%s411 + $0x1e0] sm:$0xff]
        %v475 = vld [vmem:[%s411 + $0x1e8] sm:$0xff]
        %v476 = vld [vmem:[%s411 + $0x1f0] sm:$0xff]
        %v477 = vld [vmem:[%s411 + $0x1f8] sm:$0xff]
        %v478 = vld [vmem:[%s1] sm:$0x7]
        %480 = vset.pattern.permute.xlu0 0
        %481 = vperm.xlu0 %480, %v414
        %v482 = vpop.permute.xlu0 %481
        %485 = vset.pattern.permute.xlu0 0
        %486 = vperm.xlu0 %485, %v415
        %v487 = vpop.permute.xlu0 %486
        %490 = vset.pattern.permute.xlu0 0
        %491 = vperm.xlu0 %490, %v416
        %v492 = vpop.permute.xlu0 %491
        %495 = vset.pattern.permute.xlu0 0
        %496 = vperm.xlu0 %495, %v417
        %v497 = vpop.permute.xlu0 %496
        %500 = vset.pattern.permute.xlu0 0
        %501 = vperm.xlu0 %500, %v418
        %v502 = vpop.permute.xlu0 %501
        %505 = vset.pattern.permute.xlu0 0
        %506 = vperm.xlu0 %505, %v419
        %v507 = vpop.permute.xlu0 %506
        %510 = vset.pattern.permute.xlu0 0
        %511 = vperm.xlu0 %510, %v420
        %v512 = vpop.permute.xlu0 %511
        %515 = vset.pattern.permute.xlu0 0
        %516 = vperm.xlu0 %515, %v421
        %v517 = vpop.permute.xlu0 %516
        %520 = vset.pattern.permute.xlu0 0
        %521 = vperm.xlu0 %520, %v422
        %v522 = vpop.permute.xlu0 %521
        %525 = vset.pattern.permute.xlu0 0
        %526 = vperm.xlu0 %525, %v423
        %v527 = vpop.permute.xlu0 %526
        %530 = vset.pattern.permute.xlu0 0
        %531 = vperm.xlu0 %530, %v424
        %v532 = vpop.permute.xlu0 %531
        %535 = vset.pattern.permute.xlu0 0
        %536 = vperm.xlu0 %535, %v425
        %v537 = vpop.permute.xlu0 %536
        %540 = vset.pattern.permute.xlu0 0
        %541 = vperm.xlu0 %540, %v426
        %v542 = vpop.permute.xlu0 %541
        %545 = vset.pattern.permute.xlu0 0
        %546 = vperm.xlu0 %545, %v427
        %v547 = vpop.permute.xlu0 %546
        %550 = vset.pattern.permute.xlu0 0
        %551 = vperm.xlu0 %550, %v428
        %v552 = vpop.permute.xlu0 %551
        %555 = vset.pattern.permute.xlu0 0
        %556 = vperm.xlu0 %555, %v429
        %v557 = vpop.permute.xlu0 %556
        %560 = vset.pattern.permute.xlu0 0
        %561 = vperm.xlu0 %560, %v430
        %v562 = vpop.permute.xlu0 %561
        %565 = vset.pattern.permute.xlu0 0
        %566 = vperm.xlu0 %565, %v431
        %v567 = vpop.permute.xlu0 %566
        %570 = vset.pattern.permute.xlu0 0
        %571 = vperm.xlu0 %570, %v432
        %v572 = vpop.permute.xlu0 %571
        %575 = vset.pattern.permute.xlu0 0
        %576 = vperm.xlu0 %575, %v433
        %v577 = vpop.permute.xlu0 %576
        %580 = vset.pattern.permute.xlu0 0
        %581 = vperm.xlu0 %580, %v434
        %v582 = vpop.permute.xlu0 %581
        %585 = vset.pattern.permute.xlu0 0
        %586 = vperm.xlu0 %585, %v435
        %v587 = vpop.permute.xlu0 %586
        %590 = vset.pattern.permute.xlu0 0
        %591 = vperm.xlu0 %590, %v436
        %v592 = vpop.permute.xlu0 %591
        %595 = vset.pattern.permute.xlu0 0
        %596 = vperm.xlu0 %595, %v437
        %v597 = vpop.permute.xlu0 %596
        %600 = vset.pattern.permute.xlu0 0
        %601 = vperm.xlu0 %600, %v438
        %v602 = vpop.permute.xlu0 %601
        %605 = vset.pattern.permute.xlu0 0
        %606 = vperm.xlu0 %605, %v439
        %v607 = vpop.permute.xlu0 %606
        %610 = vset.pattern.permute.xlu0 0
        %611 = vperm.xlu0 %610, %v440
        %v612 = vpop.permute.xlu0 %611
        %615 = vset.pattern.permute.xlu0 0
        %616 = vperm.xlu0 %615, %v441
        %v617 = vpop.permute.xlu0 %616
        %620 = vset.pattern.permute.xlu0 0
        %621 = vperm.xlu0 %620, %v442
        %v622 = vpop.permute.xlu0 %621
        %625 = vset.pattern.permute.xlu0 0
        %626 = vperm.xlu0 %625, %v443
        %v627 = vpop.permute.xlu0 %626
        %630 = vset.pattern.permute.xlu0 0
        %631 = vperm.xlu0 %630, %v444
        %v632 = vpop.permute.xlu0 %631
        %635 = vset.pattern.permute.xlu0 0
        %636 = vperm.xlu0 %635, %v445
        %v637 = vpop.permute.xlu0 %636
        %640 = vset.pattern.permute.xlu0 0
        %641 = vperm.xlu0 %640, %v446
        %v642 = vpop.permute.xlu0 %641
        %645 = vset.pattern.permute.xlu0 0
        %646 = vperm.xlu0 %645, %v447
        %v647 = vpop.permute.xlu0 %646
        %650 = vset.pattern.permute.xlu0 0
        %651 = vperm.xlu0 %650, %v448
        %v652 = vpop.permute.xlu0 %651
        %655 = vset.pattern.permute.xlu0 0
        %656 = vperm.xlu0 %655, %v449
        %v657 = vpop.permute.xlu0 %656
        %660 = vset.pattern.permute.xlu0 0
        %661 = vperm.xlu0 %660, %v450
        %v662 = vpop.permute.xlu0 %661
        %665 = vset.pattern.permute.xlu0 0
        %666 = vperm.xlu0 %665, %v451
        %v667 = vpop.permute.xlu0 %666
        %670 = vset.pattern.permute.xlu0 0
        %671 = vperm.xlu0 %670, %v452
        %v672 = vpop.permute.xlu0 %671
        %675 = vset.pattern.permute.xlu0 0
        %676 = vperm.xlu0 %675, %v453
        %v677 = vpop.permute.xlu0 %676
        %680 = vset.pattern.permute.xlu0 0
        %681 = vperm.xlu0 %680, %v454
        %v682 = vpop.permute.xlu0 %681
        %685 = vset.pattern.permute.xlu0 0
        %686 = vperm.xlu0 %685, %v455
        %v687 = vpop.permute.xlu0 %686
        %690 = vset.pattern.permute.xlu0 0
        %691 = vperm.xlu0 %690, %v456
        %v692 = vpop.permute.xlu0 %691
        %695 = vset.pattern.permute.xlu0 0
        %696 = vperm.xlu0 %695, %v457
        %v697 = vpop.permute.xlu0 %696
        %700 = vset.pattern.permute.xlu0 0
        %701 = vperm.xlu0 %700, %v458
        %v702 = vpop.permute.xlu0 %701
        %705 = vset.pattern.permute.xlu0 0
        %706 = vperm.xlu0 %705, %v459
        %v707 = vpop.permute.xlu0 %706
        %710 = vset.pattern.permute.xlu0 0
        %711 = vperm.xlu0 %710, %v460
        %v712 = vpop.permute.xlu0 %711
        %715 = vset.pattern.permute.xlu0 0
        %716 = vperm.xlu0 %715, %v461
        %v717 = vpop.permute.xlu0 %716
        %720 = vset.pattern.permute.xlu0 0
        %721 = vperm.xlu0 %720, %v462
        %v722 = vpop.permute.xlu0 %721
        %725 = vset.pattern.permute.xlu0 0
        %726 = vperm.xlu0 %725, %v463
        %v727 = vpop.permute.xlu0 %726
        %730 = vset.pattern.permute.xlu0 0
        %731 = vperm.xlu0 %730, %v464
        %v732 = vpop.permute.xlu0 %731
        %735 = vset.pattern.permute.xlu0 0
        %736 = vperm.xlu0 %735, %v465
        %v737 = vpop.permute.xlu0 %736
        %740 = vset.pattern.permute.xlu0 0
        %741 = vperm.xlu0 %740, %v466
        %v742 = vpop.permute.xlu0 %741
        %745 = vset.pattern.permute.xlu0 0
        %746 = vperm.xlu0 %745, %v467
        %v747 = vpop.permute.xlu0 %746
        %750 = vset.pattern.permute.xlu0 0
        %751 = vperm.xlu0 %750, %v468
        %v752 = vpop.permute.xlu0 %751
        %755 = vset.pattern.permute.xlu0 0
        %756 = vperm.xlu0 %755, %v469
        %v757 = vpop.permute.xlu0 %756
        %760 = vset.pattern.permute.xlu0 0
        %761 = vperm.xlu0 %760, %v470
        %v762 = vpop.permute.xlu0 %761
        %765 = vset.pattern.permute.xlu0 0
        %766 = vperm.xlu0 %765, %v471
        %v767 = vpop.permute.xlu0 %766
        %770 = vset.pattern.permute.xlu0 0
        %771 = vperm.xlu0 %770, %v472
        %v772 = vpop.permute.xlu0 %771
        %775 = vset.pattern.permute.xlu0 0
        %776 = vperm.xlu0 %775, %v473
        %v777 = vpop.permute.xlu0 %776
        %780 = vset.pattern.permute.xlu0 0
        %781 = vperm.xlu0 %780, %v474
        %v782 = vpop.permute.xlu0 %781
        %785 = vset.pattern.permute.xlu0 0
        %786 = vperm.xlu0 %785, %v475
        %v787 = vpop.permute.xlu0 %786
        %790 = vset.pattern.permute.xlu0 0
        %791 = vperm.xlu0 %790, %v476
        %v792 = vpop.permute.xlu0 %791
        %795 = vset.pattern.permute.xlu0 0
        %796 = vperm.xlu0 %795, %v477
        %v797 = vpop.permute.xlu0 %796
        %v799 = vperm.slane %v478, 0
        %v800 = vmul.f32 %v482, %v799
        %v801 = vmul.f32 %v487, %v799
        %v802 = vmul.f32 %v492, %v799
        %v803 = vmul.f32 %v497, %v799
        %v804 = vmul.f32 %v502, %v799
        %v805 = vmul.f32 %v507, %v799
        %v806 = vmul.f32 %v512, %v799
        %v807 = vmul.f32 %v517, %v799
        %v808 = vmul.f32 %v522, %v799
        %v809 = vmul.f32 %v527, %v799
        %v810 = vmul.f32 %v532, %v799
        %v811 = vmul.f32 %v537, %v799
        %v812 = vmul.f32 %v542, %v799
        %v813 = vmul.f32 %v547, %v799
        %v814 = vmul.f32 %v552, %v799
        %v815 = vmul.f32 %v557, %v799
        %v816 = vmul.f32 %v562, %v799
        %v817 = vmul.f32 %v567, %v799
        %v818 = vmul.f32 %v572, %v799
        %v819 = vmul.f32 %v577, %v799
        %v820 = vmul.f32 %v582, %v799
        %v821 = vmul.f32 %v587, %v799
        %v822 = vmul.f32 %v592, %v799
        %v823 = vmul.f32 %v597, %v799
        %v824 = vmul.f32 %v602, %v799
        %v825 = vmul.f32 %v607, %v799
        %v826 = vmul.f32 %v612, %v799
        %v827 = vmul.f32 %v617, %v799
        %v828 = vmul.f32 %v622, %v799
        %v829 = vmul.f32 %v627, %v799
        %v830 = vmul.f32 %v632, %v799
        %v831 = vmul.f32 %v637, %v799
        %v832 = vmul.f32 %v642, %v799
        %v833 = vmul.f32 %v647, %v799
        %v834 = vmul.f32 %v652, %v799
        %v835 = vmul.f32 %v657, %v799
        %v836 = vmul.f32 %v662, %v799
        %v837 = vmul.f32 %v667, %v799
        %v838 = vmul.f32 %v672, %v799
        %v839 = vmul.f32 %v677, %v799
        %v840 = vmul.f32 %v682, %v799
        %v841 = vmul.f32 %v687, %v799
        %v842 = vmul.f32 %v692, %v799
        %v843 = vmul.f32 %v697, %v799
        %v844 = vmul.f32 %v702, %v799
        %v845 = vmul.f32 %v707, %v799
        %v846 = vmul.f32 %v712, %v799
        %v847 = vmul.f32 %v717, %v799
        %v848 = vmul.f32 %v722, %v799
        %v849 = vmul.f32 %v727, %v799
        %v850 = vmul.f32 %v732, %v799
        %v851 = vmul.f32 %v737, %v799
        %v852 = vmul.f32 %v742, %v799
        %v853 = vmul.f32 %v747, %v799
        %v854 = vmul.f32 %v752, %v799
        %v855 = vmul.f32 %v757, %v799
        %v856 = vmul.f32 %v762, %v799
        %v857 = vmul.f32 %v767, %v799
        %v858 = vmul.f32 %v772, %v799
        %v859 = vmul.f32 %v777, %v799
        %v860 = vmul.f32 %v782, %v799
        %v861 = vmul.f32 %v787, %v799
        %v862 = vmul.f32 %v792, %v799
        %v863 = vmul.f32 %v797, %v799
        %864 = vset.pattern.permute.xlu0 1
        %865 = vperm.xlu0 %864, %v414
        %v866 = vpop.permute.xlu0 %865
        %868 = vset.pattern.permute.xlu0 1
        %869 = vperm.xlu0 %868, %v415
        %v870 = vpop.permute.xlu0 %869
        %872 = vset.pattern.permute.xlu0 1
        %873 = vperm.xlu0 %872, %v416
        %v874 = vpop.permute.xlu0 %873
        %876 = vset.pattern.permute.xlu0 1
        %877 = vperm.xlu0 %876, %v417
        %v878 = vpop.permute.xlu0 %877
        %880 = vset.pattern.permute.xlu0 1
        %881 = vperm.xlu0 %880, %v418
        %v882 = vpop.permute.xlu0 %881
        %884 = vset.pattern.permute.xlu0 1
        %885 = vperm.xlu0 %884, %v419
        %v886 = vpop.permute.xlu0 %885
        %888 = vset.pattern.permute.xlu0 1
        %889 = vperm.xlu0 %888, %v420
        %v890 = vpop.permute.xlu0 %889
        %892 = vset.pattern.permute.xlu0 1
        %893 = vperm.xlu0 %892, %v421
        %v894 = vpop.permute.xlu0 %893
        %896 = vset.pattern.permute.xlu0 1
        %897 = vperm.xlu0 %896, %v422
        %v898 = vpop.permute.xlu0 %897
        %900 = vset.pattern.permute.xlu0 1
        %901 = vperm.xlu0 %900, %v423
        %v902 = vpop.permute.xlu0 %901
        %904 = vset.pattern.permute.xlu0 1
        %905 = vperm.xlu0 %904, %v424
        %v906 = vpop.permute.xlu0 %905
        %908 = vset.pattern.permute.xlu0 1
        %909 = vperm.xlu0 %908, %v425
        %v910 = vpop.permute.xlu0 %909
        %912 = vset.pattern.permute.xlu0 1
        %913 = vperm.xlu0 %912, %v426
        %v914 = vpop.permute.xlu0 %913
        %916 = vset.pattern.permute.xlu0 1
        %917 = vperm.xlu0 %916, %v427
        %v918 = vpop.permute.xlu0 %917
        %920 = vset.pattern.permute.xlu0 1
        %921 = vperm.xlu0 %920, %v428
        %v922 = vpop.permute.xlu0 %921
        %924 = vset.pattern.permute.xlu0 1
        %925 = vperm.xlu0 %924, %v429
        %v926 = vpop.permute.xlu0 %925
        %928 = vset.pattern.permute.xlu0 1
        %929 = vperm.xlu0 %928, %v430
        %v930 = vpop.permute.xlu0 %929
        %932 = vset.pattern.permute.xlu0 1
        %933 = vperm.xlu0 %932, %v431
        %v934 = vpop.permute.xlu0 %933
        %936 = vset.pattern.permute.xlu0 1
        %937 = vperm.xlu0 %936, %v432
        %v938 = vpop.permute.xlu0 %937
        %940 = vset.pattern.permute.xlu0 1
        %941 = vperm.xlu0 %940, %v433
        %v942 = vpop.permute.xlu0 %941
        %944 = vset.pattern.permute.xlu0 1
        %945 = vperm.xlu0 %944, %v434
        %v946 = vpop.permute.xlu0 %945
        %948 = vset.pattern.permute.xlu0 1
        %949 = vperm.xlu0 %948, %v435
        %v950 = vpop.permute.xlu0 %949
        %952 = vset.pattern.permute.xlu0 1
        %953 = vperm.xlu0 %952, %v436
        %v954 = vpop.permute.xlu0 %953
        %956 = vset.pattern.permute.xlu0 1
        %957 = vperm.xlu0 %956, %v437
        %v958 = vpop.permute.xlu0 %957
        %960 = vset.pattern.permute.xlu0 1
        %961 = vperm.xlu0 %960, %v438
        %v962 = vpop.permute.xlu0 %961
        %964 = vset.pattern.permute.xlu0 1
        %965 = vperm.xlu0 %964, %v439
        %v966 = vpop.permute.xlu0 %965
        %968 = vset.pattern.permute.xlu0 1
        %969 = vperm.xlu0 %968, %v440
        %v970 = vpop.permute.xlu0 %969
        %972 = vset.pattern.permute.xlu0 1
        %973 = vperm.xlu0 %972, %v441
        %v974 = vpop.permute.xlu0 %973
        %976 = vset.pattern.permute.xlu0 1
        %977 = vperm.xlu0 %976, %v442
        %v978 = vpop.permute.xlu0 %977
        %980 = vset.pattern.permute.xlu0 1
        %981 = vperm.xlu0 %980, %v443
        %v982 = vpop.permute.xlu0 %981
        %984 = vset.pattern.permute.xlu0 1
        %985 = vperm.xlu0 %984, %v444
        %v986 = vpop.permute.xlu0 %985
        %988 = vset.pattern.permute.xlu0 1
        %989 = vperm.xlu0 %988, %v445
        %v990 = vpop.permute.xlu0 %989
        %992 = vset.pattern.permute.xlu0 1
        %993 = vperm.xlu0 %992, %v446
        %v994 = vpop.permute.xlu0 %993
        %996 = vset.pattern.permute.xlu0 1
        %997 = vperm.xlu0 %996, %v447
        %v998 = vpop.permute.xlu0 %997
        %1000 = vset.pattern.permute.xlu0 1
        %1001 = vperm.xlu0 %1000, %v448
        %v1002 = vpop.permute.xlu0 %1001
        %1004 = vset.pattern.permute.xlu0 1
        %1005 = vperm.xlu0 %1004, %v449
        %v1006 = vpop.permute.xlu0 %1005
        %1008 = vset.pattern.permute.xlu0 1
        %1009 = vperm.xlu0 %1008, %v450
        %v1010 = vpop.permute.xlu0 %1009
        %1012 = vset.pattern.permute.xlu0 1
        %1013 = vperm.xlu0 %1012, %v451
        %v1014 = vpop.permute.xlu0 %1013
        %1016 = vset.pattern.permute.xlu0 1
        %1017 = vperm.xlu0 %1016, %v452
        %v1018 = vpop.permute.xlu0 %1017
        %1020 = vset.pattern.permute.xlu0 1
        %1021 = vperm.xlu0 %1020, %v453
        %v1022 = vpop.permute.xlu0 %1021
        %1024 = vset.pattern.permute.xlu0 1
        %1025 = vperm.xlu0 %1024, %v454
        %v1026 = vpop.permute.xlu0 %1025
        %1028 = vset.pattern.permute.xlu0 1
        %1029 = vperm.xlu0 %1028, %v455
        %v1030 = vpop.permute.xlu0 %1029
        %1032 = vset.pattern.permute.xlu0 1
        %1033 = vperm.xlu0 %1032, %v456
        %v1034 = vpop.permute.xlu0 %1033
        %1036 = vset.pattern.permute.xlu0 1
        %1037 = vperm.xlu0 %1036, %v457
        %v1038 = vpop.permute.xlu0 %1037
        %1040 = vset.pattern.permute.xlu0 1
        %1041 = vperm.xlu0 %1040, %v458
        %v1042 = vpop.permute.xlu0 %1041
        %1044 = vset.pattern.permute.xlu0 1
        %1045 = vperm.xlu0 %1044, %v459
        %v1046 = vpop.permute.xlu0 %1045
        %1048 = vset.pattern.permute.xlu0 1
        %1049 = vperm.xlu0 %1048, %v460
        %v1050 = vpop.permute.xlu0 %1049
        %1052 = vset.pattern.permute.xlu0 1
        %1053 = vperm.xlu0 %1052, %v461
        %v1054 = vpop.permute.xlu0 %1053
        %1056 = vset.pattern.permute.xlu0 1
        %1057 = vperm.xlu0 %1056, %v462
        %v1058 = vpop.permute.xlu0 %1057
        %1060 = vset.pattern.permute.xlu0 1
        %1061 = vperm.xlu0 %1060, %v463
        %v1062 = vpop.permute.xlu0 %1061
        %1064 = vset.pattern.permute.xlu0 1
        %1065 = vperm.xlu0 %1064, %v464
        %v1066 = vpop.permute.xlu0 %1065
        %1068 = vset.pattern.permute.xlu0 1
        %1069 = vperm.xlu0 %1068, %v465
        %v1070 = vpop.permute.xlu0 %1069
        %1072 = vset.pattern.permute.xlu0 1
        %1073 = vperm.xlu0 %1072, %v466
        %v1074 = vpop.permute.xlu0 %1073
        %1076 = vset.pattern.permute.xlu0 1
        %1077 = vperm.xlu0 %1076, %v467
        %v1078 = vpop.permute.xlu0 %1077
        %1080 = vset.pattern.permute.xlu0 1
        %1081 = vperm.xlu0 %1080, %v468
        %v1082 = vpop.permute.xlu0 %1081
        %1084 = vset.pattern.permute.xlu0 1
        %1085 = vperm.xlu0 %1084, %v469
        %v1086 = vpop.permute.xlu0 %1085
        %1088 = vset.pattern.permute.xlu0 1
        %1089 = vperm.xlu0 %1088, %v470
        %v1090 = vpop.permute.xlu0 %1089
        %1092 = vset.pattern.permute.xlu0 1
        %1093 = vperm.xlu0 %1092, %v471
        %v1094 = vpop.permute.xlu0 %1093
        %1096 = vset.pattern.permute.xlu0 1
        %1097 = vperm.xlu0 %1096, %v472
        %v1098 = vpop.permute.xlu0 %1097
        %1100 = vset.pattern.permute.xlu0 1
        %1101 = vperm.xlu0 %1100, %v473
        %v1102 = vpop.permute.xlu0 %1101
        %1104 = vset.pattern.permute.xlu0 1
        %1105 = vperm.xlu0 %1104, %v474
        %v1106 = vpop.permute.xlu0 %1105
        %1108 = vset.pattern.permute.xlu0 1
        %1109 = vperm.xlu0 %1108, %v475
        %v1110 = vpop.permute.xlu0 %1109
        %1112 = vset.pattern.permute.xlu0 1
        %1113 = vperm.xlu0 %1112, %v476
        %v1114 = vpop.permute.xlu0 %1113
        %1116 = vset.pattern.permute.xlu0 1
        %1117 = vperm.xlu0 %1116, %v477
        %v1118 = vpop.permute.xlu0 %1117
        %v1120 = vperm.slane %v478, 1
        %v1121 = vmul.f32 %v866, %v1120
        %v1122 = vmul.f32 %v870, %v1120
        %v1123 = vmul.f32 %v874, %v1120
        %v1124 = vmul.f32 %v878, %v1120
        %v1125 = vmul.f32 %v882, %v1120
        %v1126 = vmul.f32 %v886, %v1120
        %v1127 = vmul.f32 %v890, %v1120
        %v1128 = vmul.f32 %v894, %v1120
        %v1129 = vmul.f32 %v898, %v1120
        %v1130 = vmul.f32 %v902, %v1120
        %v1131 = vmul.f32 %v906, %v1120
        %v1132 = vmul.f32 %v910, %v1120
        %v1133 = vmul.f32 %v914, %v1120
        %v1134 = vmul.f32 %v918, %v1120
        %v1135 = vmul.f32 %v922, %v1120
        %v1136 = vmul.f32 %v926, %v1120
        %v1137 = vmul.f32 %v930, %v1120
        %v1138 = vmul.f32 %v934, %v1120
        %v1139 = vmul.f32 %v938, %v1120
        %v1140 = vmul.f32 %v942, %v1120
        %v1141 = vmul.f32 %v946, %v1120
        %v1142 = vmul.f32 %v950, %v1120
        %v1143 = vmul.f32 %v954, %v1120
        %v1144 = vmul.f32 %v958, %v1120
        %v1145 = vmul.f32 %v962, %v1120
        %v1146 = vmul.f32 %v966, %v1120
        %v1147 = vmul.f32 %v970, %v1120
        %v1148 = vmul.f32 %v974, %v1120
        %v1149 = vmul.f32 %v978, %v1120
        %v1150 = vmul.f32 %v982, %v1120
        %v1151 = vmul.f32 %v986, %v1120
        %v1152 = vmul.f32 %v990, %v1120
        %v1153 = vmul.f32 %v994, %v1120
        %v1154 = vmul.f32 %v998, %v1120
        %v1155 = vmul.f32 %v1002, %v1120
        %v1156 = vmul.f32 %v1006, %v1120
        %v1157 = vmul.f32 %v1010, %v1120
        %v1158 = vmul.f32 %v1014, %v1120
        %v1159 = vmul.f32 %v1018, %v1120
        %v1160 = vmul.f32 %v1022, %v1120
        %v1161 = vmul.f32 %v1026, %v1120
        %v1162 = vmul.f32 %v1030, %v1120
        %v1163 = vmul.f32 %v1034, %v1120
        %v1164 = vmul.f32 %v1038, %v1120
        %v1165 = vmul.f32 %v1042, %v1120
        %v1166 = vmul.f32 %v1046, %v1120
        %v1167 = vmul.f32 %v1050, %v1120
        %v1168 = vmul.f32 %v1054, %v1120
        %v1169 = vmul.f32 %v1058, %v1120
        %v1170 = vmul.f32 %v1062, %v1120
        %v1171 = vmul.f32 %v1066, %v1120
        %v1172 = vmul.f32 %v1070, %v1120
        %v1173 = vmul.f32 %v1074, %v1120
        %v1174 = vmul.f32 %v1078, %v1120
        %v1175 = vmul.f32 %v1082, %v1120
        %v1176 = vmul.f32 %v1086, %v1120
        %v1177 = vmul.f32 %v1090, %v1120
        %v1178 = vmul.f32 %v1094, %v1120
        %v1179 = vmul.f32 %v1098, %v1120
        %v1180 = vmul.f32 %v1102, %v1120
        %v1181 = vmul.f32 %v1106, %v1120
        %v1182 = vmul.f32 %v1110, %v1120
        %v1183 = vmul.f32 %v1114, %v1120
        %v1184 = vmul.f32 %v1118, %v1120
        %v1185 = vadd.f32 %v800, %v1121
        %v1186 = vadd.f32 %v801, %v1122
        %v1187 = vadd.f32 %v802, %v1123
        %v1188 = vadd.f32 %v803, %v1124
        %v1189 = vadd.f32 %v804, %v1125
        %v1190 = vadd.f32 %v805, %v1126
        %v1191 = vadd.f32 %v806, %v1127
        %v1192 = vadd.f32 %v807, %v1128
        %v1193 = vadd.f32 %v808, %v1129
        %v1194 = vadd.f32 %v809, %v1130
        %v1195 = vadd.f32 %v810, %v1131
        %v1196 = vadd.f32 %v811, %v1132
        %v1197 = vadd.f32 %v812, %v1133
        %v1198 = vadd.f32 %v813, %v1134
        %v1199 = vadd.f32 %v814, %v1135
        %v1200 = vadd.f32 %v815, %v1136
        %v1201 = vadd.f32 %v816, %v1137
        %v1202 = vadd.f32 %v817, %v1138
        %v1203 = vadd.f32 %v818, %v1139
        %v1204 = vadd.f32 %v819, %v1140
        %v1205 = vadd.f32 %v820, %v1141
        %v1206 = vadd.f32 %v821, %v1142
        %v1207 = vadd.f32 %v822, %v1143
        %v1208 = vadd.f32 %v823, %v1144
        %v1209 = vadd.f32 %v824, %v1145
        %v1210 = vadd.f32 %v825, %v1146
        %v1211 = vadd.f32 %v826, %v1147
        %v1212 = vadd.f32 %v827, %v1148
        %v1213 = vadd.f32 %v828, %v1149
        %v1214 = vadd.f32 %v829, %v1150
        %v1215 = vadd.f32 %v830, %v1151
        %v1216 = vadd.f32 %v831, %v1152
        %v1217 = vadd.f32 %v832, %v1153
        %v1218 = vadd.f32 %v833, %v1154
        %v1219 = vadd.f32 %v834, %v1155
        %v1220 = vadd.f32 %v835, %v1156
        %v1221 = vadd.f32 %v836, %v1157
        %v1222 = vadd.f32 %v837, %v1158
        %v1223 = vadd.f32 %v838, %v1159
        %v1224 = vadd.f32 %v839, %v1160
        %v1225 = vadd.f32 %v840, %v1161
        %v1226 = vadd.f32 %v841, %v1162
        %v1227 = vadd.f32 %v842, %v1163
        %v1228 = vadd.f32 %v843, %v1164
        %v1229 = vadd.f32 %v844, %v1165
        %v1230 = vadd.f32 %v845, %v1166
        %v1231 = vadd.f32 %v846, %v1167
        %v1232 = vadd.f32 %v847, %v1168
        %v1233 = vadd.f32 %v848, %v1169
        %v1234 = vadd.f32 %v849, %v1170
        %v1235 = vadd.f32 %v850, %v1171
        %v1236 = vadd.f32 %v851, %v1172
        %v1237 = vadd.f32 %v852, %v1173
        %v1238 = vadd.f32 %v853, %v1174
        %v1239 = vadd.f32 %v854, %v1175
        %v1240 = vadd.f32 %v855, %v1176
        %v1241 = vadd.f32 %v856, %v1177
        %v1242 = vadd.f32 %v857, %v1178
        %v1243 = vadd.f32 %v858, %v1179
        %v1244 = vadd.f32 %v859, %v1180
        %v1245 = vadd.f32 %v860, %v1181
        %v1246 = vadd.f32 %v861, %v1182
        %v1247 = vadd.f32 %v862, %v1183
        %v1248 = vadd.f32 %v863, %v1184
        %1249 = vset.pattern.permute.xlu0 2
        %1250 = vperm.xlu0 %1249, %v414
        %v1251 = vpop.permute.xlu0 %1250
        %1253 = vset.pattern.permute.xlu0 2
        %1254 = vperm.xlu0 %1253, %v415
        %v1255 = vpop.permute.xlu0 %1254
        %1257 = vset.pattern.permute.xlu0 2
        %1258 = vperm.xlu0 %1257, %v416
        %v1259 = vpop.permute.xlu0 %1258
        %1261 = vset.pattern.permute.xlu0 2
        %1262 = vperm.xlu0 %1261, %v417
        %v1263 = vpop.permute.xlu0 %1262
        %1265 = vset.pattern.permute.xlu0 2
        %1266 = vperm.xlu0 %1265, %v418
        %v1267 = vpop.permute.xlu0 %1266
        %1269 = vset.pattern.permute.xlu0 2
        %1270 = vperm.xlu0 %1269, %v419
        %v1271 = vpop.permute.xlu0 %1270
        %1273 = vset.pattern.permute.xlu0 2
        %1274 = vperm.xlu0 %1273, %v420
        %v1275 = vpop.permute.xlu0 %1274
        %1277 = vset.pattern.permute.xlu0 2
        %1278 = vperm.xlu0 %1277, %v421
        %v1279 = vpop.permute.xlu0 %1278
        %1281 = vset.pattern.permute.xlu0 2
        %1282 = vperm.xlu0 %1281, %v422
        %v1283 = vpop.permute.xlu0 %1282
        %1285 = vset.pattern.permute.xlu0 2
        %1286 = vperm.xlu0 %1285, %v423
        %v1287 = vpop.permute.xlu0 %1286
        %1289 = vset.pattern.permute.xlu0 2
        %1290 = vperm.xlu0 %1289, %v424
        %v1291 = vpop.permute.xlu0 %1290
        %1293 = vset.pattern.permute.xlu0 2
        %1294 = vperm.xlu0 %1293, %v425
        %v1295 = vpop.permute.xlu0 %1294
        %1297 = vset.pattern.permute.xlu0 2
        %1298 = vperm.xlu0 %1297, %v426
        %v1299 = vpop.permute.xlu0 %1298
        %1301 = vset.pattern.permute.xlu0 2
        %1302 = vperm.xlu0 %1301, %v427
        %v1303 = vpop.permute.xlu0 %1302
        %1305 = vset.pattern.permute.xlu0 2
        %1306 = vperm.xlu0 %1305, %v428
        %v1307 = vpop.permute.xlu0 %1306
        %1309 = vset.pattern.permute.xlu0 2
        %1310 = vperm.xlu0 %1309, %v429
        %v1311 = vpop.permute.xlu0 %1310
        %1313 = vset.pattern.permute.xlu0 2
        %1314 = vperm.xlu0 %1313, %v430
        %v1315 = vpop.permute.xlu0 %1314
        %1317 = vset.pattern.permute.xlu0 2
        %1318 = vperm.xlu0 %1317, %v431
        %v1319 = vpop.permute.xlu0 %1318
        %1321 = vset.pattern.permute.xlu0 2
        %1322 = vperm.xlu0 %1321, %v432
        %v1323 = vpop.permute.xlu0 %1322
        %1325 = vset.pattern.permute.xlu0 2
        %1326 = vperm.xlu0 %1325, %v433
        %v1327 = vpop.permute.xlu0 %1326
        %1329 = vset.pattern.permute.xlu0 2
        %1330 = vperm.xlu0 %1329, %v434
        %v1331 = vpop.permute.xlu0 %1330
        %1333 = vset.pattern.permute.xlu0 2
        %1334 = vperm.xlu0 %1333, %v435
        %v1335 = vpop.permute.xlu0 %1334
        %1337 = vset.pattern.permute.xlu0 2
        %1338 = vperm.xlu0 %1337, %v436
        %v1339 = vpop.permute.xlu0 %1338
        %1341 = vset.pattern.permute.xlu0 2
        %1342 = vperm.xlu0 %1341, %v437
        %v1343 = vpop.permute.xlu0 %1342
        %1345 = vset.pattern.permute.xlu0 2
        %1346 = vperm.xlu0 %1345, %v438
        %v1347 = vpop.permute.xlu0 %1346
        %1349 = vset.pattern.permute.xlu0 2
        %1350 = vperm.xlu0 %1349, %v439
        %v1351 = vpop.permute.xlu0 %1350
        %1353 = vset.pattern.permute.xlu0 2
        %1354 = vperm.xlu0 %1353, %v440
        %v1355 = vpop.permute.xlu0 %1354
        %1357 = vset.pattern.permute.xlu0 2
        %1358 = vperm.xlu0 %1357, %v441
        %v1359 = vpop.permute.xlu0 %1358
        %1361 = vset.pattern.permute.xlu0 2
        %1362 = vperm.xlu0 %1361, %v442
        %v1363 = vpop.permute.xlu0 %1362
        %1365 = vset.pattern.permute.xlu0 2
        %1366 = vperm.xlu0 %1365, %v443
        %v1367 = vpop.permute.xlu0 %1366
        %1369 = vset.pattern.permute.xlu0 2
        %1370 = vperm.xlu0 %1369, %v444
        %v1371 = vpop.permute.xlu0 %1370
        %1373 = vset.pattern.permute.xlu0 2
        %1374 = vperm.xlu0 %1373, %v445
        %v1375 = vpop.permute.xlu0 %1374
        %1377 = vset.pattern.permute.xlu0 2
        %1378 = vperm.xlu0 %1377, %v446
        %v1379 = vpop.permute.xlu0 %1378
        %1381 = vset.pattern.permute.xlu0 2
        %1382 = vperm.xlu0 %1381, %v447
        %v1383 = vpop.permute.xlu0 %1382
        %1385 = vset.pattern.permute.xlu0 2
        %1386 = vperm.xlu0 %1385, %v448
        %v1387 = vpop.permute.xlu0 %1386
        %1389 = vset.pattern.permute.xlu0 2
        %1390 = vperm.xlu0 %1389, %v449
        %v1391 = vpop.permute.xlu0 %1390
        %1393 = vset.pattern.permute.xlu0 2
        %1394 = vperm.xlu0 %1393, %v450
        %v1395 = vpop.permute.xlu0 %1394
        %1397 = vset.pattern.permute.xlu0 2
        %1398 = vperm.xlu0 %1397, %v451
        %v1399 = vpop.permute.xlu0 %1398
        %1401 = vset.pattern.permute.xlu0 2
        %1402 = vperm.xlu0 %1401, %v452
        %v1403 = vpop.permute.xlu0 %1402
        %1405 = vset.pattern.permute.xlu0 2
        %1406 = vperm.xlu0 %1405, %v453
        %v1407 = vpop.permute.xlu0 %1406
        %1409 = vset.pattern.permute.xlu0 2
        %1410 = vperm.xlu0 %1409, %v454
        %v1411 = vpop.permute.xlu0 %1410
        %1413 = vset.pattern.permute.xlu0 2
        %1414 = vperm.xlu0 %1413, %v455
        %v1415 = vpop.permute.xlu0 %1414
        %1417 = vset.pattern.permute.xlu0 2
        %1418 = vperm.xlu0 %1417, %v456
        %v1419 = vpop.permute.xlu0 %1418
        %1421 = vset.pattern.permute.xlu0 2
        %1422 = vperm.xlu0 %1421, %v457
        %v1423 = vpop.permute.xlu0 %1422
        %1425 = vset.pattern.permute.xlu0 2
        %1426 = vperm.xlu0 %1425, %v458
        %v1427 = vpop.permute.xlu0 %1426
        %1429 = vset.pattern.permute.xlu0 2
        %1430 = vperm.xlu0 %1429, %v459
        %v1431 = vpop.permute.xlu0 %1430
        %1433 = vset.pattern.permute.xlu0 2
        %1434 = vperm.xlu0 %1433, %v460
        %v1435 = vpop.permute.xlu0 %1434
        %1437 = vset.pattern.permute.xlu0 2
        %1438 = vperm.xlu0 %1437, %v461
        %v1439 = vpop.permute.xlu0 %1438
        %1441 = vset.pattern.permute.xlu0 2
        %1442 = vperm.xlu0 %1441, %v462
        %v1443 = vpop.permute.xlu0 %1442
        %1445 = vset.pattern.permute.xlu0 2
        %1446 = vperm.xlu0 %1445, %v463
        %v1447 = vpop.permute.xlu0 %1446
        %1449 = vset.pattern.permute.xlu0 2
        %1450 = vperm.xlu0 %1449, %v464
        %v1451 = vpop.permute.xlu0 %1450
        %1453 = vset.pattern.permute.xlu0 2
        %1454 = vperm.xlu0 %1453, %v465
        %v1455 = vpop.permute.xlu0 %1454
        %1457 = vset.pattern.permute.xlu0 2
        %1458 = vperm.xlu0 %1457, %v466
        %v1459 = vpop.permute.xlu0 %1458
        %1461 = vset.pattern.permute.xlu0 2
        %1462 = vperm.xlu0 %1461, %v467
        %v1463 = vpop.permute.xlu0 %1462
        %1465 = vset.pattern.permute.xlu0 2
        %1466 = vperm.xlu0 %1465, %v468
        %v1467 = vpop.permute.xlu0 %1466
        %1469 = vset.pattern.permute.xlu0 2
        %1470 = vperm.xlu0 %1469, %v469
        %v1471 = vpop.permute.xlu0 %1470
        %1473 = vset.pattern.permute.xlu0 2
        %1474 = vperm.xlu0 %1473, %v470
        %v1475 = vpop.permute.xlu0 %1474
        %1477 = vset.pattern.permute.xlu0 2
        %1478 = vperm.xlu0 %1477, %v471
        %v1479 = vpop.permute.xlu0 %1478
        %1481 = vset.pattern.permute.xlu0 2
        %1482 = vperm.xlu0 %1481, %v472
        %v1483 = vpop.permute.xlu0 %1482
        %1485 = vset.pattern.permute.xlu0 2
        %1486 = vperm.xlu0 %1485, %v473
        %v1487 = vpop.permute.xlu0 %1486
        %1489 = vset.pattern.permute.xlu0 2
        %1490 = vperm.xlu0 %1489, %v474
        %v1491 = vpop.permute.xlu0 %1490
        %1493 = vset.pattern.permute.xlu0 2
        %1494 = vperm.xlu0 %1493, %v475
        %v1495 = vpop.permute.xlu0 %1494
        %1497 = vset.pattern.permute.xlu0 2
        %1498 = vperm.xlu0 %1497, %v476
        %v1499 = vpop.permute.xlu0 %1498
        %1501 = vset.pattern.permute.xlu0 2
        %1502 = vperm.xlu0 %1501, %v477
        %v1503 = vpop.permute.xlu0 %1502
        %v1505 = vperm.slane %v478, 2
        %v1506 = vmul.f32 %v1251, %v1505
        %v1507 = vmul.f32 %v1255, %v1505
        %v1508 = vmul.f32 %v1259, %v1505
        %v1509 = vmul.f32 %v1263, %v1505
        %v1510 = vmul.f32 %v1267, %v1505
        %v1511 = vmul.f32 %v1271, %v1505
        %v1512 = vmul.f32 %v1275, %v1505
        %v1513 = vmul.f32 %v1279, %v1505
        %v1514 = vmul.f32 %v1283, %v1505
        %v1515 = vmul.f32 %v1287, %v1505
        %v1516 = vmul.f32 %v1291, %v1505
        %v1517 = vmul.f32 %v1295, %v1505
        %v1518 = vmul.f32 %v1299, %v1505
        %v1519 = vmul.f32 %v1303, %v1505
        %v1520 = vmul.f32 %v1307, %v1505
        %v1521 = vmul.f32 %v1311, %v1505
        %v1522 = vmul.f32 %v1315, %v1505
        %v1523 = vmul.f32 %v1319, %v1505
        %v1524 = vmul.f32 %v1323, %v1505
        %v1525 = vmul.f32 %v1327, %v1505
        %v1526 = vmul.f32 %v1331, %v1505
        %v1527 = vmul.f32 %v1335, %v1505
        %v1528 = vmul.f32 %v1339, %v1505
        %v1529 = vmul.f32 %v1343, %v1505
        %v1530 = vmul.f32 %v1347, %v1505
        %v1531 = vmul.f32 %v1351, %v1505
        %v1532 = vmul.f32 %v1355, %v1505
        %v1533 = vmul.f32 %v1359, %v1505
        %v1534 = vmul.f32 %v1363, %v1505
        %v1535 = vmul.f32 %v1367, %v1505
        %v1536 = vmul.f32 %v1371, %v1505
        %v1537 = vmul.f32 %v1375, %v1505
        %v1538 = vmul.f32 %v1379, %v1505
        %v1539 = vmul.f32 %v1383, %v1505
        %v1540 = vmul.f32 %v1387, %v1505
        %v1541 = vmul.f32 %v1391, %v1505
        %v1542 = vmul.f32 %v1395, %v1505
        %v1543 = vmul.f32 %v1399, %v1505
        %v1544 = vmul.f32 %v1403, %v1505
        %v1545 = vmul.f32 %v1407, %v1505
        %v1546 = vmul.f32 %v1411, %v1505
        %v1547 = vmul.f32 %v1415, %v1505
        %v1548 = vmul.f32 %v1419, %v1505
        %v1549 = vmul.f32 %v1423, %v1505
        %v1550 = vmul.f32 %v1427, %v1505
        %v1551 = vmul.f32 %v1431, %v1505
        %v1552 = vmul.f32 %v1435, %v1505
        %v1553 = vmul.f32 %v1439, %v1505
        %v1554 = vmul.f32 %v1443, %v1505
        %v1555 = vmul.f32 %v1447, %v1505
        %v1556 = vmul.f32 %v1451, %v1505
        %v1557 = vmul.f32 %v1455, %v1505
        %v1558 = vmul.f32 %v1459, %v1505
        %v1559 = vmul.f32 %v1463, %v1505
        %v1560 = vmul.f32 %v1467, %v1505
        %v1561 = vmul.f32 %v1471, %v1505
        %v1562 = vmul.f32 %v1475, %v1505
        %v1563 = vmul.f32 %v1479, %v1505
        %v1564 = vmul.f32 %v1483, %v1505
        %v1565 = vmul.f32 %v1487, %v1505
        %v1566 = vmul.f32 %v1491, %v1505
        %v1567 = vmul.f32 %v1495, %v1505
        %v1568 = vmul.f32 %v1499, %v1505
        %v1569 = vmul.f32 %v1503, %v1505
        %v1570 = vadd.f32 %v1185, %v1506
        %v1571 = vadd.f32 %v1186, %v1507
        %v1572 = vadd.f32 %v1187, %v1508
        %v1573 = vadd.f32 %v1188, %v1509
        %v1574 = vadd.f32 %v1189, %v1510
        %v1575 = vadd.f32 %v1190, %v1511
        %v1576 = vadd.f32 %v1191, %v1512
        %v1577 = vadd.f32 %v1192, %v1513
        %v1578 = vadd.f32 %v1193, %v1514
        %v1579 = vadd.f32 %v1194, %v1515
        %v1580 = vadd.f32 %v1195, %v1516
        %v1581 = vadd.f32 %v1196, %v1517
        %v1582 = vadd.f32 %v1197, %v1518
        %v1583 = vadd.f32 %v1198, %v1519
        %v1584 = vadd.f32 %v1199, %v1520
        %v1585 = vadd.f32 %v1200, %v1521
        %v1586 = vadd.f32 %v1201, %v1522
        %v1587 = vadd.f32 %v1202, %v1523
        %v1588 = vadd.f32 %v1203, %v1524
        %v1589 = vadd.f32 %v1204, %v1525
        %v1590 = vadd.f32 %v1205, %v1526
        %v1591 = vadd.f32 %v1206, %v1527
        %v1592 = vadd.f32 %v1207, %v1528
        %v1593 = vadd.f32 %v1208, %v1529
        %v1594 = vadd.f32 %v1209, %v1530
        %v1595 = vadd.f32 %v1210, %v1531
        %v1596 = vadd.f32 %v1211, %v1532
        %v1597 = vadd.f32 %v1212, %v1533
        %v1598 = vadd.f32 %v1213, %v1534
        %v1599 = vadd.f32 %v1214, %v1535
        %v1600 = vadd.f32 %v1215, %v1536
        %v1601 = vadd.f32 %v1216, %v1537
        %v1602 = vadd.f32 %v1217, %v1538
        %v1603 = vadd.f32 %v1218, %v1539
        %v1604 = vadd.f32 %v1219, %v1540
        %v1605 = vadd.f32 %v1220, %v1541
        %v1606 = vadd.f32 %v1221, %v1542
        %v1607 = vadd.f32 %v1222, %v1543
        %v1608 = vadd.f32 %v1223, %v1544
        %v1609 = vadd.f32 %v1224, %v1545
        %v1610 = vadd.f32 %v1225, %v1546
        %v1611 = vadd.f32 %v1226, %v1547
        %v1612 = vadd.f32 %v1227, %v1548
        %v1613 = vadd.f32 %v1228, %v1549
        %v1614 = vadd.f32 %v1229, %v1550
        %v1615 = vadd.f32 %v1230, %v1551
        %v1616 = vadd.f32 %v1231, %v1552
        %v1617 = vadd.f32 %v1232, %v1553
        %v1618 = vadd.f32 %v1233, %v1554
        %v1619 = vadd.f32 %v1234, %v1555
        %v1620 = vadd.f32 %v1235, %v1556
        %v1621 = vadd.f32 %v1236, %v1557
        %v1622 = vadd.f32 %v1237, %v1558
        %v1623 = vadd.f32 %v1238, %v1559
        %v1624 = vadd.f32 %v1239, %v1560
        %v1625 = vadd.f32 %v1240, %v1561
        %v1626 = vadd.f32 %v1241, %v1562
        %v1627 = vadd.f32 %v1242, %v1563
        %v1628 = vadd.f32 %v1243, %v1564
        %v1629 = vadd.f32 %v1244, %v1565
        %v1630 = vadd.f32 %v1245, %v1566
        %v1631 = vadd.f32 %v1246, %v1567
        %v1632 = vadd.f32 %v1247, %v1568
        %v1633 = vadd.f32 %v1248, %v1569
        %v1634 = vld [vmem:[%s2] sm:$0x1]
        %v1636 = vperm.slane %v1634, 0
        %v1638 = vadd.f32 %v1570, %v1636
        %v1639 = vadd.f32 %v1571, %v1636
        %v1640 = vadd.f32 %v1572, %v1636
        %v1641 = vadd.f32 %v1573, %v1636
        %v1642 = vadd.f32 %v1574, %v1636
        %v1643 = vadd.f32 %v1575, %v1636
        %v1644 = vadd.f32 %v1576, %v1636
        %v1645 = vadd.f32 %v1577, %v1636
        %v1646 = vadd.f32 %v1578, %v1636
        %v1647 = vadd.f32 %v1579, %v1636
        %v1648 = vadd.f32 %v1580, %v1636
        %v1649 = vadd.f32 %v1581, %v1636
        %v1650 = vadd.f32 %v1582, %v1636
        %v1651 = vadd.f32 %v1583, %v1636
        %v1652 = vadd.f32 %v1584, %v1636
        %v1653 = vadd.f32 %v1585, %v1636
        %v1654 = vadd.f32 %v1586, %v1636
        %v1655 = vadd.f32 %v1587, %v1636
        %v1656 = vadd.f32 %v1588, %v1636
        %v1657 = vadd.f32 %v1589, %v1636
        %v1658 = vadd.f32 %v1590, %v1636
        %v1659 = vadd.f32 %v1591, %v1636
        %v1660 = vadd.f32 %v1592, %v1636
        %v1661 = vadd.f32 %v1593, %v1636
        %v1662 = vadd.f32 %v1594, %v1636
        %v1663 = vadd.f32 %v1595, %v1636
        %v1664 = vadd.f32 %v1596, %v1636
        %v1665 = vadd.f32 %v1597, %v1636
        %v1666 = vadd.f32 %v1598, %v1636
        %v1667 = vadd.f32 %v1599, %v1636
        %v1668 = vadd.f32 %v1600, %v1636
        %v1669 = vadd.f32 %v1601, %v1636
        %v1670 = vadd.f32 %v1602, %v1636
        %v1671 = vadd.f32 %v1603, %v1636
        %v1672 = vadd.f32 %v1604, %v1636
        %v1673 = vadd.f32 %v1605, %v1636
        %v1674 = vadd.f32 %v1606, %v1636
        %v1675 = vadd.f32 %v1607, %v1636
        %v1676 = vadd.f32 %v1608, %v1636
        %v1677 = vadd.f32 %v1609, %v1636
        %v1678 = vadd.f32 %v1610, %v1636
        %v1679 = vadd.f32 %v1611, %v1636
        %v1680 = vadd.f32 %v1612, %v1636
        %v1681 = vadd.f32 %v1613, %v1636
        %v1682 = vadd.f32 %v1614, %v1636
        %v1683 = vadd.f32 %v1615, %v1636
        %v1684 = vadd.f32 %v1616, %v1636
        %v1685 = vadd.f32 %v1617, %v1636
        %v1686 = vadd.f32 %v1618, %v1636
        %v1687 = vadd.f32 %v1619, %v1636
        %v1688 = vadd.f32 %v1620, %v1636
        %v1689 = vadd.f32 %v1621, %v1636
        %v1690 = vadd.f32 %v1622, %v1636
        %v1691 = vadd.f32 %v1623, %v1636
        %v1692 = vadd.f32 %v1624, %v1636
        %v1693 = vadd.f32 %v1625, %v1636
        %v1694 = vadd.f32 %v1626, %v1636
        %v1695 = vadd.f32 %v1627, %v1636
        %v1696 = vadd.f32 %v1628, %v1636
        %v1697 = vadd.f32 %v1629, %v1636
        %v1698 = vadd.f32 %v1630, %v1636
        %v1699 = vadd.f32 %v1631, %v1636
        %v1700 = vadd.f32 %v1632, %v1636
        %v1701 = vadd.f32 %v1633, %v1636
        %v1702 = vmax.f32 %v1638, 0.0
        %v1703 = vmax.f32 %v1639, 0.0
        %v1704 = vmax.f32 %v1640, 0.0
        %v1705 = vmax.f32 %v1641, 0.0
        %v1706 = vmax.f32 %v1642, 0.0
        %v1707 = vmax.f32 %v1643, 0.0
        %v1708 = vmax.f32 %v1644, 0.0
        %v1709 = vmax.f32 %v1645, 0.0
        %v1710 = vmax.f32 %v1646, 0.0
        %v1711 = vmax.f32 %v1647, 0.0
        %v1712 = vmax.f32 %v1648, 0.0
        %v1713 = vmax.f32 %v1649, 0.0
        %v1714 = vmax.f32 %v1650, 0.0
        %v1715 = vmax.f32 %v1651, 0.0
        %v1716 = vmax.f32 %v1652, 0.0
        %v1717 = vmax.f32 %v1653, 0.0
        %v1718 = vmax.f32 %v1654, 0.0
        %v1719 = vmax.f32 %v1655, 0.0
        %v1720 = vmax.f32 %v1656, 0.0
        %v1721 = vmax.f32 %v1657, 0.0
        %v1722 = vmax.f32 %v1658, 0.0
        %v1723 = vmax.f32 %v1659, 0.0
        %v1724 = vmax.f32 %v1660, 0.0
        %v1725 = vmax.f32 %v1661, 0.0
        %v1726 = vmax.f32 %v1662, 0.0
        %v1727 = vmax.f32 %v1663, 0.0
        %v1728 = vmax.f32 %v1664, 0.0
        %v1729 = vmax.f32 %v1665, 0.0
        %v1730 = vmax.f32 %v1666, 0.0
        %v1731 = vmax.f32 %v1667, 0.0
        %v1732 = vmax.f32 %v1668, 0.0
        %v1733 = vmax.f32 %v1669, 0.0
        %v1734 = vmax.f32 %v1670, 0.0
        %v1735 = vmax.f32 %v1671, 0.0
        %v1736 = vmax.f32 %v1672, 0.0
        %v1737 = vmax.f32 %v1673, 0.0
        %v1738 = vmax.f32 %v1674, 0.0
        %v1739 = vmax.f32 %v1675, 0.0
        %v1740 = vmax.f32 %v1676, 0.0
        %v1741 = vmax.f32 %v1677, 0.0
        %v1742 = vmax.f32 %v1678, 0.0
        %v1743 = vmax.f32 %v1679, 0.0
        %v1744 = vmax.f32 %v1680, 0.0
        %v1745 = vmax.f32 %v1681, 0.0
        %v1746 = vmax.f32 %v1682, 0.0
        %v1747 = vmax.f32 %v1683, 0.0
        %v1748 = vmax.f32 %v1684, 0.0
        %v1749 = vmax.f32 %v1685, 0.0
        %v1750 = vmax.f32 %v1686, 0.0
        %v1751 = vmax.f32 %v1687, 0.0
        %v1752 = vmax.f32 %v1688, 0.0
        %v1753 = vmax.f32 %v1689, 0.0
        %v1754 = vmax.f32 %v1690, 0.0
        %v1755 = vmax.f32 %v1691, 0.0
        %v1756 = vmax.f32 %v1692, 0.0
        %v1757 = vmax.f32 %v1693, 0.0
        %v1758 = vmax.f32 %v1694, 0.0
        %v1759 = vmax.f32 %v1695, 0.0
        %v1760 = vmax.f32 %v1696, 0.0
        %v1761 = vmax.f32 %v1697, 0.0
        %v1762 = vmax.f32 %v1698, 0.0
        %v1763 = vmax.f32 %v1699, 0.0
        %v1764 = vmax.f32 %v1700, 0.0
        %v1765 = vmax.f32 %v1701, 0.0
        %v1766 = vpack.c.bf16 %v1703, %v1702
        %v1767 = vpack.c.bf16 %v1705, %v1704
        %v1768 = vpack.c.bf16 %v1707, %v1706
        %v1769 = vpack.c.bf16 %v1709, %v1708
        %v1770 = vpack.c.bf16 %v1711, %v1710
        %v1771 = vpack.c.bf16 %v1713, %v1712
        %v1772 = vpack.c.bf16 %v1715, %v1714
        %v1773 = vpack.c.bf16 %v1717, %v1716
        %v1774 = vpack.c.bf16 %v1719, %v1718
        %v1775 = vpack.c.bf16 %v1721, %v1720
        %v1776 = vpack.c.bf16 %v1723, %v1722
        %v1777 = vpack.c.bf16 %v1725, %v1724
        %v1778 = vpack.c.bf16 %v1727, %v1726
        %v1779 = vpack.c.bf16 %v1729, %v1728
        %v1780 = vpack.c.bf16 %v1731, %v1730
        %v1781 = vpack.c.bf16 %v1733, %v1732
        %v1782 = vpack.c.bf16 %v1735, %v1734
        %v1783 = vpack.c.bf16 %v1737, %v1736
        %v1784 = vpack.c.bf16 %v1739, %v1738
        %v1785 = vpack.c.bf16 %v1741, %v1740
        %v1786 = vpack.c.bf16 %v1743, %v1742
        %v1787 = vpack.c.bf16 %v1745, %v1744
        %v1788 = vpack.c.bf16 %v1747, %v1746
        %v1789 = vpack.c.bf16 %v1749, %v1748
        %v1790 = vpack.c.bf16 %v1751, %v1750
        %v1791 = vpack.c.bf16 %v1753, %v1752
        %v1792 = vpack.c.bf16 %v1755, %v1754
        %v1793 = vpack.c.bf16 %v1757, %v1756
        %v1794 = vpack.c.bf16 %v1759, %v1758
        %v1795 = vpack.c.bf16 %v1761, %v1760
        %v1796 = vpack.c.bf16 %v1763, %v1762
        %v1797 = vpack.c.bf16 %v1765, %v1764
        %v1798 = vld [vmem:[%s3] sm:$0xf]
        %v1799 = vld [vmem:[%s3 + $0x4] sm:$0xf]
        %v1800 = vld [vmem:[%s3 + $0x8] sm:$0xf]
        %v1801 = vld [vmem:[%s3 + $0xc] sm:$0xf]
        %v1802 = vld [vmem:[%s3 + $0x10] sm:$0xf]
        %v1803 = vld [vmem:[%s3 + $0x14] sm:$0xf]
        %v1804 = vld [vmem:[%s3 + $0x18] sm:$0xf]
        %v1805 = vld [vmem:[%s3 + $0x1c] sm:$0xf]
        %v1806 = vld [vmem:[%s4] sm:$0x1]
        %v1808 = vperm.slane %v1806, 0
        %v1818 = vunpack.c.l.b16 %v1798
        %v1819 = vunpack.c.l.b16 %v1799
        %v1820 = vunpack.c.l.b16 %v1800
        %v1821 = vunpack.c.l.b16 %v1801
        %v1822 = vunpack.c.l.b16 %v1802
        %v1823 = vunpack.c.l.b16 %v1803
        %v1824 = vunpack.c.l.b16 %v1804
        %v1825 = vunpack.c.l.b16 %v1805
        %v1826 = vpack.c.b16 %v1819, %v1818
        %v1827 = vpack.c.b16 %v1821, %v1820
        %v1828 = vpack.c.b16 %v1823, %v1822
        %v1829 = vpack.c.b16 %v1825, %v1824
        %vm1834 = vcmask 523264
        %v1836 = vsel %vm1834, %v1766, 0
        %v1839 = vsel %vm1834, %v1767, 0
        %v1842 = vsel %vm1834, %v1768, 0
        %v1845 = vsel %vm1834, %v1769, 0
        %v1848 = vsel %vm1834, %v1770, 0
        %v1851 = vsel %vm1834, %v1771, 0
        %v1854 = vsel %vm1834, %v1772, 0
        %v1857 = vsel %vm1834, %v1773, 0
        %v1860 = vsel %vm1834, %v1774, 0
        %v1863 = vsel %vm1834, %v1775, 0
        %v1866 = vsel %vm1834, %v1776, 0
        %v1869 = vsel %vm1834, %v1777, 0
        %v1872 = vsel %vm1834, %v1778, 0
        %v1875 = vsel %vm1834, %v1779, 0
        %v1878 = vsel %vm1834, %v1780, 0
        %v1881 = vsel %vm1834, %v1781, 0
        %v1884 = vsel %vm1834, %v1782, 0
        %v1887 = vsel %vm1834, %v1783, 0
        %v1890 = vsel %vm1834, %v1784, 0
        %v1893 = vsel %vm1834, %v1785, 0
        %v1896 = vsel %vm1834, %v1786, 0
        %v1899 = vsel %vm1834, %v1787, 0
        %v1902 = vsel %vm1834, %v1788, 0
        %v1905 = vsel %vm1834, %v1789, 0
        %v1908 = vsel %vm1834, %v1790, 0
        %v1911 = vsel %vm1834, %v1791, 0
        %v1914 = vsel %vm1834, %v1792, 0
        %v1917 = vsel %vm1834, %v1793, 0
        %v1920 = vsel %vm1834, %v1794, 0
        %v1923 = vsel %vm1834, %v1795, 0
        %v1926 = vsel %vm1834, %v1796, 0
        %v1929 = vsel %vm1834, %v1797, 0
        %1931 = vmatpush.bf16.msra.mxu0 0
        %1932 = vmatpush.bf16.msra.mxu0 0
        %1933 = vmatpush.bf16.msra.mxu0 0
        %1934 = vmatpush.bf16.msra.mxu0 0
        %1935 = vmatpush.bf16.msra.mxu0 %v1829
        %1936 = vmatpush.bf16.msra.mxu0 %v1828
        %1937 = vmatpush.bf16.msra.mxu0 %v1827
        %1938 = vmatpush.bf16.msra.mxu0 %v1826
        %1939 = vmatmul.bf16.gmra.mxu0 %v1836
        %v1940 = vpop.f32.mrf.mxu0
        %v1941 = vadd.f32 %v1808, %v1940
        %v1942 = vpop.f32.mrf.mxu0
        %v1943 = vadd.f32 %v1808, %v1942
        %1944 = vmatmul.bf16.gmra.mxu0 %v1839
        %v1945 = vpop.f32.mrf.mxu0
        %v1946 = vadd.f32 %v1808, %v1945
        %v1947 = vpop.f32.mrf.mxu0
        %v1948 = vadd.f32 %v1808, %v1947
        %1949 = vmatmul.bf16.gmra.mxu0 %v1842
        %v1950 = vpop.f32.mrf.mxu0
        %v1951 = vadd.f32 %v1808, %v1950
        %v1952 = vpop.f32.mrf.mxu0
        %v1953 = vadd.f32 %v1808, %v1952
        %1954 = vmatmul.bf16.gmra.mxu0 %v1845
        %v1955 = vpop.f32.mrf.mxu0
        %v1956 = vadd.f32 %v1808, %v1955
        %v1957 = vpop.f32.mrf.mxu0
        %v1958 = vadd.f32 %v1808, %v1957
        %1959 = vmatmul.bf16.gmra.mxu0 %v1848
        %v1960 = vpop.f32.mrf.mxu0
        %v1961 = vadd.f32 %v1808, %v1960
        %v1962 = vpop.f32.mrf.mxu0
        %v1963 = vadd.f32 %v1808, %v1962
        %1964 = vmatmul.bf16.gmra.mxu0 %v1851
        %v1965 = vpop.f32.mrf.mxu0
        %v1966 = vadd.f32 %v1808, %v1965
        %v1967 = vpop.f32.mrf.mxu0
        %v1968 = vadd.f32 %v1808, %v1967
        %1969 = vmatmul.bf16.gmra.mxu0 %v1854
        %v1970 = vpop.f32.mrf.mxu0
        %v1971 = vadd.f32 %v1808, %v1970
        %v1972 = vpop.f32.mrf.mxu0
        %v1973 = vadd.f32 %v1808, %v1972
        %1974 = vmatmul.bf16.gmra.mxu0 %v1857
        %v1975 = vpop.f32.mrf.mxu0
        %v1976 = vadd.f32 %v1808, %v1975
        %v1977 = vpop.f32.mrf.mxu0
        %v1978 = vadd.f32 %v1808, %v1977
        %1979 = vmatmul.bf16.gmra.mxu0 %v1860
        %v1980 = vpop.f32.mrf.mxu0
        %v1981 = vadd.f32 %v1808, %v1980
        %v1982 = vpop.f32.mrf.mxu0
        %v1983 = vadd.f32 %v1808, %v1982
        %1984 = vmatmul.bf16.gmra.mxu0 %v1863
        %v1985 = vpop.f32.mrf.mxu0
        %v1986 = vadd.f32 %v1808, %v1985
        %v1987 = vpop.f32.mrf.mxu0
        %v1988 = vadd.f32 %v1808, %v1987
        %1989 = vmatmul.bf16.gmra.mxu0 %v1866
        %v1990 = vpop.f32.mrf.mxu0
        %v1991 = vadd.f32 %v1808, %v1990
        %v1992 = vpop.f32.mrf.mxu0
        %v1993 = vadd.f32 %v1808, %v1992
        %1994 = vmatmul.bf16.gmra.mxu0 %v1869
        %v1995 = vpop.f32.mrf.mxu0
        %v1996 = vadd.f32 %v1808, %v1995
        %v1997 = vpop.f32.mrf.mxu0
        %v1998 = vadd.f32 %v1808, %v1997
        %1999 = vmatmul.bf16.gmra.mxu0 %v1872
        %v2000 = vpop.f32.mrf.mxu0
        %v2001 = vadd.f32 %v1808, %v2000
        %v2002 = vpop.f32.mrf.mxu0
        %v2003 = vadd.f32 %v1808, %v2002
        %2004 = vmatmul.bf16.gmra.mxu0 %v1875
        %v2005 = vpop.f32.mrf.mxu0
        %v2006 = vadd.f32 %v1808, %v2005
        %v2007 = vpop.f32.mrf.mxu0
        %v2008 = vadd.f32 %v1808, %v2007
        %2009 = vmatmul.bf16.gmra.mxu0 %v1878
        %v2010 = vpop.f32.mrf.mxu0
        %v2011 = vadd.f32 %v1808, %v2010
        %v2012 = vpop.f32.mrf.mxu0
        %v2013 = vadd.f32 %v1808, %v2012
        %2014 = vmatmul.bf16.gmra.mxu0 %v1881
        %v2015 = vpop.f32.mrf.mxu0
        %v2016 = vadd.f32 %v1808, %v2015
        %v2017 = vpop.f32.mrf.mxu0
        %v2018 = vadd.f32 %v1808, %v2017
        %2019 = vmatmul.bf16.gmra.mxu0 %v1884
        %v2020 = vpop.f32.mrf.mxu0
        %v2021 = vadd.f32 %v1808, %v2020
        %v2022 = vpop.f32.mrf.mxu0
        %v2023 = vadd.f32 %v1808, %v2022
        %2024 = vmatmul.bf16.gmra.mxu0 %v1887
        %v2025 = vpop.f32.mrf.mxu0
        %v2026 = vadd.f32 %v1808, %v2025
        %v2027 = vpop.f32.mrf.mxu0
        %v2028 = vadd.f32 %v1808, %v2027
        %2029 = vmatmul.bf16.gmra.mxu0 %v1890
        %v2030 = vpop.f32.mrf.mxu0
        %v2031 = vadd.f32 %v1808, %v2030
        %v2032 = vpop.f32.mrf.mxu0
        %v2033 = vadd.f32 %v1808, %v2032
        %2034 = vmatmul.bf16.gmra.mxu0 %v1893
        %v2035 = vpop.f32.mrf.mxu0
        %v2036 = vadd.f32 %v1808, %v2035
        %v2037 = vpop.f32.mrf.mxu0
        %v2038 = vadd.f32 %v1808, %v2037
        %2039 = vmatmul.bf16.gmra.mxu0 %v1896
        %v2040 = vpop.f32.mrf.mxu0
        %v2041 = vadd.f32 %v1808, %v2040
        %v2042 = vpop.f32.mrf.mxu0
        %v2043 = vadd.f32 %v1808, %v2042
        %2044 = vmatmul.bf16.gmra.mxu0 %v1899
        %v2045 = vpop.f32.mrf.mxu0
        %v2046 = vadd.f32 %v1808, %v2045
        %v2047 = vpop.f32.mrf.mxu0
        %v2048 = vadd.f32 %v1808, %v2047
        %2049 = vmatmul.bf16.gmra.mxu0 %v1902
        %v2050 = vpop.f32.mrf.mxu0
        %v2051 = vadd.f32 %v1808, %v2050
        %v2052 = vpop.f32.mrf.mxu0
        %v2053 = vadd.f32 %v1808, %v2052
        %2054 = vmatmul.bf16.gmra.mxu0 %v1905
        %v2055 = vpop.f32.mrf.mxu0
        %v2056 = vadd.f32 %v1808, %v2055
        %v2057 = vpop.f32.mrf.mxu0
        %v2058 = vadd.f32 %v1808, %v2057
        %2059 = vmatmul.bf16.gmra.mxu0 %v1908
        %v2060 = vpop.f32.mrf.mxu0
        %v2061 = vadd.f32 %v1808, %v2060
        %v2062 = vpop.f32.mrf.mxu0
        %v2063 = vadd.f32 %v1808, %v2062
        %2064 = vmatmul.bf16.gmra.mxu0 %v1911
        %v2065 = vpop.f32.mrf.mxu0
        %v2066 = vadd.f32 %v1808, %v2065
        %v2067 = vpop.f32.mrf.mxu0
        %v2068 = vadd.f32 %v1808, %v2067
        %2069 = vmatmul.bf16.gmra.mxu0 %v1914
        %v2070 = vpop.f32.mrf.mxu0
        %v2071 = vadd.f32 %v1808, %v2070
        %v2072 = vpop.f32.mrf.mxu0
        %v2073 = vadd.f32 %v1808, %v2072
        %2074 = vmatmul.bf16.gmra.mxu0 %v1917
        %v2075 = vpop.f32.mrf.mxu0
        %v2076 = vadd.f32 %v1808, %v2075
        %v2077 = vpop.f32.mrf.mxu0
        %v2078 = vadd.f32 %v1808, %v2077
        %2079 = vmatmul.bf16.gmra.mxu0 %v1920
        %v2080 = vpop.f32.mrf.mxu0
        %v2081 = vadd.f32 %v1808, %v2080
        %v2082 = vpop.f32.mrf.mxu0
        %v2083 = vadd.f32 %v1808, %v2082
        %2084 = vmatmul.bf16.gmra.mxu0 %v1923
        %v2085 = vpop.f32.mrf.mxu0
        %v2086 = vadd.f32 %v1808, %v2085
        %v2087 = vpop.f32.mrf.mxu0
        %v2088 = vadd.f32 %v1808, %v2087
        %2089 = vmatmul.bf16.gmra.mxu0 %v1926
        %v2090 = vpop.f32.mrf.mxu0
        %v2091 = vadd.f32 %v1808, %v2090
        %v2092 = vpop.f32.mrf.mxu0
        %v2093 = vadd.f32 %v1808, %v2092
        %2094 = vmatmul.bf16.gmra.mxu0 %v1929
        %v2095 = vpop.f32.mrf.mxu0
        %v2096 = vadd.f32 %v1808, %v2095
        %v2097 = vpop.f32.mrf.mxu0
        %v2098 = vadd.f32 %v1808, %v2097
        %2099 = vdwg.mxu0
        %v2100 = vmax.f32 %v1941, 0.0
        %v2101 = vmax.f32 %v1943, 0.0
        %v2102 = vmax.f32 %v1946, 0.0
        %v2103 = vmax.f32 %v1948, 0.0
        %v2104 = vmax.f32 %v1951, 0.0
        %v2105 = vmax.f32 %v1953, 0.0
        %v2106 = vmax.f32 %v1956, 0.0
        %v2107 = vmax.f32 %v1958, 0.0
        %v2108 = vmax.f32 %v1961, 0.0
        %v2109 = vmax.f32 %v1963, 0.0
        %v2110 = vmax.f32 %v1966, 0.0
        %v2111 = vmax.f32 %v1968, 0.0
        %v2112 = vmax.f32 %v1971, 0.0
        %v2113 = vmax.f32 %v1973, 0.0
        %v2114 = vmax.f32 %v1976, 0.0
        %v2115 = vmax.f32 %v1978, 0.0
        %v2116 = vmax.f32 %v1981, 0.0
        %v2117 = vmax.f32 %v1983, 0.0
        %v2118 = vmax.f32 %v1986, 0.0
        %v2119 = vmax.f32 %v1988, 0.0
        %v2120 = vmax.f32 %v1991, 0.0
        %v2121 = vmax.f32 %v1993, 0.0
        %v2122 = vmax.f32 %v1996, 0.0
        %v2123 = vmax.f32 %v1998, 0.0
        %v2124 = vmax.f32 %v2001, 0.0
        %v2125 = vmax.f32 %v2003, 0.0
        %v2126 = vmax.f32 %v2006, 0.0
        %v2127 = vmax.f32 %v2008, 0.0
        %v2128 = vmax.f32 %v2011, 0.0
        %v2129 = vmax.f32 %v2013, 0.0
        %v2130 = vmax.f32 %v2016, 0.0
        %v2131 = vmax.f32 %v2018, 0.0
        %v2132 = vmax.f32 %v2021, 0.0
        %v2133 = vmax.f32 %v2023, 0.0
        %v2134 = vmax.f32 %v2026, 0.0
        %v2135 = vmax.f32 %v2028, 0.0
        %v2136 = vmax.f32 %v2031, 0.0
        %v2137 = vmax.f32 %v2033, 0.0
        %v2138 = vmax.f32 %v2036, 0.0
        %v2139 = vmax.f32 %v2038, 0.0
        %v2140 = vmax.f32 %v2041, 0.0
        %v2141 = vmax.f32 %v2043, 0.0
        %v2142 = vmax.f32 %v2046, 0.0
        %v2143 = vmax.f32 %v2048, 0.0
        %v2144 = vmax.f32 %v2051, 0.0
        %v2145 = vmax.f32 %v2053, 0.0
        %v2146 = vmax.f32 %v2056, 0.0
        %v2147 = vmax.f32 %v2058, 0.0
        %v2148 = vmax.f32 %v2061, 0.0
        %v2149 = vmax.f32 %v2063, 0.0
        %v2150 = vmax.f32 %v2066, 0.0
        %v2151 = vmax.f32 %v2068, 0.0
        %v2152 = vmax.f32 %v2071, 0.0
        %v2153 = vmax.f32 %v2073, 0.0
        %v2154 = vmax.f32 %v2076, 0.0
        %v2155 = vmax.f32 %v2078, 0.0
        %v2156 = vmax.f32 %v2081, 0.0
        %v2157 = vmax.f32 %v2083, 0.0
        %v2158 = vmax.f32 %v2086, 0.0
        %v2159 = vmax.f32 %v2088, 0.0
        %v2160 = vmax.f32 %v2091, 0.0
        %v2161 = vmax.f32 %v2093, 0.0
        %v2162 = vmax.f32 %v2096, 0.0
        %v2163 = vmax.f32 %v2098, 0.0
        %v2164 = vpack.c.bf16 %v2101, %v2100
        %v2165 = vpack.c.bf16 %v2103, %v2102
        %v2166 = vpack.c.bf16 %v2105, %v2104
        %v2167 = vpack.c.bf16 %v2107, %v2106
        %v2168 = vpack.c.bf16 %v2109, %v2108
        %v2169 = vpack.c.bf16 %v2111, %v2110
        %v2170 = vpack.c.bf16 %v2113, %v2112
        %v2171 = vpack.c.bf16 %v2115, %v2114
        %v2172 = vpack.c.bf16 %v2117, %v2116
        %v2173 = vpack.c.bf16 %v2119, %v2118
        %v2174 = vpack.c.bf16 %v2121, %v2120
        %v2175 = vpack.c.bf16 %v2123, %v2122
        %v2176 = vpack.c.bf16 %v2125, %v2124
        %v2177 = vpack.c.bf16 %v2127, %v2126
        %v2178 = vpack.c.bf16 %v2129, %v2128
        %v2179 = vpack.c.bf16 %v2131, %v2130
        %v2180 = vpack.c.bf16 %v2133, %v2132
        %v2181 = vpack.c.bf16 %v2135, %v2134
        %v2182 = vpack.c.bf16 %v2137, %v2136
        %v2183 = vpack.c.bf16 %v2139, %v2138
        %v2184 = vpack.c.bf16 %v2141, %v2140
        %v2185 = vpack.c.bf16 %v2143, %v2142
        %v2186 = vpack.c.bf16 %v2145, %v2144
        %v2187 = vpack.c.bf16 %v2147, %v2146
        %v2188 = vpack.c.bf16 %v2149, %v2148
        %v2189 = vpack.c.bf16 %v2151, %v2150
        %v2190 = vpack.c.bf16 %v2153, %v2152
        %v2191 = vpack.c.bf16 %v2155, %v2154
        %v2192 = vpack.c.bf16 %v2157, %v2156
        %v2193 = vpack.c.bf16 %v2159, %v2158
        %v2194 = vpack.c.bf16 %v2161, %v2160
        %v2195 = vpack.c.bf16 %v2163, %v2162
        %v2196 = vld [vmem:[%s5] sm:$0xf]
        %v2197 = vld [vmem:[%s5 + $0x4] sm:$0xf]
        %v2198 = vld [vmem:[%s5 + $0x8] sm:$0xf]
        %v2199 = vld [vmem:[%s5 + $0xc] sm:$0xf]
        %v2200 = vld [vmem:[%s5 + $0x10] sm:$0xf]
        %v2201 = vld [vmem:[%s5 + $0x14] sm:$0xf]
        %v2202 = vld [vmem:[%s5 + $0x18] sm:$0xf]
        %v2203 = vld [vmem:[%s5 + $0x1c] sm:$0xf]
        %v2204 = vld [vmem:[%s6] sm:$0x1]
        %v2206 = vperm.slane %v2204, 0
        %v2216 = vunpack.c.l.b16 %v2196
        %v2217 = vunpack.c.l.b16 %v2197
        %v2218 = vunpack.c.l.b16 %v2198
        %v2219 = vunpack.c.l.b16 %v2199
        %v2220 = vunpack.c.l.b16 %v2200
        %v2221 = vunpack.c.l.b16 %v2201
        %v2222 = vunpack.c.l.b16 %v2202
        %v2223 = vunpack.c.l.b16 %v2203
        %v2224 = vpack.c.b16 %v2217, %v2216
        %v2225 = vpack.c.b16 %v2219, %v2218
        %v2226 = vpack.c.b16 %v2221, %v2220
        %v2227 = vpack.c.b16 %v2223, %v2222
        %v2233 = vsel %vm1834, %v2164, 0
        %v2236 = vsel %vm1834, %v2165, 0
        %v2239 = vsel %vm1834, %v2166, 0
        %v2242 = vsel %vm1834, %v2167, 0
        %v2245 = vsel %vm1834, %v2168, 0
        %v2248 = vsel %vm1834, %v2169, 0
        %v2251 = vsel %vm1834, %v2170, 0
        %v2254 = vsel %vm1834, %v2171, 0
        %v2257 = vsel %vm1834, %v2172, 0
        %v2260 = vsel %vm1834, %v2173, 0
        %v2263 = vsel %vm1834, %v2174, 0
        %v2266 = vsel %vm1834, %v2175, 0
        %v2269 = vsel %vm1834, %v2176, 0
        %v2272 = vsel %vm1834, %v2177, 0
        %v2275 = vsel %vm1834, %v2178, 0
        %v2278 = vsel %vm1834, %v2179, 0
        %v2281 = vsel %vm1834, %v2180, 0
        %v2284 = vsel %vm1834, %v2181, 0
        %v2287 = vsel %vm1834, %v2182, 0
        %v2290 = vsel %vm1834, %v2183, 0
        %v2293 = vsel %vm1834, %v2184, 0
        %v2296 = vsel %vm1834, %v2185, 0
        %v2299 = vsel %vm1834, %v2186, 0
        %v2302 = vsel %vm1834, %v2187, 0
        %v2305 = vsel %vm1834, %v2188, 0
        %v2308 = vsel %vm1834, %v2189, 0
        %v2311 = vsel %vm1834, %v2190, 0
        %v2314 = vsel %vm1834, %v2191, 0
        %v2317 = vsel %vm1834, %v2192, 0
        %v2320 = vsel %vm1834, %v2193, 0
        %v2323 = vsel %vm1834, %v2194, 0
        %v2326 = vsel %vm1834, %v2195, 0
        %2328 = vmatpush.bf16.msra.mxu0 0
        %2329 = vmatpush.bf16.msra.mxu0 0
        %2330 = vmatpush.bf16.msra.mxu0 0
        %2331 = vmatpush.bf16.msra.mxu0 0
        %2332 = vmatpush.bf16.msra.mxu0 %v2227
        %2333 = vmatpush.bf16.msra.mxu0 %v2226
        %2334 = vmatpush.bf16.msra.mxu0 %v2225
        %2335 = vmatpush.bf16.msra.mxu0 %v2224
        %2336 = vmatmul.bf16.gmra.mxu0 %v2233
        %v2337 = vpop.f32.mrf.mxu0
        %v2338 = vadd.f32 %v2206, %v2337
        %v2339 = vpop.f32.mrf.mxu0
        %v2340 = vadd.f32 %v2206, %v2339
        %2341 = vmatmul.bf16.gmra.mxu0 %v2236
        %v2342 = vpop.f32.mrf.mxu0
        %v2343 = vadd.f32 %v2206, %v2342
        %v2344 = vpop.f32.mrf.mxu0
        %v2345 = vadd.f32 %v2206, %v2344
        %2346 = vmatmul.bf16.gmra.mxu0 %v2239
        %v2347 = vpop.f32.mrf.mxu0
        %v2348 = vadd.f32 %v2206, %v2347
        %v2349 = vpop.f32.mrf.mxu0
        %v2350 = vadd.f32 %v2206, %v2349
        %2351 = vmatmul.bf16.gmra.mxu0 %v2242
        %v2352 = vpop.f32.mrf.mxu0
        %v2353 = vadd.f32 %v2206, %v2352
        %v2354 = vpop.f32.mrf.mxu0
        %v2355 = vadd.f32 %v2206, %v2354
        %2356 = vmatmul.bf16.gmra.mxu0 %v2245
        %v2357 = vpop.f32.mrf.mxu0
        %v2358 = vadd.f32 %v2206, %v2357
        %v2359 = vpop.f32.mrf.mxu0
        %v2360 = vadd.f32 %v2206, %v2359
        %2361 = vmatmul.bf16.gmra.mxu0 %v2248
        %v2362 = vpop.f32.mrf.mxu0
        %v2363 = vadd.f32 %v2206, %v2362
        %v2364 = vpop.f32.mrf.mxu0
        %v2365 = vadd.f32 %v2206, %v2364
        %2366 = vmatmul.bf16.gmra.mxu0 %v2251
        %v2367 = vpop.f32.mrf.mxu0
        %v2368 = vadd.f32 %v2206, %v2367
        %v2369 = vpop.f32.mrf.mxu0
        %v2370 = vadd.f32 %v2206, %v2369
        %2371 = vmatmul.bf16.gmra.mxu0 %v2254
        %v2372 = vpop.f32.mrf.mxu0
        %v2373 = vadd.f32 %v2206, %v2372
        %v2374 = vpop.f32.mrf.mxu0
        %v2375 = vadd.f32 %v2206, %v2374
        %2376 = vmatmul.bf16.gmra.mxu0 %v2257
        %v2377 = vpop.f32.mrf.mxu0
        %v2378 = vadd.f32 %v2206, %v2377
        %v2379 = vpop.f32.mrf.mxu0
        %v2380 = vadd.f32 %v2206, %v2379
        %2381 = vmatmul.bf16.gmra.mxu0 %v2260
        %v2382 = vpop.f32.mrf.mxu0
        %v2383 = vadd.f32 %v2206, %v2382
        %v2384 = vpop.f32.mrf.mxu0
        %v2385 = vadd.f32 %v2206, %v2384
        %2386 = vmatmul.bf16.gmra.mxu0 %v2263
        %v2387 = vpop.f32.mrf.mxu0
        %v2388 = vadd.f32 %v2206, %v2387
        %v2389 = vpop.f32.mrf.mxu0
        %v2390 = vadd.f32 %v2206, %v2389
        %2391 = vmatmul.bf16.gmra.mxu0 %v2266
        %v2392 = vpop.f32.mrf.mxu0
        %v2393 = vadd.f32 %v2206, %v2392
        %v2394 = vpop.f32.mrf.mxu0
        %v2395 = vadd.f32 %v2206, %v2394
        %2396 = vmatmul.bf16.gmra.mxu0 %v2269
        %v2397 = vpop.f32.mrf.mxu0
        %v2398 = vadd.f32 %v2206, %v2397
        %v2399 = vpop.f32.mrf.mxu0
        %v2400 = vadd.f32 %v2206, %v2399
        %2401 = vmatmul.bf16.gmra.mxu0 %v2272
        %v2402 = vpop.f32.mrf.mxu0
        %v2403 = vadd.f32 %v2206, %v2402
        %v2404 = vpop.f32.mrf.mxu0
        %v2405 = vadd.f32 %v2206, %v2404
        %2406 = vmatmul.bf16.gmra.mxu0 %v2275
        %v2407 = vpop.f32.mrf.mxu0
        %v2408 = vadd.f32 %v2206, %v2407
        %v2409 = vpop.f32.mrf.mxu0
        %v2410 = vadd.f32 %v2206, %v2409
        %2411 = vmatmul.bf16.gmra.mxu0 %v2278
        %v2412 = vpop.f32.mrf.mxu0
        %v2413 = vadd.f32 %v2206, %v2412
        %v2414 = vpop.f32.mrf.mxu0
        %v2415 = vadd.f32 %v2206, %v2414
        %2416 = vmatmul.bf16.gmra.mxu0 %v2281
        %v2417 = vpop.f32.mrf.mxu0
        %v2418 = vadd.f32 %v2206, %v2417
        %v2419 = vpop.f32.mrf.mxu0
        %v2420 = vadd.f32 %v2206, %v2419
        %2421 = vmatmul.bf16.gmra.mxu0 %v2284
        %v2422 = vpop.f32.mrf.mxu0
        %v2423 = vadd.f32 %v2206, %v2422
        %v2424 = vpop.f32.mrf.mxu0
        %v2425 = vadd.f32 %v2206, %v2424
        %2426 = vmatmul.bf16.gmra.mxu0 %v2287
        %v2427 = vpop.f32.mrf.mxu0
        %v2428 = vadd.f32 %v2206, %v2427
        %v2429 = vpop.f32.mrf.mxu0
        %v2430 = vadd.f32 %v2206, %v2429
        %2431 = vmatmul.bf16.gmra.mxu0 %v2290
        %v2432 = vpop.f32.mrf.mxu0
        %v2433 = vadd.f32 %v2206, %v2432
        %v2434 = vpop.f32.mrf.mxu0
        %v2435 = vadd.f32 %v2206, %v2434
        %2436 = vmatmul.bf16.gmra.mxu0 %v2293
        %v2437 = vpop.f32.mrf.mxu0
        %v2438 = vadd.f32 %v2206, %v2437
        %v2439 = vpop.f32.mrf.mxu0
        %v2440 = vadd.f32 %v2206, %v2439
        %2441 = vmatmul.bf16.gmra.mxu0 %v2296
        %v2442 = vpop.f32.mrf.mxu0
        %v2443 = vadd.f32 %v2206, %v2442
        %v2444 = vpop.f32.mrf.mxu0
        %v2445 = vadd.f32 %v2206, %v2444
        %2446 = vmatmul.bf16.gmra.mxu0 %v2299
        %v2447 = vpop.f32.mrf.mxu0
        %v2448 = vadd.f32 %v2206, %v2447
        %v2449 = vpop.f32.mrf.mxu0
        %v2450 = vadd.f32 %v2206, %v2449
        %2451 = vmatmul.bf16.gmra.mxu0 %v2302
        %v2452 = vpop.f32.mrf.mxu0
        %v2453 = vadd.f32 %v2206, %v2452
        %v2454 = vpop.f32.mrf.mxu0
        %v2455 = vadd.f32 %v2206, %v2454
        %2456 = vmatmul.bf16.gmra.mxu0 %v2305
        %v2457 = vpop.f32.mrf.mxu0
        %v2458 = vadd.f32 %v2206, %v2457
        %v2459 = vpop.f32.mrf.mxu0
        %v2460 = vadd.f32 %v2206, %v2459
        %2461 = vmatmul.bf16.gmra.mxu0 %v2308
        %v2462 = vpop.f32.mrf.mxu0
        %v2463 = vadd.f32 %v2206, %v2462
        %v2464 = vpop.f32.mrf.mxu0
        %v2465 = vadd.f32 %v2206, %v2464
        %2466 = vmatmul.bf16.gmra.mxu0 %v2311
        %v2467 = vpop.f32.mrf.mxu0
        %v2468 = vadd.f32 %v2206, %v2467
        %v2469 = vpop.f32.mrf.mxu0
        %v2470 = vadd.f32 %v2206, %v2469
        %2471 = vmatmul.bf16.gmra.mxu0 %v2314
        %v2472 = vpop.f32.mrf.mxu0
        %v2473 = vadd.f32 %v2206, %v2472
        %v2474 = vpop.f32.mrf.mxu0
        %v2475 = vadd.f32 %v2206, %v2474
        %2476 = vmatmul.bf16.gmra.mxu0 %v2317
        %v2477 = vpop.f32.mrf.mxu0
        %v2478 = vadd.f32 %v2206, %v2477
        %v2479 = vpop.f32.mrf.mxu0
        %v2480 = vadd.f32 %v2206, %v2479
        %2481 = vmatmul.bf16.gmra.mxu0 %v2320
        %v2482 = vpop.f32.mrf.mxu0
        %v2483 = vadd.f32 %v2206, %v2482
        %v2484 = vpop.f32.mrf.mxu0
        %v2485 = vadd.f32 %v2206, %v2484
        %2486 = vmatmul.bf16.gmra.mxu0 %v2323
        %v2487 = vpop.f32.mrf.mxu0
        %v2488 = vadd.f32 %v2206, %v2487
        %v2489 = vpop.f32.mrf.mxu0
        %v2490 = vadd.f32 %v2206, %v2489
        %2491 = vmatmul.bf16.gmra.mxu0 %v2326
        %v2492 = vpop.f32.mrf.mxu0
        %v2493 = vadd.f32 %v2206, %v2492
        %v2494 = vpop.f32.mrf.mxu0
        %v2495 = vadd.f32 %v2206, %v2494
        %2496 = vdwg.mxu0
        %v2497 = vmax.f32 %v2338, 0.0
        %v2498 = vmax.f32 %v2340, 0.0
        %v2499 = vmax.f32 %v2343, 0.0
        %v2500 = vmax.f32 %v2345, 0.0
        %v2501 = vmax.f32 %v2348, 0.0
        %v2502 = vmax.f32 %v2350, 0.0
        %v2503 = vmax.f32 %v2353, 0.0
        %v2504 = vmax.f32 %v2355, 0.0
        %v2505 = vmax.f32 %v2358, 0.0
        %v2506 = vmax.f32 %v2360, 0.0
        %v2507 = vmax.f32 %v2363, 0.0
        %v2508 = vmax.f32 %v2365, 0.0
        %v2509 = vmax.f32 %v2368, 0.0
        %v2510 = vmax.f32 %v2370, 0.0
        %v2511 = vmax.f32 %v2373, 0.0
        %v2512 = vmax.f32 %v2375, 0.0
        %v2513 = vmax.f32 %v2378, 0.0
        %v2514 = vmax.f32 %v2380, 0.0
        %v2515 = vmax.f32 %v2383, 0.0
        %v2516 = vmax.f32 %v2385, 0.0
        %v2517 = vmax.f32 %v2388, 0.0
        %v2518 = vmax.f32 %v2390, 0.0
        %v2519 = vmax.f32 %v2393, 0.0
        %v2520 = vmax.f32 %v2395, 0.0
        %v2521 = vmax.f32 %v2398, 0.0
        %v2522 = vmax.f32 %v2400, 0.0
        %v2523 = vmax.f32 %v2403, 0.0
        %v2524 = vmax.f32 %v2405, 0.0
        %v2525 = vmax.f32 %v2408, 0.0
        %v2526 = vmax.f32 %v2410, 0.0
        %v2527 = vmax.f32 %v2413, 0.0
        %v2528 = vmax.f32 %v2415, 0.0
        %v2529 = vmax.f32 %v2418, 0.0
        %v2530 = vmax.f32 %v2420, 0.0
        %v2531 = vmax.f32 %v2423, 0.0
        %v2532 = vmax.f32 %v2425, 0.0
        %v2533 = vmax.f32 %v2428, 0.0
        %v2534 = vmax.f32 %v2430, 0.0
        %v2535 = vmax.f32 %v2433, 0.0
        %v2536 = vmax.f32 %v2435, 0.0
        %v2537 = vmax.f32 %v2438, 0.0
        %v2538 = vmax.f32 %v2440, 0.0
        %v2539 = vmax.f32 %v2443, 0.0
        %v2540 = vmax.f32 %v2445, 0.0
        %v2541 = vmax.f32 %v2448, 0.0
        %v2542 = vmax.f32 %v2450, 0.0
        %v2543 = vmax.f32 %v2453, 0.0
        %v2544 = vmax.f32 %v2455, 0.0
        %v2545 = vmax.f32 %v2458, 0.0
        %v2546 = vmax.f32 %v2460, 0.0
        %v2547 = vmax.f32 %v2463, 0.0
        %v2548 = vmax.f32 %v2465, 0.0
        %v2549 = vmax.f32 %v2468, 0.0
        %v2550 = vmax.f32 %v2470, 0.0
        %v2551 = vmax.f32 %v2473, 0.0
        %v2552 = vmax.f32 %v2475, 0.0
        %v2553 = vmax.f32 %v2478, 0.0
        %v2554 = vmax.f32 %v2480, 0.0
        %v2555 = vmax.f32 %v2483, 0.0
        %v2556 = vmax.f32 %v2485, 0.0
        %v2557 = vmax.f32 %v2488, 0.0
        %v2558 = vmax.f32 %v2490, 0.0
        %v2559 = vmax.f32 %v2493, 0.0
        %v2560 = vmax.f32 %v2495, 0.0
        %v2561 = vpack.c.bf16 %v2498, %v2497
        %v2562 = vpack.c.bf16 %v2500, %v2499
        %v2563 = vpack.c.bf16 %v2502, %v2501
        %v2564 = vpack.c.bf16 %v2504, %v2503
        %v2565 = vpack.c.bf16 %v2506, %v2505
        %v2566 = vpack.c.bf16 %v2508, %v2507
        %v2567 = vpack.c.bf16 %v2510, %v2509
        %v2568 = vpack.c.bf16 %v2512, %v2511
        %v2569 = vpack.c.bf16 %v2514, %v2513
        %v2570 = vpack.c.bf16 %v2516, %v2515
        %v2571 = vpack.c.bf16 %v2518, %v2517
        %v2572 = vpack.c.bf16 %v2520, %v2519
        %v2573 = vpack.c.bf16 %v2522, %v2521
        %v2574 = vpack.c.bf16 %v2524, %v2523
        %v2575 = vpack.c.bf16 %v2526, %v2525
        %v2576 = vpack.c.bf16 %v2528, %v2527
        %v2577 = vpack.c.bf16 %v2530, %v2529
        %v2578 = vpack.c.bf16 %v2532, %v2531
        %v2579 = vpack.c.bf16 %v2534, %v2533
        %v2580 = vpack.c.bf16 %v2536, %v2535
        %v2581 = vpack.c.bf16 %v2538, %v2537
        %v2582 = vpack.c.bf16 %v2540, %v2539
        %v2583 = vpack.c.bf16 %v2542, %v2541
        %v2584 = vpack.c.bf16 %v2544, %v2543
        %v2585 = vpack.c.bf16 %v2546, %v2545
        %v2586 = vpack.c.bf16 %v2548, %v2547
        %v2587 = vpack.c.bf16 %v2550, %v2549
        %v2588 = vpack.c.bf16 %v2552, %v2551
        %v2589 = vpack.c.bf16 %v2554, %v2553
        %v2590 = vpack.c.bf16 %v2556, %v2555
        %v2591 = vpack.c.bf16 %v2558, %v2557
        %v2592 = vpack.c.bf16 %v2560, %v2559
        %v2593 = vld [vmem:[%s7] sm:$0xf]
        %v2594 = vld [vmem:[%s7 + $0x4] sm:$0xf]
        %v2595 = vld [vmem:[%s7 + $0x8] sm:$0xf]
        %v2596 = vld [vmem:[%s7 + $0xc] sm:$0xf]
        %v2597 = vld [vmem:[%s7 + $0x10] sm:$0xf]
        %v2598 = vld [vmem:[%s7 + $0x14] sm:$0xf]
        %v2599 = vld [vmem:[%s7 + $0x18] sm:$0xf]
        %v2600 = vld [vmem:[%s7 + $0x1c] sm:$0xf]
        %v2601 = vld [vmem:[%s8] sm:$0x1]
        %v2603 = vperm.slane %v2601, 0
        %v2613 = vunpack.c.l.b16 %v2593
        %v2614 = vunpack.c.l.b16 %v2594
        %v2615 = vunpack.c.l.b16 %v2595
        %v2616 = vunpack.c.l.b16 %v2596
        %v2617 = vunpack.c.l.b16 %v2597
        %v2618 = vunpack.c.l.b16 %v2598
        %v2619 = vunpack.c.l.b16 %v2599
        %v2620 = vunpack.c.l.b16 %v2600
        %v2621 = vpack.c.b16 %v2614, %v2613
        %v2622 = vpack.c.b16 %v2616, %v2615
        %v2623 = vpack.c.b16 %v2618, %v2617
        %v2624 = vpack.c.b16 %v2620, %v2619
        %v2630 = vsel %vm1834, %v2561, 0
        %v2633 = vsel %vm1834, %v2562, 0
        %v2636 = vsel %vm1834, %v2563, 0
        %v2639 = vsel %vm1834, %v2564, 0
        %v2642 = vsel %vm1834, %v2565, 0
        %v2645 = vsel %vm1834, %v2566, 0
        %v2648 = vsel %vm1834, %v2567, 0
        %v2651 = vsel %vm1834, %v2568, 0
        %v2654 = vsel %vm1834, %v2569, 0
        %v2657 = vsel %vm1834, %v2570, 0
        %v2660 = vsel %vm1834, %v2571, 0
        %v2663 = vsel %vm1834, %v2572, 0
        %v2666 = vsel %vm1834, %v2573, 0
        %v2669 = vsel %vm1834, %v2574, 0
        %v2672 = vsel %vm1834, %v2575, 0
        %v2675 = vsel %vm1834, %v2576, 0
        %v2678 = vsel %vm1834, %v2577, 0
        %v2681 = vsel %vm1834, %v2578, 0
        %v2684 = vsel %vm1834, %v2579, 0
        %v2687 = vsel %vm1834, %v2580, 0
        %v2690 = vsel %vm1834, %v2581, 0
        %v2693 = vsel %vm1834, %v2582, 0
        %v2696 = vsel %vm1834, %v2583, 0
        %v2699 = vsel %vm1834, %v2584, 0
        %v2702 = vsel %vm1834, %v2585, 0
        %v2705 = vsel %vm1834, %v2586, 0
        %v2708 = vsel %vm1834, %v2587, 0
        %v2711 = vsel %vm1834, %v2588, 0
        %v2714 = vsel %vm1834, %v2589, 0
        %v2717 = vsel %vm1834, %v2590, 0
        %v2720 = vsel %vm1834, %v2591, 0
        %v2723 = vsel %vm1834, %v2592, 0
        %2725 = vmatpush.bf16.msra.mxu0 0
        %2726 = vmatpush.bf16.msra.mxu0 0
        %2727 = vmatpush.bf16.msra.mxu0 0
        %2728 = vmatpush.bf16.msra.mxu0 0
        %2729 = vmatpush.bf16.msra.mxu0 %v2624
        %2730 = vmatpush.bf16.msra.mxu0 %v2623
        %2731 = vmatpush.bf16.msra.mxu0 %v2622
        %2732 = vmatpush.bf16.msra.mxu0 %v2621
        %2733 = vmatmul.bf16.gmra.mxu0 %v2630
        %v2734 = vpop.f32.mrf.mxu0
        %v2735 = vadd.f32 %v2603, %v2734
        %v2736 = vpop.f32.mrf.mxu0
        %v2737 = vadd.f32 %v2603, %v2736
        %2738 = vmatmul.bf16.gmra.mxu0 %v2633
        %v2739 = vpop.f32.mrf.mxu0
        %v2740 = vadd.f32 %v2603, %v2739
        %v2741 = vpop.f32.mrf.mxu0
        %v2742 = vadd.f32 %v2603, %v2741
        %2743 = vmatmul.bf16.gmra.mxu0 %v2636
        %v2744 = vpop.f32.mrf.mxu0
        %v2745 = vadd.f32 %v2603, %v2744
        %v2746 = vpop.f32.mrf.mxu0
        %v2747 = vadd.f32 %v2603, %v2746
        %2748 = vmatmul.bf16.gmra.mxu0 %v2639
        %v2749 = vpop.f32.mrf.mxu0
        %v2750 = vadd.f32 %v2603, %v2749
        %v2751 = vpop.f32.mrf.mxu0
        %v2752 = vadd.f32 %v2603, %v2751
        %2753 = vmatmul.bf16.gmra.mxu0 %v2642
        %v2754 = vpop.f32.mrf.mxu0
        %v2755 = vadd.f32 %v2603, %v2754
        %v2756 = vpop.f32.mrf.mxu0
        %v2757 = vadd.f32 %v2603, %v2756
        %2758 = vmatmul.bf16.gmra.mxu0 %v2645
        %v2759 = vpop.f32.mrf.mxu0
        %v2760 = vadd.f32 %v2603, %v2759
        %v2761 = vpop.f32.mrf.mxu0
        %v2762 = vadd.f32 %v2603, %v2761
        %2763 = vmatmul.bf16.gmra.mxu0 %v2648
        %v2764 = vpop.f32.mrf.mxu0
        %v2765 = vadd.f32 %v2603, %v2764
        %v2766 = vpop.f32.mrf.mxu0
        %v2767 = vadd.f32 %v2603, %v2766
        %2768 = vmatmul.bf16.gmra.mxu0 %v2651
        %v2769 = vpop.f32.mrf.mxu0
        %v2770 = vadd.f32 %v2603, %v2769
        %v2771 = vpop.f32.mrf.mxu0
        %v2772 = vadd.f32 %v2603, %v2771
        %2773 = vmatmul.bf16.gmra.mxu0 %v2654
        %v2774 = vpop.f32.mrf.mxu0
        %v2775 = vadd.f32 %v2603, %v2774
        %v2776 = vpop.f32.mrf.mxu0
        %v2777 = vadd.f32 %v2603, %v2776
        %2778 = vmatmul.bf16.gmra.mxu0 %v2657
        %v2779 = vpop.f32.mrf.mxu0
        %v2780 = vadd.f32 %v2603, %v2779
        %v2781 = vpop.f32.mrf.mxu0
        %v2782 = vadd.f32 %v2603, %v2781
        %2783 = vmatmul.bf16.gmra.mxu0 %v2660
        %v2784 = vpop.f32.mrf.mxu0
        %v2785 = vadd.f32 %v2603, %v2784
        %v2786 = vpop.f32.mrf.mxu0
        %v2787 = vadd.f32 %v2603, %v2786
        %2788 = vmatmul.bf16.gmra.mxu0 %v2663
        %v2789 = vpop.f32.mrf.mxu0
        %v2790 = vadd.f32 %v2603, %v2789
        %v2791 = vpop.f32.mrf.mxu0
        %v2792 = vadd.f32 %v2603, %v2791
        %2793 = vmatmul.bf16.gmra.mxu0 %v2666
        %v2794 = vpop.f32.mrf.mxu0
        %v2795 = vadd.f32 %v2603, %v2794
        %v2796 = vpop.f32.mrf.mxu0
        %v2797 = vadd.f32 %v2603, %v2796
        %2798 = vmatmul.bf16.gmra.mxu0 %v2669
        %v2799 = vpop.f32.mrf.mxu0
        %v2800 = vadd.f32 %v2603, %v2799
        %v2801 = vpop.f32.mrf.mxu0
        %v2802 = vadd.f32 %v2603, %v2801
        %2803 = vmatmul.bf16.gmra.mxu0 %v2672
        %v2804 = vpop.f32.mrf.mxu0
        %v2805 = vadd.f32 %v2603, %v2804
        %v2806 = vpop.f32.mrf.mxu0
        %v2807 = vadd.f32 %v2603, %v2806
        %2808 = vmatmul.bf16.gmra.mxu0 %v2675
        %v2809 = vpop.f32.mrf.mxu0
        %v2810 = vadd.f32 %v2603, %v2809
        %v2811 = vpop.f32.mrf.mxu0
        %v2812 = vadd.f32 %v2603, %v2811
        %2813 = vmatmul.bf16.gmra.mxu0 %v2678
        %v2814 = vpop.f32.mrf.mxu0
        %v2815 = vadd.f32 %v2603, %v2814
        %v2816 = vpop.f32.mrf.mxu0
        %v2817 = vadd.f32 %v2603, %v2816
        %2818 = vmatmul.bf16.gmra.mxu0 %v2681
        %v2819 = vpop.f32.mrf.mxu0
        %v2820 = vadd.f32 %v2603, %v2819
        %v2821 = vpop.f32.mrf.mxu0
        %v2822 = vadd.f32 %v2603, %v2821
        %2823 = vmatmul.bf16.gmra.mxu0 %v2684
        %v2824 = vpop.f32.mrf.mxu0
        %v2825 = vadd.f32 %v2603, %v2824
        %v2826 = vpop.f32.mrf.mxu0
        %v2827 = vadd.f32 %v2603, %v2826
        %2828 = vmatmul.bf16.gmra.mxu0 %v2687
        %v2829 = vpop.f32.mrf.mxu0
        %v2830 = vadd.f32 %v2603, %v2829
        %v2831 = vpop.f32.mrf.mxu0
        %v2832 = vadd.f32 %v2603, %v2831
        %2833 = vmatmul.bf16.gmra.mxu0 %v2690
        %v2834 = vpop.f32.mrf.mxu0
        %v2835 = vadd.f32 %v2603, %v2834
        %v2836 = vpop.f32.mrf.mxu0
        %v2837 = vadd.f32 %v2603, %v2836
        %2838 = vmatmul.bf16.gmra.mxu0 %v2693
        %v2839 = vpop.f32.mrf.mxu0
        %v2840 = vadd.f32 %v2603, %v2839
        %v2841 = vpop.f32.mrf.mxu0
        %v2842 = vadd.f32 %v2603, %v2841
        %2843 = vmatmul.bf16.gmra.mxu0 %v2696
        %v2844 = vpop.f32.mrf.mxu0
        %v2845 = vadd.f32 %v2603, %v2844
        %v2846 = vpop.f32.mrf.mxu0
        %v2847 = vadd.f32 %v2603, %v2846
        %2848 = vmatmul.bf16.gmra.mxu0 %v2699
        %v2849 = vpop.f32.mrf.mxu0
        %v2850 = vadd.f32 %v2603, %v2849
        %v2851 = vpop.f32.mrf.mxu0
        %v2852 = vadd.f32 %v2603, %v2851
        %2853 = vmatmul.bf16.gmra.mxu0 %v2702
        %v2854 = vpop.f32.mrf.mxu0
        %v2855 = vadd.f32 %v2603, %v2854
        %v2856 = vpop.f32.mrf.mxu0
        %v2857 = vadd.f32 %v2603, %v2856
        %2858 = vmatmul.bf16.gmra.mxu0 %v2705
        %v2859 = vpop.f32.mrf.mxu0
        %v2860 = vadd.f32 %v2603, %v2859
        %v2861 = vpop.f32.mrf.mxu0
        %v2862 = vadd.f32 %v2603, %v2861
        %2863 = vmatmul.bf16.gmra.mxu0 %v2708
        %v2864 = vpop.f32.mrf.mxu0
        %v2865 = vadd.f32 %v2603, %v2864
        %v2866 = vpop.f32.mrf.mxu0
        %v2867 = vadd.f32 %v2603, %v2866
        %2868 = vmatmul.bf16.gmra.mxu0 %v2711
        %v2869 = vpop.f32.mrf.mxu0
        %v2870 = vadd.f32 %v2603, %v2869
        %v2871 = vpop.f32.mrf.mxu0
        %v2872 = vadd.f32 %v2603, %v2871
        %2873 = vmatmul.bf16.gmra.mxu0 %v2714
        %v2874 = vpop.f32.mrf.mxu0
        %v2875 = vadd.f32 %v2603, %v2874
        %v2876 = vpop.f32.mrf.mxu0
        %v2877 = vadd.f32 %v2603, %v2876
        %2878 = vmatmul.bf16.gmra.mxu0 %v2717
        %v2879 = vpop.f32.mrf.mxu0
        %v2880 = vadd.f32 %v2603, %v2879
        %v2881 = vpop.f32.mrf.mxu0
        %v2882 = vadd.f32 %v2603, %v2881
        %2883 = vmatmul.bf16.gmra.mxu0 %v2720
        %v2884 = vpop.f32.mrf.mxu0
        %v2885 = vadd.f32 %v2603, %v2884
        %v2886 = vpop.f32.mrf.mxu0
        %v2887 = vadd.f32 %v2603, %v2886
        %2888 = vmatmul.bf16.gmra.mxu0 %v2723
        %v2889 = vpop.f32.mrf.mxu0
        %v2890 = vadd.f32 %v2603, %v2889
        %v2891 = vpop.f32.mrf.mxu0
        %v2892 = vadd.f32 %v2603, %v2891
        %2893 = vdwg.mxu0
        %v2894 = vmax.f32 %v2735, 0.0
        %v2895 = vmax.f32 %v2737, 0.0
        %v2896 = vmax.f32 %v2740, 0.0
        %v2897 = vmax.f32 %v2742, 0.0
        %v2898 = vmax.f32 %v2745, 0.0
        %v2899 = vmax.f32 %v2747, 0.0
        %v2900 = vmax.f32 %v2750, 0.0
        %v2901 = vmax.f32 %v2752, 0.0
        %v2902 = vmax.f32 %v2755, 0.0
        %v2903 = vmax.f32 %v2757, 0.0
        %v2904 = vmax.f32 %v2760, 0.0
        %v2905 = vmax.f32 %v2762, 0.0
        %v2906 = vmax.f32 %v2765, 0.0
        %v2907 = vmax.f32 %v2767, 0.0
        %v2908 = vmax.f32 %v2770, 0.0
        %v2909 = vmax.f32 %v2772, 0.0
        %v2910 = vmax.f32 %v2775, 0.0
        %v2911 = vmax.f32 %v2777, 0.0
        %v2912 = vmax.f32 %v2780, 0.0
        %v2913 = vmax.f32 %v2782, 0.0
        %v2914 = vmax.f32 %v2785, 0.0
        %v2915 = vmax.f32 %v2787, 0.0
        %v2916 = vmax.f32 %v2790, 0.0
        %v2917 = vmax.f32 %v2792, 0.0
        %v2918 = vmax.f32 %v2795, 0.0
        %v2919 = vmax.f32 %v2797, 0.0
        %v2920 = vmax.f32 %v2800, 0.0
        %v2921 = vmax.f32 %v2802, 0.0
        %v2922 = vmax.f32 %v2805, 0.0
        %v2923 = vmax.f32 %v2807, 0.0
        %v2924 = vmax.f32 %v2810, 0.0
        %v2925 = vmax.f32 %v2812, 0.0
        %v2926 = vmax.f32 %v2815, 0.0
        %v2927 = vmax.f32 %v2817, 0.0
        %v2928 = vmax.f32 %v2820, 0.0
        %v2929 = vmax.f32 %v2822, 0.0
        %v2930 = vmax.f32 %v2825, 0.0
        %v2931 = vmax.f32 %v2827, 0.0
        %v2932 = vmax.f32 %v2830, 0.0
        %v2933 = vmax.f32 %v2832, 0.0
        %v2934 = vmax.f32 %v2835, 0.0
        %v2935 = vmax.f32 %v2837, 0.0
        %v2936 = vmax.f32 %v2840, 0.0
        %v2937 = vmax.f32 %v2842, 0.0
        %v2938 = vmax.f32 %v2845, 0.0
        %v2939 = vmax.f32 %v2847, 0.0
        %v2940 = vmax.f32 %v2850, 0.0
        %v2941 = vmax.f32 %v2852, 0.0
        %v2942 = vmax.f32 %v2855, 0.0
        %v2943 = vmax.f32 %v2857, 0.0
        %v2944 = vmax.f32 %v2860, 0.0
        %v2945 = vmax.f32 %v2862, 0.0
        %v2946 = vmax.f32 %v2865, 0.0
        %v2947 = vmax.f32 %v2867, 0.0
        %v2948 = vmax.f32 %v2870, 0.0
        %v2949 = vmax.f32 %v2872, 0.0
        %v2950 = vmax.f32 %v2875, 0.0
        %v2951 = vmax.f32 %v2877, 0.0
        %v2952 = vmax.f32 %v2880, 0.0
        %v2953 = vmax.f32 %v2882, 0.0
        %v2954 = vmax.f32 %v2885, 0.0
        %v2955 = vmax.f32 %v2887, 0.0
        %v2956 = vmax.f32 %v2890, 0.0
        %v2957 = vmax.f32 %v2892, 0.0
        %v2958 = vpack.c.bf16 %v2895, %v2894
        %v2959 = vpack.c.bf16 %v2897, %v2896
        %v2960 = vpack.c.bf16 %v2899, %v2898
        %v2961 = vpack.c.bf16 %v2901, %v2900
        %v2962 = vpack.c.bf16 %v2903, %v2902
        %v2963 = vpack.c.bf16 %v2905, %v2904
        %v2964 = vpack.c.bf16 %v2907, %v2906
        %v2965 = vpack.c.bf16 %v2909, %v2908
        %v2966 = vpack.c.bf16 %v2911, %v2910
        %v2967 = vpack.c.bf16 %v2913, %v2912
        %v2968 = vpack.c.bf16 %v2915, %v2914
        %v2969 = vpack.c.bf16 %v2917, %v2916
        %v2970 = vpack.c.bf16 %v2919, %v2918
        %v2971 = vpack.c.bf16 %v2921, %v2920
        %v2972 = vpack.c.bf16 %v2923, %v2922
        %v2973 = vpack.c.bf16 %v2925, %v2924
        %v2974 = vpack.c.bf16 %v2927, %v2926
        %v2975 = vpack.c.bf16 %v2929, %v2928
        %v2976 = vpack.c.bf16 %v2931, %v2930
        %v2977 = vpack.c.bf16 %v2933, %v2932
        %v2978 = vpack.c.bf16 %v2935, %v2934
        %v2979 = vpack.c.bf16 %v2937, %v2936
        %v2980 = vpack.c.bf16 %v2939, %v2938
        %v2981 = vpack.c.bf16 %v2941, %v2940
        %v2982 = vpack.c.bf16 %v2943, %v2942
        %v2983 = vpack.c.bf16 %v2945, %v2944
        %v2984 = vpack.c.bf16 %v2947, %v2946
        %v2985 = vpack.c.bf16 %v2949, %v2948
        %v2986 = vpack.c.bf16 %v2951, %v2950
        %v2987 = vpack.c.bf16 %v2953, %v2952
        %v2988 = vpack.c.bf16 %v2955, %v2954
        %v2989 = vpack.c.bf16 %v2957, %v2956
        %v2990 = vld [vmem:[%s9] sm:$0xff]
        %v2991 = vld [vmem:[%s9 + $0x8] sm:$0xff]
        %v2992 = vld [vmem:[%s9 + $0x10] sm:$0xff]
        %v2993 = vld [vmem:[%s9 + $0x18] sm:$0xff]
        %v2994 = vld [vmem:[%s9 + $0x20] sm:$0xff]
        %v2995 = vld [vmem:[%s9 + $0x28] sm:$0xff]
        %v2996 = vld [vmem:[%s9 + $0x30] sm:$0xff]
        %v2997 = vld [vmem:[%s9 + $0x38] sm:$0xff]
        %v2998 = vld [vmem:[%s9 + $0x40] sm:$0xff]
        %v2999 = vld [vmem:[%s9 + $0x48] sm:$0xff]
        %v3000 = vld [vmem:[%s9 + $0x50] sm:$0xff]
        %v3001 = vld [vmem:[%s9 + $0x58] sm:$0xff]
        %v3002 = vld [vmem:[%s9 + $0x60] sm:$0xff]
        %v3003 = vld [vmem:[%s9 + $0x68] sm:$0xff]
        %v3004 = vld [vmem:[%s9 + $0x70] sm:$0xff]
        %v3005 = vld [vmem:[%s9 + $0x78] sm:$0xff]
        %v3006 = vld [vmem:[%s10] sm:$0x3]
        %v3008 = vperm.slane %v3006, 0
        %v3009 = vperm.slane %v3006, 1
        %v3028 = vunpack.c.l.b16 %v2990
        %v3029 = vunpack.c.h.b16 %v2990
        %v3030 = vunpack.c.l.b16 %v2991
        %v3031 = vunpack.c.h.b16 %v2991
        %v3032 = vunpack.c.l.b16 %v2992
        %v3033 = vunpack.c.h.b16 %v2992
        %v3034 = vunpack.c.l.b16 %v2993
        %v3035 = vunpack.c.h.b16 %v2993
        %v3036 = vunpack.c.l.b16 %v2994
        %v3037 = vunpack.c.h.b16 %v2994
        %v3038 = vunpack.c.l.b16 %v2995
        %v3039 = vunpack.c.h.b16 %v2995
        %v3040 = vunpack.c.l.b16 %v2996
        %v3041 = vunpack.c.h.b16 %v2996
        %v3042 = vunpack.c.l.b16 %v2997
        %v3043 = vunpack.c.h.b16 %v2997
        %v3044 = vunpack.c.l.b16 %v2998
        %v3045 = vunpack.c.h.b16 %v2998
        %v3046 = vunpack.c.l.b16 %v2999
        %v3047 = vunpack.c.h.b16 %v2999
        %v3048 = vunpack.c.l.b16 %v3000
        %v3049 = vunpack.c.h.b16 %v3000
        %v3050 = vunpack.c.l.b16 %v3001
        %v3051 = vunpack.c.h.b16 %v3001
        %v3052 = vunpack.c.l.b16 %v3002
        %v3053 = vunpack.c.h.b16 %v3002
        %v3054 = vunpack.c.l.b16 %v3003
        %v3055 = vunpack.c.h.b16 %v3003
        %v3056 = vunpack.c.l.b16 %v3004
        %v3057 = vunpack.c.h.b16 %v3004
        %v3058 = vunpack.c.l.b16 %v3005
        %v3059 = vunpack.c.h.b16 %v3005
        %v3060 = vpack.c.b16 %v3030, %v3028
        %v3061 = vpack.c.b16 %v3031, %v3029
        %v3062 = vpack.c.b16 %v3034, %v3032
        %v3063 = vpack.c.b16 %v3035, %v3033
        %v3064 = vpack.c.b16 %v3038, %v3036
        %v3065 = vpack.c.b16 %v3039, %v3037
        %v3066 = vpack.c.b16 %v3042, %v3040
        %v3067 = vpack.c.b16 %v3043, %v3041
        %v3068 = vpack.c.b16 %v3046, %v3044
        %v3069 = vpack.c.b16 %v3047, %v3045
        %v3070 = vpack.c.b16 %v3050, %v3048
        %v3071 = vpack.c.b16 %v3051, %v3049
        %v3072 = vpack.c.b16 %v3054, %v3052
        %v3073 = vpack.c.b16 %v3055, %v3053
        %v3074 = vpack.c.b16 %v3058, %v3056
        %v3075 = vpack.c.b16 %v3059, %v3057
        %3092 = vmatpush.bf16.msra.mxu0 %v3074
        %3093 = vmatpush.bf16.msra.mxu0 %v3072
        %3094 = vmatpush.bf16.msra.mxu0 %v3070
        %3095 = vmatpush.bf16.msra.mxu0 %v3068
        %3096 = vmatpush.bf16.msra.mxu0 %v3066
        %3097 = vmatpush.bf16.msra.mxu0 %v3064
        %3098 = vmatpush.bf16.msra.mxu0 %v3062
        %3099 = vmatpush.bf16.msra.mxu0 %v3060
        %3100 = vmatmul.bf16.gmra.mxu0 %v2958
        %v3101 = vpop.f32.mrf.mxu0
        %v3102 = vadd.f32 %v3008, %v3101
        %v3103 = vpop.f32.mrf.mxu0
        %v3104 = vadd.f32 %v3008, %v3103
        %3105 = vmatmul.bf16.gmra.mxu0 %v2959
        %v3106 = vpop.f32.mrf.mxu0
        %v3107 = vadd.f32 %v3008, %v3106
        %v3108 = vpop.f32.mrf.mxu0
        %v3109 = vadd.f32 %v3008, %v3108
        %3110 = vmatmul.bf16.gmra.mxu0 %v2960
        %v3111 = vpop.f32.mrf.mxu0
        %v3112 = vadd.f32 %v3008, %v3111
        %v3113 = vpop.f32.mrf.mxu0
        %v3114 = vadd.f32 %v3008, %v3113
        %3115 = vmatmul.bf16.gmra.mxu0 %v2961
        %v3116 = vpop.f32.mrf.mxu0
        %v3117 = vadd.f32 %v3008, %v3116
        %v3118 = vpop.f32.mrf.mxu0
        %v3119 = vadd.f32 %v3008, %v3118
        %3120 = vmatmul.bf16.gmra.mxu0 %v2962
        %v3121 = vpop.f32.mrf.mxu0
        %v3122 = vadd.f32 %v3008, %v3121
        %v3123 = vpop.f32.mrf.mxu0
        %v3124 = vadd.f32 %v3008, %v3123
        %3125 = vmatmul.bf16.gmra.mxu0 %v2963
        %v3126 = vpop.f32.mrf.mxu0
        %v3127 = vadd.f32 %v3008, %v3126
        %v3128 = vpop.f32.mrf.mxu0
        %v3129 = vadd.f32 %v3008, %v3128
        %3130 = vmatmul.bf16.gmra.mxu0 %v2964
        %v3131 = vpop.f32.mrf.mxu0
        %v3132 = vadd.f32 %v3008, %v3131
        %v3133 = vpop.f32.mrf.mxu0
        %v3134 = vadd.f32 %v3008, %v3133
        %3135 = vmatmul.bf16.gmra.mxu0 %v2965
        %v3136 = vpop.f32.mrf.mxu0
        %v3137 = vadd.f32 %v3008, %v3136
        %v3138 = vpop.f32.mrf.mxu0
        %v3139 = vadd.f32 %v3008, %v3138
        %3140 = vmatmul.bf16.gmra.mxu0 %v2966
        %v3141 = vpop.f32.mrf.mxu0
        %v3142 = vadd.f32 %v3008, %v3141
        %v3143 = vpop.f32.mrf.mxu0
        %v3144 = vadd.f32 %v3008, %v3143
        %3145 = vmatmul.bf16.gmra.mxu0 %v2967
        %v3146 = vpop.f32.mrf.mxu0
        %v3147 = vadd.f32 %v3008, %v3146
        %v3148 = vpop.f32.mrf.mxu0
        %v3149 = vadd.f32 %v3008, %v3148
        %3150 = vmatmul.bf16.gmra.mxu0 %v2968
        %v3151 = vpop.f32.mrf.mxu0
        %v3152 = vadd.f32 %v3008, %v3151
        %v3153 = vpop.f32.mrf.mxu0
        %v3154 = vadd.f32 %v3008, %v3153
        %3155 = vmatmul.bf16.gmra.mxu0 %v2969
        %v3156 = vpop.f32.mrf.mxu0
        %v3157 = vadd.f32 %v3008, %v3156
        %v3158 = vpop.f32.mrf.mxu0
        %v3159 = vadd.f32 %v3008, %v3158
        %3160 = vmatmul.bf16.gmra.mxu0 %v2970
        %v3161 = vpop.f32.mrf.mxu0
        %v3162 = vadd.f32 %v3008, %v3161
        %v3163 = vpop.f32.mrf.mxu0
        %v3164 = vadd.f32 %v3008, %v3163
        %3165 = vmatmul.bf16.gmra.mxu0 %v2971
        %v3166 = vpop.f32.mrf.mxu0
        %v3167 = vadd.f32 %v3008, %v3166
        %v3168 = vpop.f32.mrf.mxu0
        %v3169 = vadd.f32 %v3008, %v3168
        %3170 = vmatmul.bf16.gmra.mxu0 %v2972
        %v3171 = vpop.f32.mrf.mxu0
        %v3172 = vadd.f32 %v3008, %v3171
        %v3173 = vpop.f32.mrf.mxu0
        %v3174 = vadd.f32 %v3008, %v3173
        %3175 = vmatmul.bf16.gmra.mxu0 %v2973
        %v3176 = vpop.f32.mrf.mxu0
        %v3177 = vadd.f32 %v3008, %v3176
        %v3178 = vpop.f32.mrf.mxu0
        %v3179 = vadd.f32 %v3008, %v3178
        %3180 = vmatmul.bf16.gmra.mxu0 %v2974
        %v3181 = vpop.f32.mrf.mxu0
        %v3182 = vadd.f32 %v3008, %v3181
        %v3183 = vpop.f32.mrf.mxu0
        %v3184 = vadd.f32 %v3008, %v3183
        %3185 = vmatmul.bf16.gmra.mxu0 %v2975
        %v3186 = vpop.f32.mrf.mxu0
        %v3187 = vadd.f32 %v3008, %v3186
        %v3188 = vpop.f32.mrf.mxu0
        %v3189 = vadd.f32 %v3008, %v3188
        %3190 = vmatmul.bf16.gmra.mxu0 %v2976
        %v3191 = vpop.f32.mrf.mxu0
        %v3192 = vadd.f32 %v3008, %v3191
        %v3193 = vpop.f32.mrf.mxu0
        %v3194 = vadd.f32 %v3008, %v3193
        %3195 = vmatmul.bf16.gmra.mxu0 %v2977
        %v3196 = vpop.f32.mrf.mxu0
        %v3197 = vadd.f32 %v3008, %v3196
        %v3198 = vpop.f32.mrf.mxu0
        %v3199 = vadd.f32 %v3008, %v3198
        %3200 = vmatmul.bf16.gmra.mxu0 %v2978
        %v3201 = vpop.f32.mrf.mxu0
        %v3202 = vadd.f32 %v3008, %v3201
        %v3203 = vpop.f32.mrf.mxu0
        %v3204 = vadd.f32 %v3008, %v3203
        %3205 = vmatmul.bf16.gmra.mxu0 %v2979
        %v3206 = vpop.f32.mrf.mxu0
        %v3207 = vadd.f32 %v3008, %v3206
        %v3208 = vpop.f32.mrf.mxu0
        %v3209 = vadd.f32 %v3008, %v3208
        %3210 = vmatmul.bf16.gmra.mxu0 %v2980
        %v3211 = vpop.f32.mrf.mxu0
        %v3212 = vadd.f32 %v3008, %v3211
        %v3213 = vpop.f32.mrf.mxu0
        %v3214 = vadd.f32 %v3008, %v3213
        %3215 = vmatmul.bf16.gmra.mxu0 %v2981
        %v3216 = vpop.f32.mrf.mxu0
        %v3217 = vadd.f32 %v3008, %v3216
        %v3218 = vpop.f32.mrf.mxu0
        %v3219 = vadd.f32 %v3008, %v3218
        %3220 = vmatmul.bf16.gmra.mxu0 %v2982
        %v3221 = vpop.f32.mrf.mxu0
        %v3222 = vadd.f32 %v3008, %v3221
        %v3223 = vpop.f32.mrf.mxu0
        %v3224 = vadd.f32 %v3008, %v3223
        %3225 = vmatmul.bf16.gmra.mxu0 %v2983
        %v3226 = vpop.f32.mrf.mxu0
        %v3227 = vadd.f32 %v3008, %v3226
        %v3228 = vpop.f32.mrf.mxu0
        %v3229 = vadd.f32 %v3008, %v3228
        %3230 = vmatmul.bf16.gmra.mxu0 %v2984
        %v3231 = vpop.f32.mrf.mxu0
        %v3232 = vadd.f32 %v3008, %v3231
        %v3233 = vpop.f32.mrf.mxu0
        %v3234 = vadd.f32 %v3008, %v3233
        %3235 = vmatmul.bf16.gmra.mxu0 %v2985
        %v3236 = vpop.f32.mrf.mxu0
        %v3237 = vadd.f32 %v3008, %v3236
        %v3238 = vpop.f32.mrf.mxu0
        %v3239 = vadd.f32 %v3008, %v3238
        %3240 = vmatmul.bf16.gmra.mxu0 %v2986
        %v3241 = vpop.f32.mrf.mxu0
        %v3242 = vadd.f32 %v3008, %v3241
        %v3243 = vpop.f32.mrf.mxu0
        %v3244 = vadd.f32 %v3008, %v3243
        %3245 = vmatmul.bf16.gmra.mxu0 %v2987
        %v3246 = vpop.f32.mrf.mxu0
        %v3247 = vadd.f32 %v3008, %v3246
        %v3248 = vpop.f32.mrf.mxu0
        %v3249 = vadd.f32 %v3008, %v3248
        %3250 = vmatmul.bf16.gmra.mxu0 %v2988
        %v3251 = vpop.f32.mrf.mxu0
        %v3252 = vadd.f32 %v3008, %v3251
        %v3253 = vpop.f32.mrf.mxu0
        %v3254 = vadd.f32 %v3008, %v3253
        %3255 = vmatmul.bf16.gmra.mxu0 %v2989
        %v3256 = vpop.f32.mrf.mxu0
        %v3257 = vadd.f32 %v3008, %v3256
        %v3258 = vpop.f32.mrf.mxu0
        %v3259 = vadd.f32 %v3008, %v3258
        %3260 = vdwg.mxu0
        %3261 = vmatpush.bf16.msra.mxu0 %v3075
        %3262 = vmatpush.bf16.msra.mxu0 %v3073
        %3263 = vmatpush.bf16.msra.mxu0 %v3071
        %3264 = vmatpush.bf16.msra.mxu0 %v3069
        %3265 = vmatpush.bf16.msra.mxu0 %v3067
        %3266 = vmatpush.bf16.msra.mxu0 %v3065
        %3267 = vmatpush.bf16.msra.mxu0 %v3063
        %3268 = vmatpush.bf16.msra.mxu0 %v3061
        %3269 = vmatmul.bf16.gmra.mxu0 %v2958
        %v3270 = vpop.f32.mrf.mxu0
        %v3271 = vadd.f32 %v3009, %v3270
        %v3272 = vpop.f32.mrf.mxu0
        %v3273 = vadd.f32 %v3009, %v3272
        %3274 = vmatmul.bf16.gmra.mxu0 %v2959
        %v3275 = vpop.f32.mrf.mxu0
        %v3276 = vadd.f32 %v3009, %v3275
        %v3277 = vpop.f32.mrf.mxu0
        %v3278 = vadd.f32 %v3009, %v3277
        %3279 = vmatmul.bf16.gmra.mxu0 %v2960
        %v3280 = vpop.f32.mrf.mxu0
        %v3281 = vadd.f32 %v3009, %v3280
        %v3282 = vpop.f32.mrf.mxu0
        %v3283 = vadd.f32 %v3009, %v3282
        %3284 = vmatmul.bf16.gmra.mxu0 %v2961
        %v3285 = vpop.f32.mrf.mxu0
        %v3286 = vadd.f32 %v3009, %v3285
        %v3287 = vpop.f32.mrf.mxu0
        %v3288 = vadd.f32 %v3009, %v3287
        %3289 = vmatmul.bf16.gmra.mxu0 %v2962
        %v3290 = vpop.f32.mrf.mxu0
        %v3291 = vadd.f32 %v3009, %v3290
        %v3292 = vpop.f32.mrf.mxu0
        %v3293 = vadd.f32 %v3009, %v3292
        %3294 = vmatmul.bf16.gmra.mxu0 %v2963
        %v3295 = vpop.f32.mrf.mxu0
        %v3296 = vadd.f32 %v3009, %v3295
        %v3297 = vpop.f32.mrf.mxu0
        %v3298 = vadd.f32 %v3009, %v3297
        %3299 = vmatmul.bf16.gmra.mxu0 %v2964
        %v3300 = vpop.f32.mrf.mxu0
        %v3301 = vadd.f32 %v3009, %v3300
        %v3302 = vpop.f32.mrf.mxu0
        %v3303 = vadd.f32 %v3009, %v3302
        %3304 = vmatmul.bf16.gmra.mxu0 %v2965
        %v3305 = vpop.f32.mrf.mxu0
        %v3306 = vadd.f32 %v3009, %v3305
        %v3307 = vpop.f32.mrf.mxu0
        %v3308 = vadd.f32 %v3009, %v3307
        %3309 = vmatmul.bf16.gmra.mxu0 %v2966
        %v3310 = vpop.f32.mrf.mxu0
        %v3311 = vadd.f32 %v3009, %v3310
        %v3312 = vpop.f32.mrf.mxu0
        %v3313 = vadd.f32 %v3009, %v3312
        %3314 = vmatmul.bf16.gmra.mxu0 %v2967
        %v3315 = vpop.f32.mrf.mxu0
        %v3316 = vadd.f32 %v3009, %v3315
        %v3317 = vpop.f32.mrf.mxu0
        %v3318 = vadd.f32 %v3009, %v3317
        %3319 = vmatmul.bf16.gmra.mxu0 %v2968
        %v3320 = vpop.f32.mrf.mxu0
        %v3321 = vadd.f32 %v3009, %v3320
        %v3322 = vpop.f32.mrf.mxu0
        %v3323 = vadd.f32 %v3009, %v3322
        %3324 = vmatmul.bf16.gmra.mxu0 %v2969
        %v3325 = vpop.f32.mrf.mxu0
        %v3326 = vadd.f32 %v3009, %v3325
        %v3327 = vpop.f32.mrf.mxu0
        %v3328 = vadd.f32 %v3009, %v3327
        %3329 = vmatmul.bf16.gmra.mxu0 %v2970
        %v3330 = vpop.f32.mrf.mxu0
        %v3331 = vadd.f32 %v3009, %v3330
        %v3332 = vpop.f32.mrf.mxu0
        %v3333 = vadd.f32 %v3009, %v3332
        %3334 = vmatmul.bf16.gmra.mxu0 %v2971
        %v3335 = vpop.f32.mrf.mxu0
        %v3336 = vadd.f32 %v3009, %v3335
        %v3337 = vpop.f32.mrf.mxu0
        %v3338 = vadd.f32 %v3009, %v3337
        %3339 = vmatmul.bf16.gmra.mxu0 %v2972
        %v3340 = vpop.f32.mrf.mxu0
        %v3341 = vadd.f32 %v3009, %v3340
        %v3342 = vpop.f32.mrf.mxu0
        %v3343 = vadd.f32 %v3009, %v3342
        %3344 = vmatmul.bf16.gmra.mxu0 %v2973
        %v3345 = vpop.f32.mrf.mxu0
        %v3346 = vadd.f32 %v3009, %v3345
        %v3347 = vpop.f32.mrf.mxu0
        %v3348 = vadd.f32 %v3009, %v3347
        %3349 = vmatmul.bf16.gmra.mxu0 %v2974
        %v3350 = vpop.f32.mrf.mxu0
        %v3351 = vadd.f32 %v3009, %v3350
        %v3352 = vpop.f32.mrf.mxu0
        %v3353 = vadd.f32 %v3009, %v3352
        %3354 = vmatmul.bf16.gmra.mxu0 %v2975
        %v3355 = vpop.f32.mrf.mxu0
        %v3356 = vadd.f32 %v3009, %v3355
        %v3357 = vpop.f32.mrf.mxu0
        %v3358 = vadd.f32 %v3009, %v3357
        %3359 = vmatmul.bf16.gmra.mxu0 %v2976
        %v3360 = vpop.f32.mrf.mxu0
        %v3361 = vadd.f32 %v3009, %v3360
        %v3362 = vpop.f32.mrf.mxu0
        %v3363 = vadd.f32 %v3009, %v3362
        %3364 = vmatmul.bf16.gmra.mxu0 %v2977
        %v3365 = vpop.f32.mrf.mxu0
        %v3366 = vadd.f32 %v3009, %v3365
        %v3367 = vpop.f32.mrf.mxu0
        %v3368 = vadd.f32 %v3009, %v3367
        %3369 = vmatmul.bf16.gmra.mxu0 %v2978
        %v3370 = vpop.f32.mrf.mxu0
        %v3371 = vadd.f32 %v3009, %v3370
        %v3372 = vpop.f32.mrf.mxu0
        %v3373 = vadd.f32 %v3009, %v3372
        %3374 = vmatmul.bf16.gmra.mxu0 %v2979
        %v3375 = vpop.f32.mrf.mxu0
        %v3376 = vadd.f32 %v3009, %v3375
        %v3377 = vpop.f32.mrf.mxu0
        %v3378 = vadd.f32 %v3009, %v3377
        %3379 = vmatmul.bf16.gmra.mxu0 %v2980
        %v3380 = vpop.f32.mrf.mxu0
        %v3381 = vadd.f32 %v3009, %v3380
        %v3382 = vpop.f32.mrf.mxu0
        %v3383 = vadd.f32 %v3009, %v3382
        %3384 = vmatmul.bf16.gmra.mxu0 %v2981
        %v3385 = vpop.f32.mrf.mxu0
        %v3386 = vadd.f32 %v3009, %v3385
        %v3387 = vpop.f32.mrf.mxu0
        %v3388 = vadd.f32 %v3009, %v3387
        %3389 = vmatmul.bf16.gmra.mxu0 %v2982
        %v3390 = vpop.f32.mrf.mxu0
        %v3391 = vadd.f32 %v3009, %v3390
        %v3392 = vpop.f32.mrf.mxu0
        %v3393 = vadd.f32 %v3009, %v3392
        %3394 = vmatmul.bf16.gmra.mxu0 %v2983
        %v3395 = vpop.f32.mrf.mxu0
        %v3396 = vadd.f32 %v3009, %v3395
        %v3397 = vpop.f32.mrf.mxu0
        %v3398 = vadd.f32 %v3009, %v3397
        %3399 = vmatmul.bf16.gmra.mxu0 %v2984
        %v3400 = vpop.f32.mrf.mxu0
        %v3401 = vadd.f32 %v3009, %v3400
        %v3402 = vpop.f32.mrf.mxu0
        %v3403 = vadd.f32 %v3009, %v3402
        %3404 = vmatmul.bf16.gmra.mxu0 %v2985
        %v3405 = vpop.f32.mrf.mxu0
        %v3406 = vadd.f32 %v3009, %v3405
        %v3407 = vpop.f32.mrf.mxu0
        %v3408 = vadd.f32 %v3009, %v3407
        %3409 = vmatmul.bf16.gmra.mxu0 %v2986
        %v3410 = vpop.f32.mrf.mxu0
        %v3411 = vadd.f32 %v3009, %v3410
        %v3412 = vpop.f32.mrf.mxu0
        %v3413 = vadd.f32 %v3009, %v3412
        %3414 = vmatmul.bf16.gmra.mxu0 %v2987
        %v3415 = vpop.f32.mrf.mxu0
        %v3416 = vadd.f32 %v3009, %v3415
        %v3417 = vpop.f32.mrf.mxu0
        %v3418 = vadd.f32 %v3009, %v3417
        %3419 = vmatmul.bf16.gmra.mxu0 %v2988
        %v3420 = vpop.f32.mrf.mxu0
        %v3421 = vadd.f32 %v3009, %v3420
        %v3422 = vpop.f32.mrf.mxu0
        %v3423 = vadd.f32 %v3009, %v3422
        %3424 = vmatmul.bf16.gmra.mxu0 %v2989
        %v3425 = vpop.f32.mrf.mxu0
        %v3426 = vadd.f32 %v3009, %v3425
        %v3427 = vpop.f32.mrf.mxu0
        %v3428 = vadd.f32 %v3009, %v3427
        %3429 = vdwg.mxu0
        %v3430 = vmax.f32 %v3102, 0.0
        %v3431 = vmax.f32 %v3271, 0.0
        %v3432 = vmax.f32 %v3104, 0.0
        %v3433 = vmax.f32 %v3273, 0.0
        %v3434 = vmax.f32 %v3107, 0.0
        %v3435 = vmax.f32 %v3276, 0.0
        %v3436 = vmax.f32 %v3109, 0.0
        %v3437 = vmax.f32 %v3278, 0.0
        %v3438 = vmax.f32 %v3112, 0.0
        %v3439 = vmax.f32 %v3281, 0.0
        %v3440 = vmax.f32 %v3114, 0.0
        %v3441 = vmax.f32 %v3283, 0.0
        %v3442 = vmax.f32 %v3117, 0.0
        %v3443 = vmax.f32 %v3286, 0.0
        %v3444 = vmax.f32 %v3119, 0.0
        %v3445 = vmax.f32 %v3288, 0.0
        %v3446 = vmax.f32 %v3122, 0.0
        %v3447 = vmax.f32 %v3291, 0.0
        %v3448 = vmax.f32 %v3124, 0.0
        %v3449 = vmax.f32 %v3293, 0.0
        %v3450 = vmax.f32 %v3127, 0.0
        %v3451 = vmax.f32 %v3296, 0.0
        %v3452 = vmax.f32 %v3129, 0.0
        %v3453 = vmax.f32 %v3298, 0.0
        %v3454 = vmax.f32 %v3132, 0.0
        %v3455 = vmax.f32 %v3301, 0.0
        %v3456 = vmax.f32 %v3134, 0.0
        %v3457 = vmax.f32 %v3303, 0.0
        %v3458 = vmax.f32 %v3137, 0.0
        %v3459 = vmax.f32 %v3306, 0.0
        %v3460 = vmax.f32 %v3139, 0.0
        %v3461 = vmax.f32 %v3308, 0.0
        %v3462 = vmax.f32 %v3142, 0.0
        %v3463 = vmax.f32 %v3311, 0.0
        %v3464 = vmax.f32 %v3144, 0.0
        %v3465 = vmax.f32 %v3313, 0.0
        %v3466 = vmax.f32 %v3147, 0.0
        %v3467 = vmax.f32 %v3316, 0.0
        %v3468 = vmax.f32 %v3149, 0.0
        %v3469 = vmax.f32 %v3318, 0.0
        %v3470 = vmax.f32 %v3152, 0.0
        %v3471 = vmax.f32 %v3321, 0.0
        %v3472 = vmax.f32 %v3154, 0.0
        %v3473 = vmax.f32 %v3323, 0.0
        %v3474 = vmax.f32 %v3157, 0.0
        %v3475 = vmax.f32 %v3326, 0.0
        %v3476 = vmax.f32 %v3159, 0.0
        %v3477 = vmax.f32 %v3328, 0.0
        %v3478 = vmax.f32 %v3162, 0.0
        %v3479 = vmax.f32 %v3331, 0.0
        %v3480 = vmax.f32 %v3164, 0.0
        %v3481 = vmax.f32 %v3333, 0.0
        %v3482 = vmax.f32 %v3167, 0.0
        %v3483 = vmax.f32 %v3336, 0.0
        %v3484 = vmax.f32 %v3169, 0.0
        %v3485 = vmax.f32 %v3338, 0.0
        %v3486 = vmax.f32 %v3172, 0.0
        %v3487 = vmax.f32 %v3341, 0.0
        %v3488 = vmax.f32 %v3174, 0.0
        %v3489 = vmax.f32 %v3343, 0.0
        %v3490 = vmax.f32 %v3177, 0.0
        %v3491 = vmax.f32 %v3346, 0.0
        %v3492 = vmax.f32 %v3179, 0.0
        %v3493 = vmax.f32 %v3348, 0.0
        %v3494 = vmax.f32 %v3182, 0.0
        %v3495 = vmax.f32 %v3351, 0.0
        %v3496 = vmax.f32 %v3184, 0.0
        %v3497 = vmax.f32 %v3353, 0.0
        %v3498 = vmax.f32 %v3187, 0.0
        %v3499 = vmax.f32 %v3356, 0.0
        %v3500 = vmax.f32 %v3189, 0.0
        %v3501 = vmax.f32 %v3358, 0.0
        %v3502 = vmax.f32 %v3192, 0.0
        %v3503 = vmax.f32 %v3361, 0.0
        %v3504 = vmax.f32 %v3194, 0.0
        %v3505 = vmax.f32 %v3363, 0.0
        %v3506 = vmax.f32 %v3197, 0.0
        %v3507 = vmax.f32 %v3366, 0.0
        %v3508 = vmax.f32 %v3199, 0.0
        %v3509 = vmax.f32 %v3368, 0.0
        %v3510 = vmax.f32 %v3202, 0.0
        %v3511 = vmax.f32 %v3371, 0.0
        %v3512 = vmax.f32 %v3204, 0.0
        %v3513 = vmax.f32 %v3373, 0.0
        %v3514 = vmax.f32 %v3207, 0.0
        %v3515 = vmax.f32 %v3376, 0.0
        %v3516 = vmax.f32 %v3209, 0.0
        %v3517 = vmax.f32 %v3378, 0.0
        %v3518 = vmax.f32 %v3212, 0.0
        %v3519 = vmax.f32 %v3381, 0.0
        %v3520 = vmax.f32 %v3214, 0.0
        %v3521 = vmax.f32 %v3383, 0.0
        %v3522 = vmax.f32 %v3217, 0.0
        %v3523 = vmax.f32 %v3386, 0.0
        %v3524 = vmax.f32 %v3219, 0.0
        %v3525 = vmax.f32 %v3388, 0.0
        %v3526 = vmax.f32 %v3222, 0.0
        %v3527 = vmax.f32 %v3391, 0.0
        %v3528 = vmax.f32 %v3224, 0.0
        %v3529 = vmax.f32 %v3393, 0.0
        %v3530 = vmax.f32 %v3227, 0.0
        %v3531 = vmax.f32 %v3396, 0.0
        %v3532 = vmax.f32 %v3229, 0.0
        %v3533 = vmax.f32 %v3398, 0.0
        %v3534 = vmax.f32 %v3232, 0.0
        %v3535 = vmax.f32 %v3401, 0.0
        %v3536 = vmax.f32 %v3234, 0.0
        %v3537 = vmax.f32 %v3403, 0.0
        %v3538 = vmax.f32 %v3237, 0.0
        %v3539 = vmax.f32 %v3406, 0.0
        %v3540 = vmax.f32 %v3239, 0.0
        %v3541 = vmax.f32 %v3408, 0.0
        %v3542 = vmax.f32 %v3242, 0.0
        %v3543 = vmax.f32 %v3411, 0.0
        %v3544 = vmax.f32 %v3244, 0.0
        %v3545 = vmax.f32 %v3413, 0.0
        %v3546 = vmax.f32 %v3247, 0.0
        %v3547 = vmax.f32 %v3416, 0.0
        %v3548 = vmax.f32 %v3249, 0.0
        %v3549 = vmax.f32 %v3418, 0.0
        %v3550 = vmax.f32 %v3252, 0.0
        %v3551 = vmax.f32 %v3421, 0.0
        %v3552 = vmax.f32 %v3254, 0.0
        %v3553 = vmax.f32 %v3423, 0.0
        %v3554 = vmax.f32 %v3257, 0.0
        %v3555 = vmax.f32 %v3426, 0.0
        %v3556 = vmax.f32 %v3259, 0.0
        %v3557 = vmax.f32 %v3428, 0.0
        %v3558 = vmax.f32 %v3430, %v3434
        %v3559 = vmax.f32 %v3432, %v3436
        %v3560 = vmax.f32 %v3558, %v3438
        %v3561 = vmax.f32 %v3559, %v3440
        %v3562 = vmax.f32 %v3560, %v3442
        %v3563 = vmax.f32 %v3561, %v3444
        %v3564 = vmax.f32 %v3562, %v3446
        %v3565 = vmax.f32 %v3563, %v3448
        %v3566 = vmax.f32 %v3564, %v3450
        %v3567 = vmax.f32 %v3565, %v3452
        %v3568 = vmax.f32 %v3566, %v3454
        %v3569 = vmax.f32 %v3567, %v3456
        %v3570 = vmax.f32 %v3568, %v3458
        %v3571 = vmax.f32 %v3569, %v3460
        %v3572 = vmax.f32 %v3570, %v3462
        %v3573 = vmax.f32 %v3571, %v3464
        %v3574 = vmax.f32 %v3572, %v3466
        %v3575 = vmax.f32 %v3573, %v3468
        %v3576 = vmax.f32 %v3574, %v3470
        %v3577 = vmax.f32 %v3575, %v3472
        %v3578 = vmax.f32 %v3576, %v3474
        %v3579 = vmax.f32 %v3577, %v3476
        %v3580 = vmax.f32 %v3578, %v3478
        %v3581 = vmax.f32 %v3579, %v3480
        %v3582 = vmax.f32 %v3580, %v3482
        %v3583 = vmax.f32 %v3581, %v3484
        %v3584 = vmax.f32 %v3582, %v3486
        %v3585 = vmax.f32 %v3583, %v3488
        %v3586 = vmax.f32 %v3584, %v3490
        %v3587 = vmax.f32 %v3585, %v3492
        %v3588 = vmax.f32 %v3586, %v3494
        %v3589 = vmax.f32 %v3587, %v3496
        %v3590 = vmax.f32 %v3588, %v3498
        %v3591 = vmax.f32 %v3589, %v3500
        %v3592 = vmax.f32 %v3590, %v3502
        %v3593 = vmax.f32 %v3591, %v3504
        %v3594 = vmax.f32 %v3592, %v3506
        %v3595 = vmax.f32 %v3593, %v3508
        %v3596 = vmax.f32 %v3594, %v3510
        %v3597 = vmax.f32 %v3595, %v3512
        %v3598 = vmax.f32 %v3596, %v3514
        %v3599 = vmax.f32 %v3597, %v3516
        %v3600 = vmax.f32 %v3598, %v3518
        %v3601 = vmax.f32 %v3599, %v3520
        %v3602 = vmax.f32 %v3600, %v3522
        %v3603 = vmax.f32 %v3601, %v3524
        %v3604 = vmax.f32 %v3602, %v3526
        %v3605 = vmax.f32 %v3603, %v3528
        %v3606 = vmax.f32 %v3604, %v3530
        %v3607 = vmax.f32 %v3605, %v3532
        %v3608 = vmax.f32 %v3606, %v3534
        %v3609 = vmax.f32 %v3607, %v3536
        %v3610 = vmax.f32 %v3608, %v3538
        %v3611 = vmax.f32 %v3609, %v3540
        %v3612 = vmax.f32 %v3610, %v3542
        %v3613 = vmax.f32 %v3611, %v3544
        %v3614 = vmax.f32 %v3612, %v3546
        %v3615 = vmax.f32 %v3613, %v3548
        %v3616 = vmax.f32 %v3614, %v3550
        %v3617 = vmax.f32 %v3615, %v3552
        %v3618 = vmax.f32 %v3616, %v3554
        %v3619 = vmax.f32 %v3617, %v3556
        %v3620 = vmax.f32 %v3618, %v3619
        %v3621 = vrot.slane %v3620, 4
        %v3622 = vmax.f32 %v3620, %v3621
        %v3623 = vrot.slane %v3622, 2
        %v3624 = vmax.f32 %v3622, %v3623
        %v3625 = vrot.slane %v3624, 1
        %v3626 = vmax.f32 %v3624, %v3625
        %v3627 = vmax.f32 %v3431, %v3435
        %v3628 = vmax.f32 %v3433, %v3437
        %v3629 = vmax.f32 %v3627, %v3439
        %v3630 = vmax.f32 %v3628, %v3441
        %v3631 = vmax.f32 %v3629, %v3443
        %v3632 = vmax.f32 %v3630, %v3445
        %v3633 = vmax.f32 %v3631, %v3447
        %v3634 = vmax.f32 %v3632, %v3449
        %v3635 = vmax.f32 %v3633, %v3451
        %v3636 = vmax.f32 %v3634, %v3453
        %v3637 = vmax.f32 %v3635, %v3455
        %v3638 = vmax.f32 %v3636, %v3457
        %v3639 = vmax.f32 %v3637, %v3459
        %v3640 = vmax.f32 %v3638, %v3461
        %v3641 = vmax.f32 %v3639, %v3463
        %v3642 = vmax.f32 %v3640, %v3465
        %v3643 = vmax.f32 %v3641, %v3467
        %v3644 = vmax.f32 %v3642, %v3469
        %v3645 = vmax.f32 %v3643, %v3471
        %v3646 = vmax.f32 %v3644, %v3473
        %v3647 = vmax.f32 %v3645, %v3475
        %v3648 = vmax.f32 %v3646, %v3477
        %v3649 = vmax.f32 %v3647, %v3479
        %v3650 = vmax.f32 %v3648, %v3481
        %v3651 = vmax.f32 %v3649, %v3483
        %v3652 = vmax.f32 %v3650, %v3485
        %v3653 = vmax.f32 %v3651, %v3487
        %v3654 = vmax.f32 %v3652, %v3489
        %v3655 = vmax.f32 %v3653, %v3491
        %v3656 = vmax.f32 %v3654, %v3493
        %v3657 = vmax.f32 %v3655, %v3495
        %v3658 = vmax.f32 %v3656, %v3497
        %v3659 = vmax.f32 %v3657, %v3499
        %v3660 = vmax.f32 %v3658, %v3501
        %v3661 = vmax.f32 %v3659, %v3503
        %v3662 = vmax.f32 %v3660, %v3505
        %v3663 = vmax.f32 %v3661, %v3507
        %v3664 = vmax.f32 %v3662, %v3509
        %v3665 = vmax.f32 %v3663, %v3511
        %v3666 = vmax.f32 %v3664, %v3513
        %v3667 = vmax.f32 %v3665, %v3515
        %v3668 = vmax.f32 %v3666, %v3517
        %v3669 = vmax.f32 %v3667, %v3519
        %v3670 = vmax.f32 %v3668, %v3521
        %v3671 = vmax.f32 %v3669, %v3523
        %v3672 = vmax.f32 %v3670, %v3525
        %v3673 = vmax.f32 %v3671, %v3527
        %v3674 = vmax.f32 %v3672, %v3529
        %v3675 = vmax.f32 %v3673, %v3531
        %v3676 = vmax.f32 %v3674, %v3533
        %v3677 = vmax.f32 %v3675, %v3535
        %v3678 = vmax.f32 %v3676, %v3537
        %v3679 = vmax.f32 %v3677, %v3539
        %v3680 = vmax.f32 %v3678, %v3541
        %v3681 = vmax.f32 %v3679, %v3543
        %v3682 = vmax.f32 %v3680, %v3545
        %v3683 = vmax.f32 %v3681, %v3547
        %v3684 = vmax.f32 %v3682, %v3549
        %v3685 = vmax.f32 %v3683, %v3551
        %v3686 = vmax.f32 %v3684, %v3553
        %v3687 = vmax.f32 %v3685, %v3555
        %v3688 = vmax.f32 %v3686, %v3557
        %v3689 = vmax.f32 %v3687, %v3688
        %v3690 = vrot.slane %v3689, 4
        %v3691 = vmax.f32 %v3689, %v3690
        %v3692 = vrot.slane %v3691, 2
        %v3693 = vmax.f32 %v3691, %v3692
        %v3694 = vrot.slane %v3693, 1
        %v3695 = vmax.f32 %v3693, %v3694
        %p3696 = scmp.eq.s32.totalorder %s30, 0
        %v3697 = vld [vmem:[%s402] sm:$0x3]
        %s3698 = scalar_select %p3696, 1, 0
        %v3699 = vstv %s3698
        %vm3700 = vcmp.eq.s32.totalorder %v3699, 1
        %v3701 = vsel %vm3700, 0.0, %v3697
        %v3704 = vrot.slane %v3695, 7
        %vm3705 = vcmask 1040384
        %v3706 = vsel %vm3705, %v3626, %v3704
        %v3708 = vmax.f32 %v3701, %v3706
        %v3709 = vlaneseq
        %vm3710 = vcmp.ge.s32.totalorder %v3709, 0
        %vm3711 = vcmp.lt.s32.totalorder %v3709, 256
        %vm3712 = vmand %vm3710, %vm3711
        %3713 = vst.msk [vmem:[%s402] sm:$0x3] %vm3712, %v3708
        %s3714 = sand.u32 %s283, 1
        %s3715 = scalar_lea.sflag [#allocation3], %s3714
        %s3716 = sand.u32 %s283, 1
        %s3717 = smul.addr %s3716, 2
        %s3718 = scalar_lea.vmem [#allocation2], %s3717
        // Predicated region
        $region65: #{tpu_custom_call.1} parent=63 // pred_check
          %p3719 = pneg %p293
        $region66: #{tpu_custom_call.1} parent=63 // pred_check_branch
          %3721 = sbr.rel (%p3719) target = $region68
        $region67: #{tpu_custom_call.1} parent=63 // pred_region
          %3723 = vsyncadd %s3715, 0
          %s3724 = smul.addr %s29, 2
          %s3725 = scalar_lea.hbm %s11, %s3724
          %s3727 = sshll.u32 %s3718, 4
          %s3728 = int_to_ptr.vmem [resolvable:$true] %s3727
          %s3729 = sshll.u32 %s3725, 4
          %s3730 = int_to_ptr.hbm [resolvable:$true] %s3729
          %3732 = dma.vmem_to_hbm [thread:$0]  %s3728, 32, %s3730, %s3715
        $region68: #{tpu_custom_call.1} parent=63 // pred_fallthru
          _
      $region64: #{tpu_custom_call.1} parent=5 // pred_fallthru
        _
      %p3733 = scmp.le.s32.totalorder 2, %s20
      // Predicated region
      $region69: #{tpu_custom_call.1} parent=5 // pred_check
        %p3734 = pneg %p3733
      $region70: #{tpu_custom_call.1} parent=5 // pred_check_branch
        %3736 = sbr.rel (%p3734) target = $region72
      $region71: #{tpu_custom_call.1} parent=5 // pred_region
        %s3737 = ssub.s32 %s20, 2
        // Predicated region
        $region73: #{tpu_custom_call.1} parent=71 // pred_check
          %p3738 = pneg %p299
        $region74: #{tpu_custom_call.1} parent=71 // pred_check_branch
          %3740 = sbr.rel (%p3738) target = $region76
        $region75: #{tpu_custom_call.1} parent=71 // pred_region
          %s3741 = sand.u32 %s284, 1
          %s3742 = scalar_lea.sflag [#allocation3], %s3741
          %s3743 = sand.u32 %s284, 1
          %s3744 = smul.addr %s3743, 2
          %s3745 = scalar_lea.vmem [#allocation2], %s3744
          %3747 = dma.done %s3742, 32
        $region76: #{tpu_custom_call.1} parent=71 // pred_fallthru
          _
      $region72: #{tpu_custom_call.1} parent=5 // pred_fallthru
        _
    $region6: #{tpu_custom_call.1} parent=1 // loop_footer
      %s24 = sadd.s32 1, %s20
    $region7: #{tpu_custom_call.1} parent=1 // loop_footer_branch
      %19 = sbr.rel target = $region3
    $region8: #{tpu_custom_call.1} parent=1 // loop_exit
      _
    %3748 = vsyncpa [#allocation3], 1
    %s3749 = scalar_lea.sflag [#allocation3], 1
    %3750 = vsyncpa %s3749, 1

</llo_original>
